<compile_context>
chip_gen: v7x
topology: tpu7x:2x2x1
jax: 0.10.0
libtpu: 0.0.40
codegen_flags: <defaults>
</compile_context>

<pallas_src>
import functools

import jax
import jax.numpy as jnp
from jax.experimental import pallas as pl
from jax.experimental.pallas import tpu as pltpu

LANE = 128      # lane width (last dim)
SUBLANE = 8     # sublane width (second-to-last dim)


def _round_up(n, m):
    return ((n + m - 1) // m) * m


# ---------------------------------------------------------------------------
# Fused whole-network kernel
# ---------------------------------------------------------------------------
def gat_network_kernel(x_ref, adjb_ref, valid_ref, w_ref, b_ref, att_ref,
                       bias_ref, nw_ref, nb_ref, nms_ref, out_ref, *, n_real):
    """All GATv2 layers + GraphNorm + ReLU, everything VMEM-resident."""
    num_layers = w_ref.shape[0]
    d = att_ref.shape[-1]                 # padded (lane-dense) feature width
    inv_n = 1.0 / n_real                  # python float -> inline literal

    x = x_ref[...]                        # [Np, D]
    valid = valid_ref[...]                # [Np, 1], 1.0 for real nodes
    adj_bias = adjb_ref[...]              # [Np, Np]; 0 on edges, -1e30 elsewhere

    for l in range(num_layers):           # static unroll over layers
        # ---- GATv2 conv ----------------------------------------------------
        # Fused (Wl | Wr) matmul: one MXU push instead of two.
        xlr = jnp.dot(x, w_ref[l], preferred_element_type=jnp.float32) + b_ref[l]
        xl = xlr[:, :d]                   # source-side features  [Np, D]
        xr = xlr[:, d:]                   # target-side features  [Np, D]

        # Pairwise logits: e[i, j] = att . leaky_relu(xl[j] + xr[i], 0.2)
        pair = xr[:, None, :] + xl[None, :, :]                      # [Np, Np, D]
        pair = jnp.maximum(pair, 0.2 * pair)                        # leaky_relu(0.2)
        logits = jnp.sum(pair * att_ref[l][None, :, :], axis=-1)    # [Np, Np]
        logits = logits + adj_bias                                  # mask non-edges

        # Softmax over neighbors j (axis 1).  Every real row has a self loop, so
        # the max entry survives masking and denom >= 1; masked entries underflow
        # to exp(-1e30) == 0 without an explicit select.
        m = jnp.max(logits, axis=1, keepdims=True)
        e = jnp.exp(logits - m)
        denom = jnp.sum(e, axis=1, keepdims=True)
        alpha = e * pl.reciprocal(denom, approx=True)   # EUP reciprocal

        out = jnp.dot(alpha, xl, preferred_element_type=jnp.float32) + bias_ref[l]

        if l < num_layers - 1:
            # ---- GraphNorm (valid nodes only) + ReLU ------------------------
            mean = jnp.sum(out * valid, axis=0, keepdims=True) * inv_n    # [1, D]
            centered = out - mean * nms_ref[l]
            cv = centered * valid
            var = jnp.sum(cv * cv, axis=0, keepdims=True) * inv_n         # [1, D]
            inv_std = jax.lax.rsqrt(var + 1e-5)
            y = nw_ref[l] * centered * inv_std + nb_ref[l]
            x = jnp.maximum(y, 0.0) * valid       # ReLU; zero out padded rows
        else:
            x = out

    out_ref[...] = x


# ---------------------------------------------------------------------------
# Parameter init + packing (pad to lane-dense, concat Wl|Wr, stack layers)
# ---------------------------------------------------------------------------
def init_params(key, num_node_features, hidden, num_layers):
    layers = []
    in_dim = num_node_features
    for l in range(num_layers):
        key, k1, k2, k3 = jax.random.split(key, 4)
        lim = (6.0 / (in_dim + hidden)) ** 0.5   # glorot-style, deterministic
        layer = dict(
            wl=jax.random.uniform(k1, (in_dim, hidden), jnp.float32, -lim, lim),
            bl=jnp.zeros((hidden,), jnp.float32),
            wr=jax.random.uniform(k2, (in_dim, hidden), jnp.float32, -lim, lim),
            br=jnp.zeros((hidden,), jnp.float32),
            att=jax.random.uniform(k3, (hidden,), jnp.float32, -0.5, 0.5),
            bias=jnp.zeros((hidden,), jnp.float32),
        )
        if l < num_layers - 1:   # GraphNorm only between layers (not after last conv)
            layer["norm_weight"] = jnp.ones((hidden,), jnp.float32)
            layer["norm_bias"] = jnp.zeros((hidden,), jnp.float32)
            layer["norm_mean_scale"] = jnp.ones((hidden,), jnp.float32)
        layers.append(layer)
        in_dim = hidden
    return layers


def pack_params(layers, num_node_features, hidden):
    """Stack layers and zero-pad feature dims to the 128-lane width.

    Wl|Wr (and bl|br) are concatenated on the output axis so the kernel does a
    single wide matmul per layer; the split back into xl / xr lands on a
    lane-aligned (multiple-of-128) boundary.
    """
    num_layers = len(layers)
    d = _round_up(max(num_node_features, hidden), LANE)
    c = hidden
    w = jnp.zeros((num_layers, d, 2 * d), jnp.float32)
    b = jnp.zeros((num_layers, 1, 2 * d), jnp.float32)
    att = jnp.zeros((num_layers, 1, d), jnp.float32)
    bias = jnp.zeros((num_layers, 1, d), jnp.float32)
    nw = jnp.zeros((num_layers, 1, d), jnp.float32)
    nb = jnp.zeros((num_layers, 1, d), jnp.float32)
    nms = jnp.zeros((num_layers, 1, d), jnp.float32)
    for l, p in enumerate(layers):
        fin = p["wl"].shape[0]
        w = w.at[l, :fin, :c].set(p["wl"])
        w = w.at[l, :fin, d:d + c].set(p["wr"])
        b = b.at[l, 0, :c].set(p["bl"])
        b = b.at[l, 0, d:d + c].set(p["br"])
        att = att.at[l, 0, :c].set(p["att"])
        bias = bias.at[l, 0, :c].set(p["bias"])
        if "norm_weight" in p:
            nw = nw.at[l, 0, :c].set(p["norm_weight"])
            nb = nb.at[l, 0, :c].set(p["norm_bias"])
            nms = nms.at[l, 0, :c].set(p["norm_mean_scale"])
    return dict(w=w, b=b, att=att, bias=bias, nw=nw, nb=nb, nms=nms,
                d=d, hidden=hidden)


# ---------------------------------------------------------------------------
# Forward: one pallas_call for the whole network
# ---------------------------------------------------------------------------
def graph_attention_network(x, edge_index, packed):
    n, f = x.shape
    d = packed["d"]
    c = packed["hidden"]
    np_ = _round_up(n, SUBLANE)          # sublane-aligned node axis

    # Lane-dense padded node features.
    xp = jnp.zeros((np_, d), jnp.float32).at[:n, :f].set(x.astype(jnp.float32))

    # Dense adjacency with self loops: adj[target, source] = 1, then converted
    # once to an additive mask bias so the kernel's per-layer masking is one add.
    adj = jnp.zeros((np_, np_), jnp.float32)
    adj = adj.at[edge_index[1], edge_index[0]].set(1.0)
    diag = jnp.arange(n)
    adj = adj.at[diag, diag].set(1.0)
    adj_bias = jnp.where(adj > 0.0, 0.0, -1e30).astype(jnp.float32)   # [Np, Np]

    valid = (jnp.arange(np_) < n).astype(jnp.float32)[:, None]        # [Np, 1]

    operands = (xp, adj_bias, valid, packed["w"], packed["b"], packed["att"],
                packed["bias"], packed["nw"], packed["nb"], packed["nms"])

    num_layers = packed["w"].shape[0]
    flops = num_layers * (2 * np_ * d * (2 * d)    # fused Wl|Wr matmul
                          + 4 * np_ * np_ * d      # pairwise VPU chain
                          + 2 * np_ * np_ * d)     # alpha @ xl
    transcendentals = num_layers * (np_ * np_ + np_ + d)
    bytes_accessed = int(sum(o.size * o.dtype.itemsize for o in operands)
                         + np_ * d * 4)

    vmem_spec = pl.BlockSpec(memory_space=pltpu.MemorySpace.VMEM)
    out = pl.pallas_call(
        functools.partial(gat_network_kernel, n_real=float(n)),
        out_shape=jax.ShapeDtypeStruct((np_, d), jnp.float32),
        in_specs=[vmem_spec] * len(operands),
        out_specs=vmem_spec,
        compiler_params=pltpu.CompilerParams(vmem_limit_bytes=32 * 1024 * 1024),
        cost_estimate=pl.CostEstimate(flops=flops,
                                      transcendentals=transcendentals,
                                      bytes_accessed=bytes_accessed),
    )(*operands)
    return out[:n, :c]


# ---------------------------------------------------------------------------
# Pure-JAX reference (unpadded), for a tolerance check before declaring success.
# ---------------------------------------------------------------------------
def reference_forward(x, edge_index, layers):
    n = x.shape[0]
    adj = jnp.zeros((n, n), jnp.float32)
    adj = adj.at[edge_index[1], edge_index[0]].set(1.0)
    adj = adj.at[jnp.arange(n), jnp.arange(n)].set(1.0)
    mask = adj > 0.0
    num_layers = len(layers)
    h = x.astype(jnp.float32)
    for l, p in enumerate(layers):
        xl = h @ p["wl"] + p["bl"]
        xr = h @ p["wr"] + p["br"]
        pair = xr[:, None, :] + xl[None, :, :]
        pair = jnp.where(pair >= 0.0, pair, 0.2 * pair)
        logits = jnp.sum(pair * p["att"], axis=-1)
        logits = jnp.where(mask, logits, -1e30)
        alpha = jax.nn.softmax(logits, axis=1)
        out = alpha @ xl + p["bias"]
        if l < num_layers - 1:
            mean = out.mean(axis=0, keepdims=True)
            centered = out - mean * p["norm_mean_scale"]
            var = (centered ** 2).mean(axis=0, keepdims=True)
            out = p["norm_weight"] * centered / jnp.sqrt(var + 1e-5) + p["norm_bias"]
            out = jax.nn.relu(out)
        h = out
    return h


# ---------------------------------------------------------------------------
if __name__ == "__main__":
    num_node_features = 8
    graph_hidden_channels = 32
    num_layers = 3
    n_nodes = 16

    key = jax.random.PRNGKey(0)
    key, kx, kp = jax.random.split(key, 3)

    x = jax.random.normal(kx, (n_nodes, num_node_features), jnp.float32)

    # Deterministic directed edge set: ring both ways + chords.
    idx = jnp.arange(n_nodes)
    src = jnp.concatenate([idx, (idx + 1) % n_nodes, idx])
    dst = jnp.concatenate([(idx + 1) % n_nodes, idx, (idx + 5) % n_nodes])
    edge_index = jnp.stack([src, dst]).astype(jnp.int32)   # [2, E]

    params = init_params(kp, num_node_features, graph_hidden_channels, num_layers)
    packed = pack_params(params, num_node_features, graph_hidden_channels)

    out = graph_attention_network(x, edge_index, packed)
    out = jax.block_until_ready(out)
    assert out.shape == (n_nodes, graph_hidden_channels)
    assert bool(jnp.all(jnp.isfinite(out)))

    # Correctness vs. pure-JAX reference (loose tolerance: approx EUP reciprocal
    # in the kernel + default MXU f32 precision in both paths).
    ref = jax.block_until_ready(reference_forward(x, edge_index, params))
    max_err = float(jnp.max(jnp.abs(out - ref)))
    assert max_err < 1e-1, f"max abs err vs reference: {max_err}"

    print("KERNEL_OK")
</pallas_src>

<mosaic_0001>
module attributes {stable_mosaic.version = 11 : i64} {
  func.func @gat_network_kernel(%arg0: memref<16x128xf32, #tpu.memory_space<vmem>>, %arg1: memref<16x16xf32, #tpu.memory_space<vmem>>, %arg2: memref<16x1xf32, #tpu.memory_space<vmem>>, %arg3: memref<3x128x256xf32, #tpu.memory_space<vmem>>, %arg4: memref<3x1x256xf32, #tpu.memory_space<vmem>>, %arg5: memref<3x1x128xf32, #tpu.memory_space<vmem>>, %arg6: memref<3x1x128xf32, #tpu.memory_space<vmem>>, %arg7: memref<3x1x128xf32, #tpu.memory_space<vmem>>, %arg8: memref<3x1x128xf32, #tpu.memory_space<vmem>>, %arg9: memref<3x1x128xf32, #tpu.memory_space<vmem>>, %arg10: memref<16x128xf32, #tpu.memory_space<vmem>>) attributes {dimension_semantics = [], scalar_prefetch = 0 : i64, scratch_operands = 0 : i64, tpu.core_type = #tpu.core_type<tc>} {
    %c0 = arith.constant 0 : index
    %c0_0 = arith.constant 0 : index
    %0 = vector.load %arg0[%c0, %c0_0] : memref<16x128xf32, #tpu.memory_space<vmem>>, vector<16x128xf32>
    %c0_1 = arith.constant 0 : index
    %c0_2 = arith.constant 0 : index
    %1 = vector.load %arg2[%c0_1, %c0_2] : memref<16x1xf32, #tpu.memory_space<vmem>>, vector<16x1xf32>
    %c0_3 = arith.constant 0 : index
    %c0_4 = arith.constant 0 : index
    %2 = vector.load %arg1[%c0_3, %c0_4] : memref<16x16xf32, #tpu.memory_space<vmem>>, vector<16x16xf32>
    %c0_5 = arith.constant 0 : index
    %c0_6 = arith.constant 0 : index
    %c0_7 = arith.constant 0 : index
    %3 = vector.load %arg3[%c0_5, %c0_6, %c0_7] : memref<3x128x256xf32, #tpu.memory_space<vmem>>, vector<1x128x256xf32>
    %4 = vector.shape_cast %3 : vector<1x128x256xf32> to vector<128x256xf32>
    %cst = arith.constant dense<0.000000e+00> : vector<16x256xf32>
    %5 = tpu.matmul %0, %4, %cst {dimension_numbers = #tpu.dot_dimension_numbers<[1], [0], [0], [1], [0, 0, 1, 1], [], []>} : vector<16x128xf32>, vector<128x256xf32>, vector<16x256xf32> -> vector<16x256xf32>
    %c0_8 = arith.constant 0 : index
    %c0_9 = arith.constant 0 : index
    %c0_10 = arith.constant 0 : index
    %6 = vector.load %arg4[%c0_8, %c0_9, %c0_10] : memref<3x1x256xf32, #tpu.memory_space<vmem>>, vector<1x1x256xf32>
    %7 = vector.shape_cast %6 : vector<1x1x256xf32> to vector<1x256xf32>
    %8 = vector.broadcast %7 : vector<1x256xf32> to vector<16x256xf32>
    %9 = arith.addf %5, %8 : vector<16x256xf32>
    %10 = vector.extract_strided_slice %9 {offsets = [0, 0], sizes = [16, 128], strides = [1, 1]} : vector<16x256xf32> to vector<16x128xf32>
    %11 = vector.extract_strided_slice %9 {offsets = [0, 128], sizes = [16, 128], strides = [1, 1]} : vector<16x256xf32> to vector<16x128xf32>
    %12 = vector.shape_cast %11 : vector<16x128xf32> to vector<16x1x128xf32>
    %13 = vector.shape_cast %10 : vector<16x128xf32> to vector<1x16x128xf32>
    %14 = vector.broadcast %12 : vector<16x1x128xf32> to vector<16x16x128xf32>
    %15 = vector.broadcast %13 : vector<1x16x128xf32> to vector<16x16x128xf32>
    %16 = arith.addf %14, %15 : vector<16x16x128xf32>
    %cst_11 = arith.constant 2.000000e-01 : f32
    %17 = vector.broadcast %cst_11 : f32 to vector<16x16x128xf32>
    %18 = arith.mulf %17, %16 : vector<16x16x128xf32>
    %19 = arith.maximumf %16, %18 : vector<16x16x128xf32>
    %c0_12 = arith.constant 0 : index
    %c0_13 = arith.constant 0 : index
    %c0_14 = arith.constant 0 : index
    %20 = vector.load %arg5[%c0_12, %c0_13, %c0_14] : memref<3x1x128xf32, #tpu.memory_space<vmem>>, vector<1x1x128xf32>
    %21 = vector.shape_cast %20 : vector<1x1x128xf32> to vector<1x128xf32>
    %22 = vector.shape_cast %21 : vector<1x128xf32> to vector<1x1x128xf32>
    %23 = vector.broadcast %22 : vector<1x1x128xf32> to vector<16x16x128xf32>
    %24 = arith.mulf %19, %23 : vector<16x16x128xf32>
    %cst_15 = arith.constant dense<0.000000e+00> : vector<16x16xf32>
    %25 = vector.multi_reduction <add>, %24, %cst_15 [2] : vector<16x16x128xf32> to vector<16x16xf32>
    %26 = arith.addf %25, %2 : vector<16x16xf32>
    %cst_16 = arith.constant dense<0xFF800000> : vector<16xf32>
    %27 = vector.multi_reduction <maximumf>, %26, %cst_16 [1] : vector<16x16xf32> to vector<16xf32>
    %28 = vector.shape_cast %27 : vector<16xf32> to vector<16x1xf32>
    %29 = vector.broadcast %28 : vector<16x1xf32> to vector<16x16xf32>
    %30 = arith.subf %26, %29 : vector<16x16xf32>
    %31 = math.exp %30 : vector<16x16xf32>
    %cst_17 = arith.constant dense<0.000000e+00> : vector<16xf32>
    %32 = vector.multi_reduction <add>, %31, %cst_17 [1] : vector<16x16xf32> to vector<16xf32>
    %33 = vector.shape_cast %32 : vector<16xf32> to vector<16x1xf32>
    %34 = tpu.reciprocal %33 {approx = true} : vector<16x1xf32> -> vector<16x1xf32>
    %35 = vector.broadcast %34 : vector<16x1xf32> to vector<16x16xf32>
    %36 = arith.mulf %31, %35 : vector<16x16xf32>
    %cst_18 = arith.constant dense<0.000000e+00> : vector<16x128xf32>
    %37 = tpu.matmul %36, %10, %cst_18 {dimension_numbers = #tpu.dot_dimension_numbers<[1], [0], [0], [1], [0, 0, 1, 1], [], []>} : vector<16x16xf32>, vector<16x128xf32>, vector<16x128xf32> -> vector<16x128xf32>
    %c0_19 = arith.constant 0 : index
    %c0_20 = arith.constant 0 : index
    %c0_21 = arith.constant 0 : index
    %38 = vector.load %arg6[%c0_19, %c0_20, %c0_21] : memref<3x1x128xf32, #tpu.memory_space<vmem>>, vector<1x1x128xf32>
    %39 = vector.shape_cast %38 : vector<1x1x128xf32> to vector<1x128xf32>
    %40 = vector.broadcast %39 : vector<1x128xf32> to vector<16x128xf32>
    %41 = arith.addf %37, %40 : vector<16x128xf32>
    %42 = vector.broadcast %1 : vector<16x1xf32> to vector<16x128xf32>
    %43 = arith.mulf %41, %42 : vector<16x128xf32>
    %cst_22 = arith.constant dense<0.000000e+00> : vector<128xf32>
    %44 = vector.multi_reduction <add>, %43, %cst_22 [0] : vector<16x128xf32> to vector<128xf32>
    %45 = vector.shape_cast %44 : vector<128xf32> to vector<1x128xf32>
    %cst_23 = arith.constant 6.250000e-02 : f32
    %46 = vector.broadcast %cst_23 : f32 to vector<1x128xf32>
    %47 = arith.mulf %45, %46 : vector<1x128xf32>
    %c0_24 = arith.constant 0 : index
    %c0_25 = arith.constant 0 : index
    %c0_26 = arith.constant 0 : index
    %48 = vector.load %arg9[%c0_24, %c0_25, %c0_26] : memref<3x1x128xf32, #tpu.memory_space<vmem>>, vector<1x1x128xf32>
    %49 = vector.shape_cast %48 : vector<1x1x128xf32> to vector<1x128xf32>
    %50 = arith.mulf %47, %49 : vector<1x128xf32>
    %51 = vector.broadcast %50 : vector<1x128xf32> to vector<16x128xf32>
    %52 = arith.subf %41, %51 : vector<16x128xf32>
    %53 = vector.broadcast %1 : vector<16x1xf32> to vector<16x128xf32>
    %54 = arith.mulf %52, %53 : vector<16x128xf32>
    %55 = arith.mulf %54, %54 : vector<16x128xf32>
    %cst_27 = arith.constant dense<0.000000e+00> : vector<128xf32>
    %56 = vector.multi_reduction <add>, %55, %cst_27 [0] : vector<16x128xf32> to vector<128xf32>
    %57 = vector.shape_cast %56 : vector<128xf32> to vector<1x128xf32>
    %cst_28 = arith.constant 6.250000e-02 : f32
    %58 = vector.broadcast %cst_28 : f32 to vector<1x128xf32>
    %59 = arith.mulf %57, %58 : vector<1x128xf32>
    %cst_29 = arith.constant 9.99999974E-6 : f32
    %60 = vector.broadcast %cst_29 : f32 to vector<1x128xf32>
    %61 = arith.addf %59, %60 : vector<1x128xf32>
    %62 = math.rsqrt %61 : vector<1x128xf32>
    %c0_30 = arith.constant 0 : index
    %c0_31 = arith.constant 0 : index
    %c0_32 = arith.constant 0 : index
    %63 = vector.load %arg7[%c0_30, %c0_31, %c0_32] : memref<3x1x128xf32, #tpu.memory_space<vmem>>, vector<1x1x128xf32>
    %64 = vector.shape_cast %63 : vector<1x1x128xf32> to vector<1x128xf32>
    %65 = vector.broadcast %64 : vector<1x128xf32> to vector<16x128xf32>
    %66 = arith.mulf %65, %52 : vector<16x128xf32>
    %67 = vector.broadcast %62 : vector<1x128xf32> to vector<16x128xf32>
    %68 = arith.mulf %66, %67 : vector<16x128xf32>
    %c0_33 = arith.constant 0 : index
    %c0_34 = arith.constant 0 : index
    %c0_35 = arith.constant 0 : index
    %69 = vector.load %arg8[%c0_33, %c0_34, %c0_35] : memref<3x1x128xf32, #tpu.memory_space<vmem>>, vector<1x1x128xf32>
    %70 = vector.shape_cast %69 : vector<1x1x128xf32> to vector<1x128xf32>
    %71 = vector.broadcast %70 : vector<1x128xf32> to vector<16x128xf32>
    %72 = arith.addf %68, %71 : vector<16x128xf32>
    %cst_36 = arith.constant 0.000000e+00 : f32
    %73 = vector.broadcast %cst_36 : f32 to vector<16x128xf32>
    %74 = arith.maximumf %72, %73 : vector<16x128xf32>
    %75 = vector.broadcast %1 : vector<16x1xf32> to vector<16x128xf32>
    %76 = arith.mulf %74, %75 : vector<16x128xf32>
    %c1 = arith.constant 1 : index
    %c0_37 = arith.constant 0 : index
    %c0_38 = arith.constant 0 : index
    %77 = vector.load %arg3[%c1, %c0_37, %c0_38] : memref<3x128x256xf32, #tpu.memory_space<vmem>>, vector<1x128x256xf32>
    %78 = vector.shape_cast %77 : vector<1x128x256xf32> to vector<128x256xf32>
    %cst_39 = arith.constant dense<0.000000e+00> : vector<16x256xf32>
    %79 = tpu.matmul %76, %78, %cst_39 {dimension_numbers = #tpu.dot_dimension_numbers<[1], [0], [0], [1], [0, 0, 1, 1], [], []>} : vector<16x128xf32>, vector<128x256xf32>, vector<16x256xf32> -> vector<16x256xf32>
    %c1_40 = arith.constant 1 : index
    %c0_41 = arith.constant 0 : index
    %c0_42 = arith.constant 0 : index
    %80 = vector.load %arg4[%c1_40, %c0_41, %c0_42] : memref<3x1x256xf32, #tpu.memory_space<vmem>>, vector<1x1x256xf32>
    %81 = vector.shape_cast %80 : vector<1x1x256xf32> to vector<1x256xf32>
    %82 = vector.broadcast %81 : vector<1x256xf32> to vector<16x256xf32>
    %83 = arith.addf %79, %82 : vector<16x256xf32>
    %84 = vector.extract_strided_slice %83 {offsets = [0, 0], sizes = [16, 128], strides = [1, 1]} : vector<16x256xf32> to vector<16x128xf32>
    %85 = vector.extract_strided_slice %83 {offsets = [0, 128], sizes = [16, 128], strides = [1, 1]} : vector<16x256xf32> to vector<16x128xf32>
    %86 = vector.shape_cast %85 : vector<16x128xf32> to vector<16x1x128xf32>
    %87 = vector.shape_cast %84 : vector<16x128xf32> to vector<1x16x128xf32>
    %88 = vector.broadcast %86 : vector<16x1x128xf32> to vector<16x16x128xf32>
    %89 = vector.broadcast %87 : vector<1x16x128xf32> to vector<16x16x128xf32>
    %90 = arith.addf %88, %89 : vector<16x16x128xf32>
    %cst_43 = arith.constant 2.000000e-01 : f32
    %91 = vector.broadcast %cst_43 : f32 to vector<16x16x128xf32>
    %92 = arith.mulf %91, %90 : vector<16x16x128xf32>
    %93 = arith.maximumf %90, %92 : vector<16x16x128xf32>
    %c1_44 = arith.constant 1 : index
    %c0_45 = arith.constant 0 : index
    %c0_46 = arith.constant 0 : index
    %94 = vector.load %arg5[%c1_44, %c0_45, %c0_46] : memref<3x1x128xf32, #tpu.memory_space<vmem>>, vector<1x1x128xf32>
    %95 = vector.shape_cast %94 : vector<1x1x128xf32> to vector<1x128xf32>
    %96 = vector.shape_cast %95 : vector<1x128xf32> to vector<1x1x128xf32>
    %97 = vector.broadcast %96 : vector<1x1x128xf32> to vector<16x16x128xf32>
    %98 = arith.mulf %93, %97 : vector<16x16x128xf32>
    %cst_47 = arith.constant dense<0.000000e+00> : vector<16x16xf32>
    %99 = vector.multi_reduction <add>, %98, %cst_47 [2] : vector<16x16x128xf32> to vector<16x16xf32>
    %100 = arith.addf %99, %2 : vector<16x16xf32>
    %cst_48 = arith.constant dense<0xFF800000> : vector<16xf32>
    %101 = vector.multi_reduction <maximumf>, %100, %cst_48 [1] : vector<16x16xf32> to vector<16xf32>
    %102 = vector.shape_cast %101 : vector<16xf32> to vector<16x1xf32>
    %103 = vector.broadcast %102 : vector<16x1xf32> to vector<16x16xf32>
    %104 = arith.subf %100, %103 : vector<16x16xf32>
    %105 = math.exp %104 : vector<16x16xf32>
    %cst_49 = arith.constant dense<0.000000e+00> : vector<16xf32>
    %106 = vector.multi_reduction <add>, %105, %cst_49 [1] : vector<16x16xf32> to vector<16xf32>
    %107 = vector.shape_cast %106 : vector<16xf32> to vector<16x1xf32>
    %108 = tpu.reciprocal %107 {approx = true} : vector<16x1xf32> -> vector<16x1xf32>
    %109 = vector.broadcast %108 : vector<16x1xf32> to vector<16x16xf32>
    %110 = arith.mulf %105, %109 : vector<16x16xf32>
    %cst_50 = arith.constant dense<0.000000e+00> : vector<16x128xf32>
    %111 = tpu.matmul %110, %84, %cst_50 {dimension_numbers = #tpu.dot_dimension_numbers<[1], [0], [0], [1], [0, 0, 1, 1], [], []>} : vector<16x16xf32>, vector<16x128xf32>, vector<16x128xf32> -> vector<16x128xf32>
    %c1_51 = arith.constant 1 : index
    %c0_52 = arith.constant 0 : index
    %c0_53 = arith.constant 0 : index
    %112 = vector.load %arg6[%c1_51, %c0_52, %c0_53] : memref<3x1x128xf32, #tpu.memory_space<vmem>>, vector<1x1x128xf32>
    %113 = vector.shape_cast %112 : vector<1x1x128xf32> to vector<1x128xf32>
    %114 = vector.broadcast %113 : vector<1x128xf32> to vector<16x128xf32>
    %115 = arith.addf %111, %114 : vector<16x128xf32>
    %116 = vector.broadcast %1 : vector<16x1xf32> to vector<16x128xf32>
    %117 = arith.mulf %115, %116 : vector<16x128xf32>
    %cst_54 = arith.constant dense<0.000000e+00> : vector<128xf32>
    %118 = vector.multi_reduction <add>, %117, %cst_54 [0] : vector<16x128xf32> to vector<128xf32>
    %119 = vector.shape_cast %118 : vector<128xf32> to vector<1x128xf32>
    %cst_55 = arith.constant 6.250000e-02 : f32
    %120 = vector.broadcast %cst_55 : f32 to vector<1x128xf32>
    %121 = arith.mulf %119, %120 : vector<1x128xf32>
    %c1_56 = arith.constant 1 : index
    %c0_57 = arith.constant 0 : index
    %c0_58 = arith.constant 0 : index
    %122 = vector.load %arg9[%c1_56, %c0_57, %c0_58] : memref<3x1x128xf32, #tpu.memory_space<vmem>>, vector<1x1x128xf32>
    %123 = vector.shape_cast %122 : vector<1x1x128xf32> to vector<1x128xf32>
    %124 = arith.mulf %121, %123 : vector<1x128xf32>
    %125 = vector.broadcast %124 : vector<1x128xf32> to vector<16x128xf32>
    %126 = arith.subf %115, %125 : vector<16x128xf32>
    %127 = vector.broadcast %1 : vector<16x1xf32> to vector<16x128xf32>
    %128 = arith.mulf %126, %127 : vector<16x128xf32>
    %129 = arith.mulf %128, %128 : vector<16x128xf32>
    %cst_59 = arith.constant dense<0.000000e+00> : vector<128xf32>
    %130 = vector.multi_reduction <add>, %129, %cst_59 [0] : vector<16x128xf32> to vector<128xf32>
    %131 = vector.shape_cast %130 : vector<128xf32> to vector<1x128xf32>
    %cst_60 = arith.constant 6.250000e-02 : f32
    %132 = vector.broadcast %cst_60 : f32 to vector<1x128xf32>
    %133 = arith.mulf %131, %132 : vector<1x128xf32>
    %cst_61 = arith.constant 9.99999974E-6 : f32
    %134 = vector.broadcast %cst_61 : f32 to vector<1x128xf32>
    %135 = arith.addf %133, %134 : vector<1x128xf32>
    %136 = math.rsqrt %135 : vector<1x128xf32>
    %c1_62 = arith.constant 1 : index
    %c0_63 = arith.constant 0 : index
    %c0_64 = arith.constant 0 : index
    %137 = vector.load %arg7[%c1_62, %c0_63, %c0_64] : memref<3x1x128xf32, #tpu.memory_space<vmem>>, vector<1x1x128xf32>
    %138 = vector.shape_cast %137 : vector<1x1x128xf32> to vector<1x128xf32>
    %139 = vector.broadcast %138 : vector<1x128xf32> to vector<16x128xf32>
    %140 = arith.mulf %139, %126 : vector<16x128xf32>
    %141 = vector.broadcast %136 : vector<1x128xf32> to vector<16x128xf32>
    %142 = arith.mulf %140, %141 : vector<16x128xf32>
    %c1_65 = arith.constant 1 : index
    %c0_66 = arith.constant 0 : index
    %c0_67 = arith.constant 0 : index
    %143 = vector.load %arg8[%c1_65, %c0_66, %c0_67] : memref<3x1x128xf32, #tpu.memory_space<vmem>>, vector<1x1x128xf32>
    %144 = vector.shape_cast %143 : vector<1x1x128xf32> to vector<1x128xf32>
    %145 = vector.broadcast %144 : vector<1x128xf32> to vector<16x128xf32>
    %146 = arith.addf %142, %145 : vector<16x128xf32>
    %cst_68 = arith.constant 0.000000e+00 : f32
    %147 = vector.broadcast %cst_68 : f32 to vector<16x128xf32>
    %148 = arith.maximumf %146, %147 : vector<16x128xf32>
    %149 = vector.broadcast %1 : vector<16x1xf32> to vector<16x128xf32>
    %150 = arith.mulf %148, %149 : vector<16x128xf32>
    %c2 = arith.constant 2 : index
    %c0_69 = arith.constant 0 : index
    %c0_70 = arith.constant 0 : index
    %151 = vector.load %arg3[%c2, %c0_69, %c0_70] : memref<3x128x256xf32, #tpu.memory_space<vmem>>, vector<1x128x256xf32>
    %152 = vector.shape_cast %151 : vector<1x128x256xf32> to vector<128x256xf32>
    %cst_71 = arith.constant dense<0.000000e+00> : vector<16x256xf32>
    %153 = tpu.matmul %150, %152, %cst_71 {dimension_numbers = #tpu.dot_dimension_numbers<[1], [0], [0], [1], [0, 0, 1, 1], [], []>} : vector<16x128xf32>, vector<128x256xf32>, vector<16x256xf32> -> vector<16x256xf32>
    %c2_72 = arith.constant 2 : index
    %c0_73 = arith.constant 0 : index
    %c0_74 = arith.constant 0 : index
    %154 = vector.load %arg4[%c2_72, %c0_73, %c0_74] : memref<3x1x256xf32, #tpu.memory_space<vmem>>, vector<1x1x256xf32>
    %155 = vector.shape_cast %154 : vector<1x1x256xf32> to vector<1x256xf32>
    %156 = vector.broadcast %155 : vector<1x256xf32> to vector<16x256xf32>
    %157 = arith.addf %153, %156 : vector<16x256xf32>
    %158 = vector.extract_strided_slice %157 {offsets = [0, 0], sizes = [16, 128], strides = [1, 1]} : vector<16x256xf32> to vector<16x128xf32>
    %159 = vector.extract_strided_slice %157 {offsets = [0, 128], sizes = [16, 128], strides = [1, 1]} : vector<16x256xf32> to vector<16x128xf32>
    %160 = vector.shape_cast %159 : vector<16x128xf32> to vector<16x1x128xf32>
    %161 = vector.shape_cast %158 : vector<16x128xf32> to vector<1x16x128xf32>
    %162 = vector.broadcast %160 : vector<16x1x128xf32> to vector<16x16x128xf32>
    %163 = vector.broadcast %161 : vector<1x16x128xf32> to vector<16x16x128xf32>
    %164 = arith.addf %162, %163 : vector<16x16x128xf32>
    %cst_75 = arith.constant 2.000000e-01 : f32
    %165 = vector.broadcast %cst_75 : f32 to vector<16x16x128xf32>
    %166 = arith.mulf %165, %164 : vector<16x16x128xf32>
    %167 = arith.maximumf %164, %166 : vector<16x16x128xf32>
    %c2_76 = arith.constant 2 : index
    %c0_77 = arith.constant 0 : index
    %c0_78 = arith.constant 0 : index
    %168 = vector.load %arg5[%c2_76, %c0_77, %c0_78] : memref<3x1x128xf32, #tpu.memory_space<vmem>>, vector<1x1x128xf32>
    %169 = vector.shape_cast %168 : vector<1x1x128xf32> to vector<1x128xf32>
    %170 = vector.shape_cast %169 : vector<1x128xf32> to vector<1x1x128xf32>
    %171 = vector.broadcast %170 : vector<1x1x128xf32> to vector<16x16x128xf32>
    %172 = arith.mulf %167, %171 : vector<16x16x128xf32>
    %cst_79 = arith.constant dense<0.000000e+00> : vector<16x16xf32>
    %173 = vector.multi_reduction <add>, %172, %cst_79 [2] : vector<16x16x128xf32> to vector<16x16xf32>
    %174 = arith.addf %173, %2 : vector<16x16xf32>
    %cst_80 = arith.constant dense<0xFF800000> : vector<16xf32>
    %175 = vector.multi_reduction <maximumf>, %174, %cst_80 [1] : vector<16x16xf32> to vector<16xf32>
    %176 = vector.shape_cast %175 : vector<16xf32> to vector<16x1xf32>
    %177 = vector.broadcast %176 : vector<16x1xf32> to vector<16x16xf32>
    %178 = arith.subf %174, %177 : vector<16x16xf32>
    %179 = math.exp %178 : vector<16x16xf32>
    %cst_81 = arith.constant dense<0.000000e+00> : vector<16xf32>
    %180 = vector.multi_reduction <add>, %179, %cst_81 [1] : vector<16x16xf32> to vector<16xf32>
    %181 = vector.shape_cast %180 : vector<16xf32> to vector<16x1xf32>
    %182 = tpu.reciprocal %181 {approx = true} : vector<16x1xf32> -> vector<16x1xf32>
    %183 = vector.broadcast %182 : vector<16x1xf32> to vector<16x16xf32>
    %184 = arith.mulf %179, %183 : vector<16x16xf32>
    %cst_82 = arith.constant dense<0.000000e+00> : vector<16x128xf32>
    %185 = tpu.matmul %184, %158, %cst_82 {dimension_numbers = #tpu.dot_dimension_numbers<[1], [0], [0], [1], [0, 0, 1, 1], [], []>} : vector<16x16xf32>, vector<16x128xf32>, vector<16x128xf32> -> vector<16x128xf32>
    %c2_83 = arith.constant 2 : index
    %c0_84 = arith.constant 0 : index
    %c0_85 = arith.constant 0 : index
    %186 = vector.load %arg6[%c2_83, %c0_84, %c0_85] : memref<3x1x128xf32, #tpu.memory_space<vmem>>, vector<1x1x128xf32>
    %187 = vector.shape_cast %186 : vector<1x1x128xf32> to vector<1x128xf32>
    %188 = vector.broadcast %187 : vector<1x128xf32> to vector<16x128xf32>
    %189 = arith.addf %185, %188 : vector<16x128xf32>
    %c0_86 = arith.constant 0 : index
    %c0_87 = arith.constant 0 : index
    %190 = vector.load %arg10[%c0_86, %c0_87] : memref<16x128xf32, #tpu.memory_space<vmem>>, vector<16x128xf32>
    tpu.vector_store %arg10[%c0_86, %c0_87], %189 {strides = array<i32>} : memref<16x128xf32, #tpu.memory_space<vmem>>, vector<16x128xf32>,
    return
  }
}

</mosaic_0001>

<llo_original>
// kernel: tpu_custom_call.1
$region0: #{tpu_custom_call.1}
  #allocation0 [shape = 'u32[]', space=smem, size = 0x4, offset = 0x4, fixed_abs, tag = 'smem constant byte address 0x4 - core index']
  #allocation1 [shape = 'u32[144,128]{1,0:T(1,128)}', space=vmem, size = 0x12000, scoped, tag = 'internal scratch']
  %s0 = inlined_call_operand.vmem [shape: f32[16,128], index: 0, kind: input, shape index: {}]
  %s1 = inlined_call_operand.hbm [shape: f32[16,16], index: 1, kind: input, shape index: {}]
  %s2 = inlined_call_operand.vmem [shape: f32[16,1], index: 2, kind: input, shape index: {}]
  %s3 = inlined_call_operand.hbm [shape: f32[3,128,256], index: 3, kind: input, shape index: {}]
  %s4 = inlined_call_operand.vmem [shape: f32[3,1,256], index: 4, kind: input, shape index: {}]
  %s5 = inlined_call_operand.vmem [shape: f32[3,1,128], index: 5, kind: input, shape index: {}]
  %s6 = inlined_call_operand.vmem [shape: f32[3,1,128], index: 6, kind: input, shape index: {}]
  %s7 = inlined_call_operand.vmem [shape: f32[3,1,128], index: 7, kind: input, shape index: {}]
  %s8 = inlined_call_operand.vmem [shape: f32[3,1,128], index: 8, kind: input, shape index: {}]
  %s9 = inlined_call_operand.vmem [shape: f32[3,1,128], index: 9, kind: input, shape index: {}]
  %s10 = inlined_call_operand.hbm [shape: f32[16,128], index: 10, kind: output, shape index: {}]
  %s11 = sld [smem:[#allocation0]]
  $region58: #{tpu_custom_call.1} parent=0
    _
  %s13 = ssub.s32 1, %s11
  %s14 = scalar_select 0, %s13, %s11
  $region1: #{tpu_custom_call.1} parent=0
    #allocation2 [shape = 'u8[8192]{0}', space=vmem, size = 0x2000, scoped, tag = 'input window, operand 1, single buffered']
    #allocation3 [shape = 's32[1]{0}', space=sflag, size = 0x4, scoped, tag = 'scoped memory for tpu_custom_call.1']
    #allocation4 [shape = 's32[1]{0}', space=sflag, size = 0x4, scoped, tag = 'scoped memory for tpu_custom_call.1']
    #allocation5 [shape = 'u8[393216]{0}', space=vmem, size = 0x60000, scoped, tag = 'input window, operand 3, single buffered']
    #allocation6 [shape = 's32[1]{0}', space=sflag, size = 0x4, scoped, tag = 'scoped memory for tpu_custom_call.1']
    #allocation7 [shape = 'u8[8192]{0}', space=vmem, size = 0x2000, scoped, tag = 'output window, operand 0, single buffered']
    %15 = vsyncpa [#allocation3], 0
    %16 = vsyncpa [#allocation6], 0
    %17 = vsyncpa [#allocation4], 0
    // Predicated region
    $region2: #{tpu_custom_call.1} parent=1 // pred_check
      _
    $region3: #{tpu_custom_call.1} parent=1 // pred_check_branch
      %19 = sbr.rel (0) target = $region5
    $region4: #{tpu_custom_call.1} parent=1 // pred_region
      _
    $region5: #{tpu_custom_call.1} parent=1 // pred_fallthru
      _
    // Predicated region
    $region6: #{tpu_custom_call.1} parent=1 // pred_check
      _
    $region7: #{tpu_custom_call.1} parent=1 // pred_check_branch
      %21 = sbr.rel (0) target = $region9
    $region8: #{tpu_custom_call.1} parent=1 // pred_region
      %s23 = ssub.s32 256, 256
      %24 = vsyncadd [#allocation3], %s23
      %s25 = sshll.u32 [#allocation2], 4
      %s26 = int_to_ptr.vmem [resolvable:$true] %s25
      %31 = dma.hbm_to_vmem [thread:$0]  %s1, 256, %s26, [#allocation3], 128, 128, 8
    $region9: #{tpu_custom_call.1} parent=1 // pred_fallthru
      _
    // Predicated region
    $region10: #{tpu_custom_call.1} parent=1 // pred_check
      _
    $region11: #{tpu_custom_call.1} parent=1 // pred_check_branch
      %33 = sbr.rel (0) target = $region13
    $region12: #{tpu_custom_call.1} parent=1 // pred_region
      _
    $region13: #{tpu_custom_call.1} parent=1 // pred_fallthru
      _
    // Predicated region
    $region14: #{tpu_custom_call.1} parent=1 // pred_check
      _
    $region15: #{tpu_custom_call.1} parent=1 // pred_check_branch
      %35 = sbr.rel (0) target = $region17
    $region16: #{tpu_custom_call.1} parent=1 // pred_region
      %s37 = ssub.s32 12288, 12288
      %38 = vsyncadd [#allocation6], %s37
      %s39 = sshll.u32 [#allocation5], 4
      %s40 = int_to_ptr.vmem [resolvable:$true] %s39
      %45 = dma.hbm_to_vmem [thread:$0]  %s3, 12288, %s40, [#allocation6], 256, 256, 16
    $region17: #{tpu_custom_call.1} parent=1 // pred_fallthru
      _
    // Predicated region
    $region18: #{tpu_custom_call.1} parent=1 // pred_check
      _
    $region19: #{tpu_custom_call.1} parent=1 // pred_check_branch
      %47 = sbr.rel (0) target = $region21
    $region20: #{tpu_custom_call.1} parent=1 // pred_region
      _
    $region21: #{tpu_custom_call.1} parent=1 // pred_fallthru
      _
    // Predicated region
    $region22: #{tpu_custom_call.1} parent=1 // pred_check
      _
    $region23: #{tpu_custom_call.1} parent=1 // pred_check_branch
      %49 = sbr.rel (0) target = $region25
    $region24: #{tpu_custom_call.1} parent=1 // pred_region
      _
    $region25: #{tpu_custom_call.1} parent=1 // pred_fallthru
      _
    // Predicated region
    $region26: #{tpu_custom_call.1} parent=1 // pred_check
      _
    $region27: #{tpu_custom_call.1} parent=1 // pred_check_branch
      %51 = sbr.rel (0) target = $region29
    $region28: #{tpu_custom_call.1} parent=1 // pred_region
      _
    $region29: #{tpu_custom_call.1} parent=1 // pred_fallthru
      _
    // Predicated region
    $region30: #{tpu_custom_call.1} parent=1 // pred_check
      _
    $region31: #{tpu_custom_call.1} parent=1 // pred_check_branch
      %53 = sbr.rel (0) target = $region33
    $region32: #{tpu_custom_call.1} parent=1 // pred_region
      _
    $region33: #{tpu_custom_call.1} parent=1 // pred_fallthru
      _
    // Predicated region
    $region34: #{tpu_custom_call.1} parent=1 // pred_check
      _
    $region35: #{tpu_custom_call.1} parent=1 // pred_check_branch
      %55 = sbr.rel (0) target = $region37
    $region36: #{tpu_custom_call.1} parent=1 // pred_region
      _
    $region37: #{tpu_custom_call.1} parent=1 // pred_fallthru
      _
    // Predicated region
    $region38: #{tpu_custom_call.1} parent=1 // pred_check
      _
    $region39: #{tpu_custom_call.1} parent=1 // pred_check_branch
      %57 = sbr.rel (0) target = $region41
    $region40: #{tpu_custom_call.1} parent=1 // pred_region
      _
    $region41: #{tpu_custom_call.1} parent=1 // pred_fallthru
      _
    // Predicated region
    $region42: #{tpu_custom_call.1} parent=1 // pred_check
      _
    $region43: #{tpu_custom_call.1} parent=1 // pred_check_branch
      %59 = sbr.rel (0) target = $region45
    $region44: #{tpu_custom_call.1} parent=1 // pred_region
      %60 = dma.done [#allocation3], 256
    $region45: #{tpu_custom_call.1} parent=1 // pred_fallthru
      _
    // Predicated region
    $region46: #{tpu_custom_call.1} parent=1 // pred_check
      _
    $region47: #{tpu_custom_call.1} parent=1 // pred_check_branch
      %62 = sbr.rel (0) target = $region49
    $region48: #{tpu_custom_call.1} parent=1 // pred_region
      %63 = dma.done [#allocation6], 12288
    $region49: #{tpu_custom_call.1} parent=1 // pred_fallthru
      _
    %v64 = vld [vmem:[%s0] sm:$0xff]
    %v65 = vld [vmem:[%s0 + $0x8] sm:$0xff]
    %v66 = vld [vmem:[%s2] sm:$0xff]
    %v67 = vld [vmem:[%s2 + $0x8] sm:$0xff]
    %v68 = vld [vmem:[#allocation2] sm:$0xff]
    %v69 = vld [vmem:[#allocation2 + $0x8] sm:$0xff]
    %v70 = vld [vmem:[#allocation5] sm:$0xff]
    %v71 = vld [vmem:[#allocation5 + $0x8] sm:$0xff]
    %v72 = vld [vmem:[#allocation5 + $0x10] sm:$0xff]
    %v73 = vld [vmem:[#allocation5 + $0x18] sm:$0xff]
    %v74 = vld [vmem:[#allocation5 + $0x20] sm:$0xff]
    %v75 = vld [vmem:[#allocation5 + $0x28] sm:$0xff]
    %v76 = vld [vmem:[#allocation5 + $0x30] sm:$0xff]
    %v77 = vld [vmem:[#allocation5 + $0x38] sm:$0xff]
    %v78 = vld [vmem:[#allocation5 + $0x40] sm:$0xff]
    %v79 = vld [vmem:[#allocation5 + $0x48] sm:$0xff]
    %v80 = vld [vmem:[#allocation5 + $0x50] sm:$0xff]
    %v81 = vld [vmem:[#allocation5 + $0x58] sm:$0xff]
    %v82 = vld [vmem:[#allocation5 + $0x60] sm:$0xff]
    %v83 = vld [vmem:[#allocation5 + $0x68] sm:$0xff]
    %v84 = vld [vmem:[#allocation5 + $0x70] sm:$0xff]
    %v85 = vld [vmem:[#allocation5 + $0x78] sm:$0xff]
    %v86 = vld [vmem:[#allocation5 + $0x80] sm:$0xff]
    %v87 = vld [vmem:[#allocation5 + $0x88] sm:$0xff]
    %v88 = vld [vmem:[#allocation5 + $0x90] sm:$0xff]
    %v89 = vld [vmem:[#allocation5 + $0x98] sm:$0xff]
    %v90 = vld [vmem:[#allocation5 + $0xa0] sm:$0xff]
    %v91 = vld [vmem:[#allocation5 + $0xa8] sm:$0xff]
    %v92 = vld [vmem:[#allocation5 + $0xb0] sm:$0xff]
    %v93 = vld [vmem:[#allocation5 + $0xb8] sm:$0xff]
    %v94 = vld [vmem:[#allocation5 + $0xc0] sm:$0xff]
    %v95 = vld [vmem:[#allocation5 + $0xc8] sm:$0xff]
    %v96 = vld [vmem:[#allocation5 + $0xd0] sm:$0xff]
    %v97 = vld [vmem:[#allocation5 + $0xd8] sm:$0xff]
    %v98 = vld [vmem:[#allocation5 + $0xe0] sm:$0xff]
    %v99 = vld [vmem:[#allocation5 + $0xe8] sm:$0xff]
    %v100 = vld [vmem:[#allocation5 + $0xf0] sm:$0xff]
    %v101 = vld [vmem:[#allocation5 + $0xf8] sm:$0xff]
    %v102 = vld [vmem:[%s4] sm:$0x3]
    %v104 = vlaneseq
    %v105 = vshrl.u32 %v104, 7
    %v106 = vsub.s32 0, %v105
    %v107 = vrot.slane %v102, %v106
    %v108 = vlaneseq
    %v109 = vshrl.u32 %v108, 7
    %v110 = vsub.s32 1, %v109
    %v111 = vrot.slane %v102, %v110
    %114 = vmatprep.subr.mxu0 %v71
    %115 = vmatpush1.msra.mxu0 %v70
    %116 = vmatprep.subr.mxu0 %v73
    %117 = vmatpush1.msra.mxu0 %v72
    %118 = vmatprep.subr.mxu0 %v75
    %119 = vmatpush1.msra.mxu0 %v74
    %120 = vmatprep.subr.mxu0 %v77
    %121 = vmatpush1.msra.mxu0 %v76
    %122 = vmatprep.subr.mxu0 %v79
    %123 = vmatpush1.msra.mxu0 %v78
    %124 = vmatprep.subr.mxu0 %v81
    %125 = vmatpush1.msra.mxu0 %v80
    %126 = vmatprep.subr.mxu0 %v83
    %127 = vmatpush1.msra.mxu0 %v82
    %128 = vmatprep.subr.mxu0 %v85
    %129 = vmatpush1.msra.mxu0 %v84
    %130 = vmatprep.subr.mxu0 %v87
    %131 = vmatpush1.msra.mxu0 %v86
    %132 = vmatprep.subr.mxu0 %v89
    %133 = vmatpush1.msra.mxu0 %v88
    %134 = vmatprep.subr.mxu0 %v91
    %135 = vmatpush1.msra.mxu0 %v90
    %136 = vmatprep.subr.mxu0 %v93
    %137 = vmatpush1.msra.mxu0 %v92
    %138 = vmatprep.subr.mxu0 %v95
    %139 = vmatpush1.msra.mxu0 %v94
    %140 = vmatprep.subr.mxu0 %v97
    %141 = vmatpush1.msra.mxu0 %v96
    %142 = vmatprep.subr.mxu0 %v99
    %143 = vmatpush1.msra.mxu0 %v98
    %144 = vmatprep.subr.mxu0 %v101
    %145 = vmatpush1.msra.mxu0 %v100
    %146 = vmatprep.subr.mxu0 0.0
    %147 = vmatpush1.msra.mxu0 0.0
    %148 = vmatprep.subr.mxu0 0.0
    %149 = vmatpush1.msra.mxu0 0.0
    %150 = vmatprep.subr.mxu0 0.0
    %151 = vmatpush1.msra.mxu0 0.0
    %152 = vmatprep.subr.mxu0 0.0
    %153 = vmatpush1.msra.mxu0 0.0
    %154 = vmatprep.subr.mxu0 0.0
    %155 = vmatpush1.msra.mxu0 0.0
    %156 = vmatprep.subr.mxu0 0.0
    %157 = vmatpush1.msra.mxu0 0.0
    %158 = vmatprep.subr.mxu0 0.0
    %159 = vmatpush1.msra.mxu0 0.0
    %160 = vmatprep.subr.mxu0 0.0
    %161 = vmatpush1.msra.mxu0 0.0
    %162 = vmatprep.subr.mxu0 0.0
    %163 = vmatpush1.msra.mxu0 0.0
    %164 = vmatprep.subr.mxu0 0.0
    %165 = vmatpush1.msra.mxu0 0.0
    %166 = vmatprep.subr.mxu0 0.0
    %167 = vmatpush1.msra.mxu0 0.0
    %168 = vmatprep.subr.mxu0 0.0
    %169 = vmatpush1.msra.mxu0 0.0
    %170 = vmatprep.subr.mxu0 0.0
    %171 = vmatpush1.msra.mxu0 0.0
    %172 = vmatprep.subr.mxu0 0.0
    %173 = vmatpush1.msra.mxu0 0.0
    %174 = vmatprep.subr.mxu0 0.0
    %175 = vmatpush1.msra.mxu0 0.0
    %176 = vmatprep.subr.mxu0 0.0
    %177 = vmatpush1.msra.mxu0 0.0
    %178 = vmatprep.mubr.f32.mxu0 0.0
    %179 = vmatmul.mubr.f32.gmra.mrb[0].mxu0 %v64
    %v180 = vpop.f32.mrb[0].mxu0
    %v181 = vadd.f32 %v107, %v180
    %v182 = vpop.f32.mrb[0].mxu0
    %v183 = vadd.f32 %v111, %v182
    %184 = vmatprep.mubr.f32.mxu0 0.0
    %185 = vmatmul.mubr.f32.gmra.mrb[0].mxu0 %v65
    %v186 = vpop.f32.mrb[0].mxu0
    %v187 = vadd.f32 %v107, %v186
    %v188 = vpop.f32.mrb[0].mxu0
    %v189 = vadd.f32 %v111, %v188
    %190 = vdwg.mxu0
    %v193 = vcombine.high %v183, %v183
    %v195 = vunpack.c.l.s4 1966171168
    %v196 = vunpack.c.0.s8 %v195
    %v197 = vlaneseq
    %v198 = vshrl.u32 %v197, 7
    %v199 = vsub.s32 %v196, %v198
    %v200 = vrot.slane %v183, %v199
    %v202 = vunpack.c.l.s4 1966171168
    %v203 = vunpack.c.0.s8 %v202
    %v204 = vlaneseq
    %v205 = vshrl.u32 %v204, 7
    %v206 = vsub.s32 %v203, %v205
    %v207 = vrot.slane %v193, %v206
    %v208 = vcombine.high %v200, %v200
    %v209 = vcombine.high %v207, %v207
    %v211 = vunpack.c.l.s4 1966171168
    %v212 = vunpack.c.0.s8 %v211
    %v213 = vlaneseq
    %v214 = vshrl.u32 %v213, 7
    %v215 = vsub.s32 %v212, %v214
    %v216 = vrot.slane %v200, %v215
    %v218 = vunpack.c.l.s4 1966171168
    %v219 = vunpack.c.0.s8 %v218
    %v220 = vlaneseq
    %v221 = vshrl.u32 %v220, 7
    %v222 = vsub.s32 %v219, %v221
    %v223 = vrot.slane %v207, %v222
    %v225 = vunpack.c.l.s4 1966171168
    %v226 = vunpack.c.0.s8 %v225
    %v227 = vlaneseq
    %v228 = vshrl.u32 %v227, 7
    %v229 = vsub.s32 %v226, %v228
    %v230 = vrot.slane %v208, %v229
    %v232 = vunpack.c.l.s4 1966171168
    %v233 = vunpack.c.0.s8 %v232
    %v234 = vlaneseq
    %v235 = vshrl.u32 %v234, 7
    %v236 = vsub.s32 %v233, %v235
    %v237 = vrot.slane %v209, %v236
    %v238 = vcombine.high %v216, %v216
    %v239 = vcombine.high %v223, %v223
    %v240 = vcombine.high %v230, %v230
    %v241 = vcombine.high %v237, %v237
    %v242 = vcombine.high %v189, %v189
    %v244 = vunpack.c.l.s4 1966171168
    %v245 = vunpack.c.0.s8 %v244
    %v246 = vlaneseq
    %v247 = vshrl.u32 %v246, 7
    %v248 = vsub.s32 %v245, %v247
    %v249 = vrot.slane %v189, %v248
    %v251 = vunpack.c.l.s4 1966171168
    %v252 = vunpack.c.0.s8 %v251
    %v253 = vlaneseq
    %v254 = vshrl.u32 %v253, 7
    %v255 = vsub.s32 %v252, %v254
    %v256 = vrot.slane %v242, %v255
    %v257 = vcombine.high %v249, %v249
    %v258 = vcombine.high %v256, %v256
    %v260 = vunpack.c.l.s4 1966171168
    %v261 = vunpack.c.0.s8 %v260
    %v262 = vlaneseq
    %v263 = vshrl.u32 %v262, 7
    %v264 = vsub.s32 %v261, %v263
    %v265 = vrot.slane %v249, %v264
    %v267 = vunpack.c.l.s4 1966171168
    %v268 = vunpack.c.0.s8 %v267
    %v269 = vlaneseq
    %v270 = vshrl.u32 %v269, 7
    %v271 = vsub.s32 %v268, %v270
    %v272 = vrot.slane %v256, %v271
    %v274 = vunpack.c.l.s4 1966171168
    %v275 = vunpack.c.0.s8 %v274
    %v276 = vlaneseq
    %v277 = vshrl.u32 %v276, 7
    %v278 = vsub.s32 %v275, %v277
    %v279 = vrot.slane %v257, %v278
    %v281 = vunpack.c.l.s4 1966171168
    %v282 = vunpack.c.0.s8 %v281
    %v283 = vlaneseq
    %v284 = vshrl.u32 %v283, 7
    %v285 = vsub.s32 %v282, %v284
    %v286 = vrot.slane %v258, %v285
    %v287 = vcombine.high %v265, %v265
    %v288 = vcombine.high %v272, %v272
    %v289 = vcombine.high %v279, %v279
    %v290 = vcombine.high %v286, %v286
    %v291 = vlaneseq
    %v292 = vshrl.u32 %v291, 7
    %v293 = vsub.s32 0, %v292
    %v294 = vrot.slane %v216, %v293
    %v295 = vlaneseq
    %v296 = vshrl.u32 %v295, 7
    %v297 = vsub.s32 0, %v296
    %v298 = vrot.slane %v230, %v297
    %v299 = vlaneseq
    %v300 = vshrl.u32 %v299, 7
    %v301 = vsub.s32 0, %v300
    %v302 = vrot.slane %v238, %v301
    %v303 = vlaneseq
    %v304 = vshrl.u32 %v303, 7
    %v305 = vsub.s32 0, %v304
    %v306 = vrot.slane %v240, %v305
    %v307 = vlaneseq
    %v308 = vshrl.u32 %v307, 7
    %v309 = vsub.s32 0, %v308
    %v310 = vrot.slane %v223, %v309
    %v311 = vlaneseq
    %v312 = vshrl.u32 %v311, 7
    %v313 = vsub.s32 0, %v312
    %v314 = vrot.slane %v237, %v313
    %v315 = vlaneseq
    %v316 = vshrl.u32 %v315, 7
    %v317 = vsub.s32 0, %v316
    %v318 = vrot.slane %v239, %v317
    %v319 = vlaneseq
    %v320 = vshrl.u32 %v319, 7
    %v321 = vsub.s32 0, %v320
    %v322 = vrot.slane %v241, %v321
    %v323 = vlaneseq
    %v324 = vshrl.u32 %v323, 7
    %v325 = vsub.s32 0, %v324
    %v326 = vrot.slane %v265, %v325
    %v327 = vlaneseq
    %v328 = vshrl.u32 %v327, 7
    %v329 = vsub.s32 0, %v328
    %v330 = vrot.slane %v279, %v329
    %v331 = vlaneseq
    %v332 = vshrl.u32 %v331, 7
    %v333 = vsub.s32 0, %v332
    %v334 = vrot.slane %v287, %v333
    %v335 = vlaneseq
    %v336 = vshrl.u32 %v335, 7
    %v337 = vsub.s32 0, %v336
    %v338 = vrot.slane %v289, %v337
    %v339 = vlaneseq
    %v340 = vshrl.u32 %v339, 7
    %v341 = vsub.s32 0, %v340
    %v342 = vrot.slane %v272, %v341
    %v343 = vlaneseq
    %v344 = vshrl.u32 %v343, 7
    %v345 = vsub.s32 0, %v344
    %v346 = vrot.slane %v286, %v345
    %v347 = vlaneseq
    %v348 = vshrl.u32 %v347, 7
    %v349 = vsub.s32 0, %v348
    %v350 = vrot.slane %v288, %v349
    %v351 = vlaneseq
    %v352 = vshrl.u32 %v351, 7
    %v353 = vsub.s32 0, %v352
    %v354 = vrot.slane %v290, %v353
    %v371 = vadd.f32 %v294, %v181
    %v372 = vadd.f32 %v294, %v187
    %v373 = vadd.f32 %v298, %v181
    %v374 = vadd.f32 %v298, %v187
    %v375 = vadd.f32 %v302, %v181
    %v376 = vadd.f32 %v302, %v187
    %v377 = vadd.f32 %v306, %v181
    %v378 = vadd.f32 %v306, %v187
    %v379 = vadd.f32 %v310, %v181
    %v380 = vadd.f32 %v310, %v187
    %v381 = vadd.f32 %v314, %v181
    %v382 = vadd.f32 %v314, %v187
    %v383 = vadd.f32 %v318, %v181
    %v384 = vadd.f32 %v318, %v187
    %v385 = vadd.f32 %v322, %v181
    %v386 = vadd.f32 %v322, %v187
    %v387 = vadd.f32 %v326, %v181
    %v388 = vadd.f32 %v326, %v187
    %v389 = vadd.f32 %v330, %v181
    %v390 = vadd.f32 %v330, %v187
    %v391 = vadd.f32 %v334, %v181
    %v392 = vadd.f32 %v334, %v187
    %v393 = vadd.f32 %v338, %v181
    %v394 = vadd.f32 %v338, %v187
    %v395 = vadd.f32 %v342, %v181
    %v396 = vadd.f32 %v342, %v187
    %v397 = vadd.f32 %v346, %v181
    %v398 = vadd.f32 %v346, %v187
    %v399 = vadd.f32 %v350, %v181
    %v400 = vadd.f32 %v350, %v187
    %v401 = vadd.f32 %v354, %v181
    %v402 = vadd.f32 %v354, %v187
    %v403 = vmul.f32 %v371, 0.2
    %v404 = vmul.f32 %v372, 0.2
    %v405 = vmul.f32 %v373, 0.2
    %v406 = vmul.f32 %v374, 0.2
    %v407 = vmul.f32 %v375, 0.2
    %v408 = vmul.f32 %v376, 0.2
    %v409 = vmul.f32 %v377, 0.2
    %v410 = vmul.f32 %v378, 0.2
    %v411 = vmul.f32 %v379, 0.2
    %v412 = vmul.f32 %v380, 0.2
    %v413 = vmul.f32 %v381, 0.2
    %v414 = vmul.f32 %v382, 0.2
    %v415 = vmul.f32 %v383, 0.2
    %v416 = vmul.f32 %v384, 0.2
    %v417 = vmul.f32 %v385, 0.2
    %v418 = vmul.f32 %v386, 0.2
    %v419 = vmul.f32 %v387, 0.2
    %v420 = vmul.f32 %v388, 0.2
    %v421 = vmul.f32 %v389, 0.2
    %v422 = vmul.f32 %v390, 0.2
    %v423 = vmul.f32 %v391, 0.2
    %v424 = vmul.f32 %v392, 0.2
    %v425 = vmul.f32 %v393, 0.2
    %v426 = vmul.f32 %v394, 0.2
    %v427 = vmul.f32 %v395, 0.2
    %v428 = vmul.f32 %v396, 0.2
    %v429 = vmul.f32 %v397, 0.2
    %v430 = vmul.f32 %v398, 0.2
    %v431 = vmul.f32 %v399, 0.2
    %v432 = vmul.f32 %v400, 0.2
    %v433 = vmul.f32 %v401, 0.2
    %v434 = vmul.f32 %v402, 0.2
    %v435 = vmax.f32 %v371, %v403
    %v436 = vmax.f32 %v372, %v404
    %v437 = vmax.f32 %v373, %v405
    %v438 = vmax.f32 %v374, %v406
    %v439 = vmax.f32 %v375, %v407
    %v440 = vmax.f32 %v376, %v408
    %v441 = vmax.f32 %v377, %v409
    %v442 = vmax.f32 %v378, %v410
    %v443 = vmax.f32 %v379, %v411
    %v444 = vmax.f32 %v380, %v412
    %v445 = vmax.f32 %v381, %v413
    %v446 = vmax.f32 %v382, %v414
    %v447 = vmax.f32 %v383, %v415
    %v448 = vmax.f32 %v384, %v416
    %v449 = vmax.f32 %v385, %v417
    %v450 = vmax.f32 %v386, %v418
    %v451 = vmax.f32 %v387, %v419
    %v452 = vmax.f32 %v388, %v420
    %v453 = vmax.f32 %v389, %v421
    %v454 = vmax.f32 %v390, %v422
    %v455 = vmax.f32 %v391, %v423
    %v456 = vmax.f32 %v392, %v424
    %v457 = vmax.f32 %v393, %v425
    %v458 = vmax.f32 %v394, %v426
    %v459 = vmax.f32 %v395, %v427
    %v460 = vmax.f32 %v396, %v428
    %v461 = vmax.f32 %v397, %v429
    %v462 = vmax.f32 %v398, %v430
    %v463 = vmax.f32 %v399, %v431
    %v464 = vmax.f32 %v400, %v432
    %v465 = vmax.f32 %v401, %v433
    %v466 = vmax.f32 %v402, %v434
    %v467 = vld [vmem:[%s5] sm:$0x1]
    %v469 = vlaneseq
    %v470 = vshrl.u32 %v469, 7
    %v471 = vsub.s32 0, %v470
    %v472 = vrot.slane %v467, %v471
    %v474 = vmul.f32 %v435, %v472
    %v475 = vmul.f32 %v436, %v472
    %v476 = vmul.f32 %v437, %v472
    %v477 = vmul.f32 %v438, %v472
    %v478 = vmul.f32 %v439, %v472
    %v479 = vmul.f32 %v440, %v472
    %v480 = vmul.f32 %v441, %v472
    %v481 = vmul.f32 %v442, %v472
    %v482 = vmul.f32 %v443, %v472
    %v483 = vmul.f32 %v444, %v472
    %v484 = vmul.f32 %v445, %v472
    %v485 = vmul.f32 %v446, %v472
    %v486 = vmul.f32 %v447, %v472
    %v487 = vmul.f32 %v448, %v472
    %v488 = vmul.f32 %v449, %v472
    %v489 = vmul.f32 %v450, %v472
    %v490 = vmul.f32 %v451, %v472
    %v491 = vmul.f32 %v452, %v472
    %v492 = vmul.f32 %v453, %v472
    %v493 = vmul.f32 %v454, %v472
    %v494 = vmul.f32 %v455, %v472
    %v495 = vmul.f32 %v456, %v472
    %v496 = vmul.f32 %v457, %v472
    %v497 = vmul.f32 %v458, %v472
    %v498 = vmul.f32 %v459, %v472
    %v499 = vmul.f32 %v460, %v472
    %v500 = vmul.f32 %v461, %v472
    %v501 = vmul.f32 %v462, %v472
    %v502 = vmul.f32 %v463, %v472
    %v503 = vmul.f32 %v464, %v472
    %v504 = vmul.f32 %v465, %v472
    %v505 = vmul.f32 %v466, %v472
    %506 = vadd.xlane.f32.xlu0 %v474
    %v507 = vpop.xlane.xlu0 %506
    %508 = vadd.xlane.f32.xlu0 %v475
    %v509 = vpop.xlane.xlu0 %508
    %510 = vadd.xlane.f32.xlu0 %v476
    %v511 = vpop.xlane.xlu0 %510
    %512 = vadd.xlane.f32.xlu0 %v477
    %v513 = vpop.xlane.xlu0 %512
    %514 = vadd.xlane.f32.xlu0 %v478
    %v515 = vpop.xlane.xlu0 %514
    %516 = vadd.xlane.f32.xlu0 %v479
    %v517 = vpop.xlane.xlu0 %516
    %518 = vadd.xlane.f32.xlu0 %v480
    %v519 = vpop.xlane.xlu0 %518
    %520 = vadd.xlane.f32.xlu0 %v481
    %v521 = vpop.xlane.xlu0 %520
    %522 = vadd.xlane.f32.xlu0 %v482
    %v523 = vpop.xlane.xlu0 %522
    %524 = vadd.xlane.f32.xlu0 %v483
    %v525 = vpop.xlane.xlu0 %524
    %526 = vadd.xlane.f32.xlu0 %v484
    %v527 = vpop.xlane.xlu0 %526
    %528 = vadd.xlane.f32.xlu0 %v485
    %v529 = vpop.xlane.xlu0 %528
    %530 = vadd.xlane.f32.xlu0 %v486
    %v531 = vpop.xlane.xlu0 %530
    %532 = vadd.xlane.f32.xlu0 %v487
    %v533 = vpop.xlane.xlu0 %532
    %534 = vadd.xlane.f32.xlu0 %v488
    %v535 = vpop.xlane.xlu0 %534
    %536 = vadd.xlane.f32.xlu0 %v489
    %v537 = vpop.xlane.xlu0 %536
    %538 = vadd.xlane.f32.xlu0 %v490
    %v539 = vpop.xlane.xlu0 %538
    %540 = vadd.xlane.f32.xlu0 %v491
    %v541 = vpop.xlane.xlu0 %540
    %542 = vadd.xlane.f32.xlu0 %v492
    %v543 = vpop.xlane.xlu0 %542
    %544 = vadd.xlane.f32.xlu0 %v493
    %v545 = vpop.xlane.xlu0 %544
    %546 = vadd.xlane.f32.xlu0 %v494
    %v547 = vpop.xlane.xlu0 %546
    %548 = vadd.xlane.f32.xlu0 %v495
    %v549 = vpop.xlane.xlu0 %548
    %550 = vadd.xlane.f32.xlu0 %v496
    %v551 = vpop.xlane.xlu0 %550
    %552 = vadd.xlane.f32.xlu0 %v497
    %v553 = vpop.xlane.xlu0 %552
    %554 = vadd.xlane.f32.xlu0 %v498
    %v555 = vpop.xlane.xlu0 %554
    %556 = vadd.xlane.f32.xlu0 %v499
    %v557 = vpop.xlane.xlu0 %556
    %558 = vadd.xlane.f32.xlu0 %v500
    %v559 = vpop.xlane.xlu0 %558
    %560 = vadd.xlane.f32.xlu0 %v501
    %v561 = vpop.xlane.xlu0 %560
    %562 = vadd.xlane.f32.xlu0 %v502
    %v563 = vpop.xlane.xlu0 %562
    %564 = vadd.xlane.f32.xlu0 %v503
    %v565 = vpop.xlane.xlu0 %564
    %566 = vadd.xlane.f32.xlu0 %v504
    %v567 = vpop.xlane.xlu0 %566
    %568 = vadd.xlane.f32.xlu0 %v505
    %v569 = vpop.xlane.xlu0 %568
    %v572 = vlaneseq
    %v573 = vshrl.u32 %v572, 7
    %v574 = vsub.s32 0, %v573
    %v575 = vrot.slane %v68, %v574
    %577 = vbcast.lane.b32.xlu0 %v575, 256
    %v578 = vpop.permute.xlu0 %577
    %s580 = sor.u32 256, 8
    %581 = vbcast.lane.b32.xlu0 %v575, %s580
    %v582 = vpop.permute.xlu0 %581
    %v583 = vlaneseq
    %v584 = vshrl.u32 %v583, 7
    %v585 = vsub.s32 1, %v584
    %v586 = vrot.slane %v68, %v585
    %588 = vbcast.lane.b32.xlu0 %v586, 256
    %v589 = vpop.permute.xlu0 %588
    %s591 = sor.u32 256, 8
    %592 = vbcast.lane.b32.xlu0 %v586, %s591
    %v593 = vpop.permute.xlu0 %592
    %v594 = vlaneseq
    %v595 = vshrl.u32 %v594, 7
    %v596 = vsub.s32 2, %v595
    %v597 = vrot.slane %v68, %v596
    %599 = vbcast.lane.b32.xlu0 %v597, 256
    %v600 = vpop.permute.xlu0 %599
    %s602 = sor.u32 256, 8
    %603 = vbcast.lane.b32.xlu0 %v597, %s602
    %v604 = vpop.permute.xlu0 %603
    %v605 = vlaneseq
    %v606 = vshrl.u32 %v605, 7
    %v607 = vsub.s32 3, %v606
    %v608 = vrot.slane %v68, %v607
    %610 = vbcast.lane.b32.xlu0 %v608, 256
    %v611 = vpop.permute.xlu0 %610
    %s613 = sor.u32 256, 8
    %614 = vbcast.lane.b32.xlu0 %v608, %s613
    %v615 = vpop.permute.xlu0 %614
    %v616 = vlaneseq
    %v617 = vshrl.u32 %v616, 7
    %v618 = vsub.s32 4, %v617
    %v619 = vrot.slane %v68, %v618
    %621 = vbcast.lane.b32.xlu0 %v619, 256
    %v622 = vpop.permute.xlu0 %621
    %s624 = sor.u32 256, 8
    %625 = vbcast.lane.b32.xlu0 %v619, %s624
    %v626 = vpop.permute.xlu0 %625
    %v627 = vlaneseq
    %v628 = vshrl.u32 %v627, 7
    %v629 = vsub.s32 5, %v628
    %v630 = vrot.slane %v68, %v629
    %632 = vbcast.lane.b32.xlu0 %v630, 256
    %v633 = vpop.permute.xlu0 %632
    %s635 = sor.u32 256, 8
    %636 = vbcast.lane.b32.xlu0 %v630, %s635
    %v637 = vpop.permute.xlu0 %636
    %v638 = vlaneseq
    %v639 = vshrl.u32 %v638, 7
    %v640 = vsub.s32 6, %v639
    %v641 = vrot.slane %v68, %v640
    %643 = vbcast.lane.b32.xlu0 %v641, 256
    %v644 = vpop.permute.xlu0 %643
    %s646 = sor.u32 256, 8
    %647 = vbcast.lane.b32.xlu0 %v641, %s646
    %v648 = vpop.permute.xlu0 %647
    %v649 = vlaneseq
    %v650 = vshrl.u32 %v649, 7
    %v651 = vsub.s32 7, %v650
    %v652 = vrot.slane %v68, %v651
    %654 = vbcast.lane.b32.xlu0 %v652, 256
    %v655 = vpop.permute.xlu0 %654
    %s657 = sor.u32 256, 8
    %658 = vbcast.lane.b32.xlu0 %v652, %s657
    %v659 = vpop.permute.xlu0 %658
    %v660 = vlaneseq
    %v661 = vshrl.u32 %v660, 7
    %v662 = vsub.s32 0, %v661
    %v663 = vrot.slane %v69, %v662
    %665 = vbcast.lane.b32.xlu0 %v663, 256
    %v666 = vpop.permute.xlu0 %665
    %s668 = sor.u32 256, 8
    %669 = vbcast.lane.b32.xlu0 %v663, %s668
    %v670 = vpop.permute.xlu0 %669
    %v671 = vlaneseq
    %v672 = vshrl.u32 %v671, 7
    %v673 = vsub.s32 1, %v672
    %v674 = vrot.slane %v69, %v673
    %676 = vbcast.lane.b32.xlu0 %v674, 256
    %v677 = vpop.permute.xlu0 %676
    %s679 = sor.u32 256, 8
    %680 = vbcast.lane.b32.xlu0 %v674, %s679
    %v681 = vpop.permute.xlu0 %680
    %v682 = vlaneseq
    %v683 = vshrl.u32 %v682, 7
    %v684 = vsub.s32 2, %v683
    %v685 = vrot.slane %v69, %v684
    %687 = vbcast.lane.b32.xlu0 %v685, 256
    %v688 = vpop.permute.xlu0 %687
    %s690 = sor.u32 256, 8
    %691 = vbcast.lane.b32.xlu0 %v685, %s690
    %v692 = vpop.permute.xlu0 %691
    %v693 = vlaneseq
    %v694 = vshrl.u32 %v693, 7
    %v695 = vsub.s32 3, %v694
    %v696 = vrot.slane %v69, %v695
    %698 = vbcast.lane.b32.xlu0 %v696, 256
    %v699 = vpop.permute.xlu0 %698
    %s701 = sor.u32 256, 8
    %702 = vbcast.lane.b32.xlu0 %v696, %s701
    %v703 = vpop.permute.xlu0 %702
    %v704 = vlaneseq
    %v705 = vshrl.u32 %v704, 7
    %v706 = vsub.s32 4, %v705
    %v707 = vrot.slane %v69, %v706
    %709 = vbcast.lane.b32.xlu0 %v707, 256
    %v710 = vpop.permute.xlu0 %709
    %s712 = sor.u32 256, 8
    %713 = vbcast.lane.b32.xlu0 %v707, %s712
    %v714 = vpop.permute.xlu0 %713
    %v715 = vlaneseq
    %v716 = vshrl.u32 %v715, 7
    %v717 = vsub.s32 5, %v716
    %v718 = vrot.slane %v69, %v717
    %720 = vbcast.lane.b32.xlu0 %v718, 256
    %v721 = vpop.permute.xlu0 %720
    %s723 = sor.u32 256, 8
    %724 = vbcast.lane.b32.xlu0 %v718, %s723
    %v725 = vpop.permute.xlu0 %724
    %v726 = vlaneseq
    %v727 = vshrl.u32 %v726, 7
    %v728 = vsub.s32 6, %v727
    %v729 = vrot.slane %v69, %v728
    %731 = vbcast.lane.b32.xlu0 %v729, 256
    %v732 = vpop.permute.xlu0 %731
    %s734 = sor.u32 256, 8
    %735 = vbcast.lane.b32.xlu0 %v729, %s734
    %v736 = vpop.permute.xlu0 %735
    %v737 = vlaneseq
    %v738 = vshrl.u32 %v737, 7
    %v739 = vsub.s32 7, %v738
    %v740 = vrot.slane %v69, %v739
    %742 = vbcast.lane.b32.xlu0 %v740, 256
    %v743 = vpop.permute.xlu0 %742
    %s745 = sor.u32 256, 8
    %746 = vbcast.lane.b32.xlu0 %v740, %s745
    %v747 = vpop.permute.xlu0 %746
    %v780 = vadd.f32 %v507, %v578
    %v781 = vadd.f32 %v509, %v582
    %v782 = vadd.f32 %v511, %v589
    %v783 = vadd.f32 %v513, %v593
    %v784 = vadd.f32 %v515, %v600
    %v785 = vadd.f32 %v517, %v604
    %v786 = vadd.f32 %v519, %v611
    %v787 = vadd.f32 %v521, %v615
    %v788 = vadd.f32 %v523, %v622
    %v789 = vadd.f32 %v525, %v626
    %v790 = vadd.f32 %v527, %v633
    %v791 = vadd.f32 %v529, %v637
    %v792 = vadd.f32 %v531, %v644
    %v793 = vadd.f32 %v533, %v648
    %v794 = vadd.f32 %v535, %v655
    %v795 = vadd.f32 %v537, %v659
    %v796 = vadd.f32 %v539, %v666
    %v797 = vadd.f32 %v541, %v670
    %v798 = vadd.f32 %v543, %v677
    %v799 = vadd.f32 %v545, %v681
    %v800 = vadd.f32 %v547, %v688
    %v801 = vadd.f32 %v549, %v692
    %v802 = vadd.f32 %v551, %v699
    %v803 = vadd.f32 %v553, %v703
    %v804 = vadd.f32 %v555, %v710
    %v805 = vadd.f32 %v557, %v714
    %v806 = vadd.f32 %v559, %v721
    %v807 = vadd.f32 %v561, %v725
    %v808 = vadd.f32 %v563, %v732
    %v809 = vadd.f32 %v565, %v736
    %v810 = vadd.f32 %v567, %v743
    %v811 = vadd.f32 %v569, %v747
    %844 = vset.pattern.permute.xlu0 0
    %845 = vperm.xlu0 %844, %v780
    %v846 = vpop.permute.xlu0 %845
    %847 = vset.pattern.permute.xlu0 0
    %848 = vperm.xlu0 %847, %v781
    %v849 = vpop.permute.xlu0 %848
    %850 = vset.pattern.permute.xlu0 0
    %851 = vperm.xlu0 %850, %v782
    %v852 = vpop.permute.xlu0 %851
    %853 = vset.pattern.permute.xlu0 0
    %854 = vperm.xlu0 %853, %v783
    %v855 = vpop.permute.xlu0 %854
    %856 = vset.pattern.permute.xlu0 0
    %857 = vperm.xlu0 %856, %v784
    %v858 = vpop.permute.xlu0 %857
    %859 = vset.pattern.permute.xlu0 0
    %860 = vperm.xlu0 %859, %v785
    %v861 = vpop.permute.xlu0 %860
    %862 = vset.pattern.permute.xlu0 0
    %863 = vperm.xlu0 %862, %v786
    %v864 = vpop.permute.xlu0 %863
    %865 = vset.pattern.permute.xlu0 0
    %866 = vperm.xlu0 %865, %v787
    %v867 = vpop.permute.xlu0 %866
    %868 = vset.pattern.permute.xlu0 0
    %869 = vperm.xlu0 %868, %v788
    %v870 = vpop.permute.xlu0 %869
    %871 = vset.pattern.permute.xlu0 0
    %872 = vperm.xlu0 %871, %v789
    %v873 = vpop.permute.xlu0 %872
    %874 = vset.pattern.permute.xlu0 0
    %875 = vperm.xlu0 %874, %v790
    %v876 = vpop.permute.xlu0 %875
    %877 = vset.pattern.permute.xlu0 0
    %878 = vperm.xlu0 %877, %v791
    %v879 = vpop.permute.xlu0 %878
    %880 = vset.pattern.permute.xlu0 0
    %881 = vperm.xlu0 %880, %v792
    %v882 = vpop.permute.xlu0 %881
    %883 = vset.pattern.permute.xlu0 0
    %884 = vperm.xlu0 %883, %v793
    %v885 = vpop.permute.xlu0 %884
    %886 = vset.pattern.permute.xlu0 0
    %887 = vperm.xlu0 %886, %v794
    %v888 = vpop.permute.xlu0 %887
    %889 = vset.pattern.permute.xlu0 0
    %890 = vperm.xlu0 %889, %v795
    %v891 = vpop.permute.xlu0 %890
    %892 = vset.pattern.permute.xlu0 0
    %893 = vperm.xlu0 %892, %v796
    %v894 = vpop.permute.xlu0 %893
    %895 = vset.pattern.permute.xlu0 0
    %896 = vperm.xlu0 %895, %v797
    %v897 = vpop.permute.xlu0 %896
    %898 = vset.pattern.permute.xlu0 0
    %899 = vperm.xlu0 %898, %v798
    %v900 = vpop.permute.xlu0 %899
    %901 = vset.pattern.permute.xlu0 0
    %902 = vperm.xlu0 %901, %v799
    %v903 = vpop.permute.xlu0 %902
    %904 = vset.pattern.permute.xlu0 0
    %905 = vperm.xlu0 %904, %v800
    %v906 = vpop.permute.xlu0 %905
    %907 = vset.pattern.permute.xlu0 0
    %908 = vperm.xlu0 %907, %v801
    %v909 = vpop.permute.xlu0 %908
    %910 = vset.pattern.permute.xlu0 0
    %911 = vperm.xlu0 %910, %v802
    %v912 = vpop.permute.xlu0 %911
    %913 = vset.pattern.permute.xlu0 0
    %914 = vperm.xlu0 %913, %v803
    %v915 = vpop.permute.xlu0 %914
    %916 = vset.pattern.permute.xlu0 0
    %917 = vperm.xlu0 %916, %v804
    %v918 = vpop.permute.xlu0 %917
    %919 = vset.pattern.permute.xlu0 0
    %920 = vperm.xlu0 %919, %v805
    %v921 = vpop.permute.xlu0 %920
    %922 = vset.pattern.permute.xlu0 0
    %923 = vperm.xlu0 %922, %v806
    %v924 = vpop.permute.xlu0 %923
    %925 = vset.pattern.permute.xlu0 0
    %926 = vperm.xlu0 %925, %v807
    %v927 = vpop.permute.xlu0 %926
    %928 = vset.pattern.permute.xlu0 0
    %929 = vperm.xlu0 %928, %v808
    %v930 = vpop.permute.xlu0 %929
    %931 = vset.pattern.permute.xlu0 0
    %932 = vperm.xlu0 %931, %v809
    %v933 = vpop.permute.xlu0 %932
    %934 = vset.pattern.permute.xlu0 0
    %935 = vperm.xlu0 %934, %v810
    %v936 = vpop.permute.xlu0 %935
    %937 = vset.pattern.permute.xlu0 0
    %938 = vperm.xlu0 %937, %v811
    %v939 = vpop.permute.xlu0 %938
    %v940 = vlaneseq
    %v941 = vand.u32 %v940, 127
    %v942 = vlaneseq
    %v943 = vshrl.u32 %v942, 7
    %v944 = vsub.s32 %v941, %v943
    %v945 = vrot.slane %v846, %v944
    %v946 = vadd.s32 %v941, 4294967288
    %v947 = vlaneseq
    %v948 = vshrl.u32 %v947, 7
    %v949 = vsub.s32 %v946, %v948
    %v950 = vrot.slane %v849, %v949
    %vm951 = vcmask 130112
    %v952 = vsel %vm951, %v950, %v945
    %v953 = vlaneseq
    %v954 = vshrl.u32 %v953, 7
    %v955 = vsub.s32 %v941, %v954
    %v956 = vrot.slane %v852, %v955
    %v957 = vlaneseq
    %v958 = vshrl.u32 %v957, 7
    %v959 = vsub.s32 %v946, %v958
    %v960 = vrot.slane %v855, %v959
    %v961 = vsel %vm951, %v960, %v956
    %v962 = vlaneseq
    %v963 = vshrl.u32 %v962, 7
    %v964 = vsub.s32 %v941, %v963
    %v965 = vrot.slane %v858, %v964
    %v966 = vlaneseq
    %v967 = vshrl.u32 %v966, 7
    %v968 = vsub.s32 %v946, %v967
    %v969 = vrot.slane %v861, %v968
    %v970 = vsel %vm951, %v969, %v965
    %v971 = vlaneseq
    %v972 = vshrl.u32 %v971, 7
    %v973 = vsub.s32 %v941, %v972
    %v974 = vrot.slane %v864, %v973
    %v975 = vlaneseq
    %v976 = vshrl.u32 %v975, 7
    %v977 = vsub.s32 %v946, %v976
    %v978 = vrot.slane %v867, %v977
    %v979 = vsel %vm951, %v978, %v974
    %v980 = vlaneseq
    %v981 = vshrl.u32 %v980, 7
    %v982 = vsub.s32 %v941, %v981
    %v983 = vrot.slane %v870, %v982
    %v984 = vlaneseq
    %v985 = vshrl.u32 %v984, 7
    %v986 = vsub.s32 %v946, %v985
    %v987 = vrot.slane %v873, %v986
    %v988 = vsel %vm951, %v987, %v983
    %v989 = vlaneseq
    %v990 = vshrl.u32 %v989, 7
    %v991 = vsub.s32 %v941, %v990
    %v992 = vrot.slane %v876, %v991
    %v993 = vlaneseq
    %v994 = vshrl.u32 %v993, 7
    %v995 = vsub.s32 %v946, %v994
    %v996 = vrot.slane %v879, %v995
    %v997 = vsel %vm951, %v996, %v992
    %v998 = vlaneseq
    %v999 = vshrl.u32 %v998, 7
    %v1000 = vsub.s32 %v941, %v999
    %v1001 = vrot.slane %v882, %v1000
    %v1002 = vlaneseq
    %v1003 = vshrl.u32 %v1002, 7
    %v1004 = vsub.s32 %v946, %v1003
    %v1005 = vrot.slane %v885, %v1004
    %v1006 = vsel %vm951, %v1005, %v1001
    %v1007 = vlaneseq
    %v1008 = vshrl.u32 %v1007, 7
    %v1009 = vsub.s32 %v941, %v1008
    %v1010 = vrot.slane %v888, %v1009
    %v1011 = vlaneseq
    %v1012 = vshrl.u32 %v1011, 7
    %v1013 = vsub.s32 %v946, %v1012
    %v1014 = vrot.slane %v891, %v1013
    %v1015 = vsel %vm951, %v1014, %v1010
    %v1016 = vlaneseq
    %v1017 = vshrl.u32 %v1016, 7
    %v1018 = vsub.s32 %v941, %v1017
    %v1019 = vrot.slane %v894, %v1018
    %v1020 = vlaneseq
    %v1021 = vshrl.u32 %v1020, 7
    %v1022 = vsub.s32 %v946, %v1021
    %v1023 = vrot.slane %v897, %v1022
    %v1024 = vsel %vm951, %v1023, %v1019
    %v1025 = vlaneseq
    %v1026 = vshrl.u32 %v1025, 7
    %v1027 = vsub.s32 %v941, %v1026
    %v1028 = vrot.slane %v900, %v1027
    %v1029 = vlaneseq
    %v1030 = vshrl.u32 %v1029, 7
    %v1031 = vsub.s32 %v946, %v1030
    %v1032 = vrot.slane %v903, %v1031
    %v1033 = vsel %vm951, %v1032, %v1028
    %v1034 = vlaneseq
    %v1035 = vshrl.u32 %v1034, 7
    %v1036 = vsub.s32 %v941, %v1035
    %v1037 = vrot.slane %v906, %v1036
    %v1038 = vlaneseq
    %v1039 = vshrl.u32 %v1038, 7
    %v1040 = vsub.s32 %v946, %v1039
    %v1041 = vrot.slane %v909, %v1040
    %v1042 = vsel %vm951, %v1041, %v1037
    %v1043 = vlaneseq
    %v1044 = vshrl.u32 %v1043, 7
    %v1045 = vsub.s32 %v941, %v1044
    %v1046 = vrot.slane %v912, %v1045
    %v1047 = vlaneseq
    %v1048 = vshrl.u32 %v1047, 7
    %v1049 = vsub.s32 %v946, %v1048
    %v1050 = vrot.slane %v915, %v1049
    %v1051 = vsel %vm951, %v1050, %v1046
    %v1052 = vlaneseq
    %v1053 = vshrl.u32 %v1052, 7
    %v1054 = vsub.s32 %v941, %v1053
    %v1055 = vrot.slane %v918, %v1054
    %v1056 = vlaneseq
    %v1057 = vshrl.u32 %v1056, 7
    %v1058 = vsub.s32 %v946, %v1057
    %v1059 = vrot.slane %v921, %v1058
    %v1060 = vsel %vm951, %v1059, %v1055
    %v1061 = vlaneseq
    %v1062 = vshrl.u32 %v1061, 7
    %v1063 = vsub.s32 %v941, %v1062
    %v1064 = vrot.slane %v924, %v1063
    %v1065 = vlaneseq
    %v1066 = vshrl.u32 %v1065, 7
    %v1067 = vsub.s32 %v946, %v1066
    %v1068 = vrot.slane %v927, %v1067
    %v1069 = vsel %vm951, %v1068, %v1064
    %v1070 = vlaneseq
    %v1071 = vshrl.u32 %v1070, 7
    %v1072 = vsub.s32 %v941, %v1071
    %v1073 = vrot.slane %v930, %v1072
    %v1074 = vlaneseq
    %v1075 = vshrl.u32 %v1074, 7
    %v1076 = vsub.s32 %v946, %v1075
    %v1077 = vrot.slane %v933, %v1076
    %v1078 = vsel %vm951, %v1077, %v1073
    %v1079 = vlaneseq
    %v1080 = vshrl.u32 %v1079, 7
    %v1081 = vsub.s32 %v941, %v1080
    %v1082 = vrot.slane %v936, %v1081
    %v1083 = vlaneseq
    %v1084 = vshrl.u32 %v1083, 7
    %v1085 = vsub.s32 %v946, %v1084
    %v1086 = vrot.slane %v939, %v1085
    %v1087 = vsel %vm951, %v1086, %v1082
    %vm1088 = vcmask 1041409
    %v1089 = vsel %vm1088, %v961, %v952
    %vm1090 = vcmask 1042434
    %v1091 = vsel %vm1090, %v970, %v1089
    %vm1092 = vcmask 1043459
    %v1093 = vsel %vm1092, %v979, %v1091
    %vm1094 = vcmask 1044484
    %v1095 = vsel %vm1094, %v988, %v1093
    %vm1096 = vcmask 1045509
    %v1097 = vsel %vm1096, %v997, %v1095
    %vm1098 = vcmask 1046534
    %v1099 = vsel %vm1098, %v1006, %v1097
    %vm1100 = vcmask 1047559
    %v1101 = vsel %vm1100, %v1015, %v1099
    %v1102 = vsel %vm1088, %v1033, %v1024
    %v1103 = vsel %vm1090, %v1042, %v1102
    %v1104 = vsel %vm1092, %v1051, %v1103
    %v1105 = vsel %vm1094, %v1060, %v1104
    %v1106 = vsel %vm1096, %v1069, %v1105
    %v1107 = vsel %vm1098, %v1078, %v1106
    %v1108 = vsel %vm1100, %v1087, %v1107
    %vm1111 = vcmask 130048
    %v1112 = vsel %vm1111, %v1101, -inf
    %1113 = vmax.xlane.f32.xlu0 %v1112
    %v1114 = vpop.xlane.xlu0 %1113
    %v1115 = vsel %vm1111, %v1108, -inf
    %1116 = vmax.xlane.f32.xlu0 %v1115
    %v1117 = vpop.xlane.xlu0 %1116
    %v1120 = vlaneseq
    %v1121 = vshrl.u32 %v1120, 7
    %v1122 = vsub.s32 0, %v1121
    %v1123 = vrot.slane %v1114, %v1122
    %v1124 = vlaneseq
    %v1125 = vshrl.u32 %v1124, 7
    %v1126 = vsub.s32 1, %v1125
    %v1127 = vrot.slane %v1114, %v1126
    %v1128 = vlaneseq
    %v1129 = vshrl.u32 %v1128, 7
    %v1130 = vsub.s32 2, %v1129
    %v1131 = vrot.slane %v1114, %v1130
    %v1132 = vlaneseq
    %v1133 = vshrl.u32 %v1132, 7
    %v1134 = vsub.s32 3, %v1133
    %v1135 = vrot.slane %v1114, %v1134
    %v1136 = vlaneseq
    %v1137 = vshrl.u32 %v1136, 7
    %v1138 = vsub.s32 4, %v1137
    %v1139 = vrot.slane %v1114, %v1138
    %v1140 = vlaneseq
    %v1141 = vshrl.u32 %v1140, 7
    %v1142 = vsub.s32 5, %v1141
    %v1143 = vrot.slane %v1114, %v1142
    %v1144 = vlaneseq
    %v1145 = vshrl.u32 %v1144, 7
    %v1146 = vsub.s32 6, %v1145
    %v1147 = vrot.slane %v1114, %v1146
    %v1148 = vlaneseq
    %v1149 = vshrl.u32 %v1148, 7
    %v1150 = vsub.s32 7, %v1149
    %v1151 = vrot.slane %v1114, %v1150
    %v1152 = vlaneseq
    %v1153 = vshrl.u32 %v1152, 7
    %v1154 = vsub.s32 0, %v1153
    %v1155 = vrot.slane %v1117, %v1154
    %v1156 = vlaneseq
    %v1157 = vshrl.u32 %v1156, 7
    %v1158 = vsub.s32 1, %v1157
    %v1159 = vrot.slane %v1117, %v1158
    %v1160 = vlaneseq
    %v1161 = vshrl.u32 %v1160, 7
    %v1162 = vsub.s32 2, %v1161
    %v1163 = vrot.slane %v1117, %v1162
    %v1164 = vlaneseq
    %v1165 = vshrl.u32 %v1164, 7
    %v1166 = vsub.s32 3, %v1165
    %v1167 = vrot.slane %v1117, %v1166
    %v1168 = vlaneseq
    %v1169 = vshrl.u32 %v1168, 7
    %v1170 = vsub.s32 4, %v1169
    %v1171 = vrot.slane %v1117, %v1170
    %v1172 = vlaneseq
    %v1173 = vshrl.u32 %v1172, 7
    %v1174 = vsub.s32 5, %v1173
    %v1175 = vrot.slane %v1117, %v1174
    %v1176 = vlaneseq
    %v1177 = vshrl.u32 %v1176, 7
    %v1178 = vsub.s32 6, %v1177
    %v1179 = vrot.slane %v1117, %v1178
    %v1180 = vlaneseq
    %v1181 = vshrl.u32 %v1180, 7
    %v1182 = vsub.s32 7, %v1181
    %v1183 = vrot.slane %v1117, %v1182
    %v1200 = vsub.f32 %v780, %v1123
    %v1201 = vsub.f32 %v781, %v1123
    %v1202 = vsub.f32 %v782, %v1127
    %v1203 = vsub.f32 %v783, %v1127
    %v1204 = vsub.f32 %v784, %v1131
    %v1205 = vsub.f32 %v785, %v1131
    %v1206 = vsub.f32 %v786, %v1135
    %v1207 = vsub.f32 %v787, %v1135
    %v1208 = vsub.f32 %v788, %v1139
    %v1209 = vsub.f32 %v789, %v1139
    %v1210 = vsub.f32 %v790, %v1143
    %v1211 = vsub.f32 %v791, %v1143
    %v1212 = vsub.f32 %v792, %v1147
    %v1213 = vsub.f32 %v793, %v1147
    %v1214 = vsub.f32 %v794, %v1151
    %v1215 = vsub.f32 %v795, %v1151
    %v1216 = vsub.f32 %v796, %v1155
    %v1217 = vsub.f32 %v797, %v1155
    %v1218 = vsub.f32 %v798, %v1159
    %v1219 = vsub.f32 %v799, %v1159
    %v1220 = vsub.f32 %v800, %v1163
    %v1221 = vsub.f32 %v801, %v1163
    %v1222 = vsub.f32 %v802, %v1167
    %v1223 = vsub.f32 %v803, %v1167
    %v1224 = vsub.f32 %v804, %v1171
    %v1225 = vsub.f32 %v805, %v1171
    %v1226 = vsub.f32 %v806, %v1175
    %v1227 = vsub.f32 %v807, %v1175
    %v1228 = vsub.f32 %v808, %v1179
    %v1229 = vsub.f32 %v809, %v1179
    %v1230 = vsub.f32 %v810, %v1183
    %v1231 = vsub.f32 %v811, %v1183
    %v1232 = vmul.f32 %v1200, 1.442695
    %v1233 = vpow.pop %v1232
    %v1234 = vmul.f32 %v1201, 1.442695
    %v1235 = vpow.pop %v1234
    %v1236 = vmul.f32 %v1202, 1.442695
    %v1237 = vpow.pop %v1236
    %v1238 = vmul.f32 %v1203, 1.442695
    %v1239 = vpow.pop %v1238
    %v1240 = vmul.f32 %v1204, 1.442695
    %v1241 = vpow.pop %v1240
    %v1242 = vmul.f32 %v1205, 1.442695
    %v1243 = vpow.pop %v1242
    %v1244 = vmul.f32 %v1206, 1.442695
    %v1245 = vpow.pop %v1244
    %v1246 = vmul.f32 %v1207, 1.442695
    %v1247 = vpow.pop %v1246
    %v1248 = vmul.f32 %v1208, 1.442695
    %v1249 = vpow.pop %v1248
    %v1250 = vmul.f32 %v1209, 1.442695
    %v1251 = vpow.pop %v1250
    %v1252 = vmul.f32 %v1210, 1.442695
    %v1253 = vpow.pop %v1252
    %v1254 = vmul.f32 %v1211, 1.442695
    %v1255 = vpow.pop %v1254
    %v1256 = vmul.f32 %v1212, 1.442695
    %v1257 = vpow.pop %v1256
    %v1258 = vmul.f32 %v1213, 1.442695
    %v1259 = vpow.pop %v1258
    %v1260 = vmul.f32 %v1214, 1.442695
    %v1261 = vpow.pop %v1260
    %v1262 = vmul.f32 %v1215, 1.442695
    %v1263 = vpow.pop %v1262
    %v1264 = vmul.f32 %v1216, 1.442695
    %v1265 = vpow.pop %v1264
    %v1266 = vmul.f32 %v1217, 1.442695
    %v1267 = vpow.pop %v1266
    %v1268 = vmul.f32 %v1218, 1.442695
    %v1269 = vpow.pop %v1268
    %v1270 = vmul.f32 %v1219, 1.442695
    %v1271 = vpow.pop %v1270
    %v1272 = vmul.f32 %v1220, 1.442695
    %v1273 = vpow.pop %v1272
    %v1274 = vmul.f32 %v1221, 1.442695
    %v1275 = vpow.pop %v1274
    %v1276 = vmul.f32 %v1222, 1.442695
    %v1277 = vpow.pop %v1276
    %v1278 = vmul.f32 %v1223, 1.442695
    %v1279 = vpow.pop %v1278
    %v1280 = vmul.f32 %v1224, 1.442695
    %v1281 = vpow.pop %v1280
    %v1282 = vmul.f32 %v1225, 1.442695
    %v1283 = vpow.pop %v1282
    %v1284 = vmul.f32 %v1226, 1.442695
    %v1285 = vpow.pop %v1284
    %v1286 = vmul.f32 %v1227, 1.442695
    %v1287 = vpow.pop %v1286
    %v1288 = vmul.f32 %v1228, 1.442695
    %v1289 = vpow.pop %v1288
    %v1290 = vmul.f32 %v1229, 1.442695
    %v1291 = vpow.pop %v1290
    %v1292 = vmul.f32 %v1230, 1.442695
    %v1293 = vpow.pop %v1292
    %v1294 = vmul.f32 %v1231, 1.442695
    %v1295 = vpow.pop %v1294
    %1328 = vset.pattern.permute.xlu0 0
    %1329 = vperm.xlu0 %1328, %v1233
    %v1330 = vpop.permute.xlu0 %1329
    %1331 = vset.pattern.permute.xlu0 0
    %1332 = vperm.xlu0 %1331, %v1235
    %v1333 = vpop.permute.xlu0 %1332
    %1334 = vset.pattern.permute.xlu0 0
    %1335 = vperm.xlu0 %1334, %v1237
    %v1336 = vpop.permute.xlu0 %1335
    %1337 = vset.pattern.permute.xlu0 0
    %1338 = vperm.xlu0 %1337, %v1239
    %v1339 = vpop.permute.xlu0 %1338
    %1340 = vset.pattern.permute.xlu0 0
    %1341 = vperm.xlu0 %1340, %v1241
    %v1342 = vpop.permute.xlu0 %1341
    %1343 = vset.pattern.permute.xlu0 0
    %1344 = vperm.xlu0 %1343, %v1243
    %v1345 = vpop.permute.xlu0 %1344
    %1346 = vset.pattern.permute.xlu0 0
    %1347 = vperm.xlu0 %1346, %v1245
    %v1348 = vpop.permute.xlu0 %1347
    %1349 = vset.pattern.permute.xlu0 0
    %1350 = vperm.xlu0 %1349, %v1247
    %v1351 = vpop.permute.xlu0 %1350
    %1352 = vset.pattern.permute.xlu0 0
    %1353 = vperm.xlu0 %1352, %v1249
    %v1354 = vpop.permute.xlu0 %1353
    %1355 = vset.pattern.permute.xlu0 0
    %1356 = vperm.xlu0 %1355, %v1251
    %v1357 = vpop.permute.xlu0 %1356
    %1358 = vset.pattern.permute.xlu0 0
    %1359 = vperm.xlu0 %1358, %v1253
    %v1360 = vpop.permute.xlu0 %1359
    %1361 = vset.pattern.permute.xlu0 0
    %1362 = vperm.xlu0 %1361, %v1255
    %v1363 = vpop.permute.xlu0 %1362
    %1364 = vset.pattern.permute.xlu0 0
    %1365 = vperm.xlu0 %1364, %v1257
    %v1366 = vpop.permute.xlu0 %1365
    %1367 = vset.pattern.permute.xlu0 0
    %1368 = vperm.xlu0 %1367, %v1259
    %v1369 = vpop.permute.xlu0 %1368
    %1370 = vset.pattern.permute.xlu0 0
    %1371 = vperm.xlu0 %1370, %v1261
    %v1372 = vpop.permute.xlu0 %1371
    %1373 = vset.pattern.permute.xlu0 0
    %1374 = vperm.xlu0 %1373, %v1263
    %v1375 = vpop.permute.xlu0 %1374
    %1376 = vset.pattern.permute.xlu0 0
    %1377 = vperm.xlu0 %1376, %v1265
    %v1378 = vpop.permute.xlu0 %1377
    %1379 = vset.pattern.permute.xlu0 0
    %1380 = vperm.xlu0 %1379, %v1267
    %v1381 = vpop.permute.xlu0 %1380
    %1382 = vset.pattern.permute.xlu0 0
    %1383 = vperm.xlu0 %1382, %v1269
    %v1384 = vpop.permute.xlu0 %1383
    %1385 = vset.pattern.permute.xlu0 0
    %1386 = vperm.xlu0 %1385, %v1271
    %v1387 = vpop.permute.xlu0 %1386
    %1388 = vset.pattern.permute.xlu0 0
    %1389 = vperm.xlu0 %1388, %v1273
    %v1390 = vpop.permute.xlu0 %1389
    %1391 = vset.pattern.permute.xlu0 0
    %1392 = vperm.xlu0 %1391, %v1275
    %v1393 = vpop.permute.xlu0 %1392
    %1394 = vset.pattern.permute.xlu0 0
    %1395 = vperm.xlu0 %1394, %v1277
    %v1396 = vpop.permute.xlu0 %1395
    %1397 = vset.pattern.permute.xlu0 0
    %1398 = vperm.xlu0 %1397, %v1279
    %v1399 = vpop.permute.xlu0 %1398
    %1400 = vset.pattern.permute.xlu0 0
    %1401 = vperm.xlu0 %1400, %v1281
    %v1402 = vpop.permute.xlu0 %1401
    %1403 = vset.pattern.permute.xlu0 0
    %1404 = vperm.xlu0 %1403, %v1283
    %v1405 = vpop.permute.xlu0 %1404
    %1406 = vset.pattern.permute.xlu0 0
    %1407 = vperm.xlu0 %1406, %v1285
    %v1408 = vpop.permute.xlu0 %1407
    %1409 = vset.pattern.permute.xlu0 0
    %1410 = vperm.xlu0 %1409, %v1287
    %v1411 = vpop.permute.xlu0 %1410
    %1412 = vset.pattern.permute.xlu0 0
    %1413 = vperm.xlu0 %1412, %v1289
    %v1414 = vpop.permute.xlu0 %1413
    %1415 = vset.pattern.permute.xlu0 0
    %1416 = vperm.xlu0 %1415, %v1291
    %v1417 = vpop.permute.xlu0 %1416
    %1418 = vset.pattern.permute.xlu0 0
    %1419 = vperm.xlu0 %1418, %v1293
    %v1420 = vpop.permute.xlu0 %1419
    %1421 = vset.pattern.permute.xlu0 0
    %1422 = vperm.xlu0 %1421, %v1295
    %v1423 = vpop.permute.xlu0 %1422
    %v1424 = vlaneseq
    %v1425 = vshrl.u32 %v1424, 7
    %v1426 = vsub.s32 %v941, %v1425
    %v1427 = vrot.slane %v1330, %v1426
    %v1428 = vlaneseq
    %v1429 = vshrl.u32 %v1428, 7
    %v1430 = vsub.s32 %v946, %v1429
    %v1431 = vrot.slane %v1333, %v1430
    %v1432 = vsel %vm951, %v1431, %v1427
    %v1433 = vlaneseq
    %v1434 = vshrl.u32 %v1433, 7
    %v1435 = vsub.s32 %v941, %v1434
    %v1436 = vrot.slane %v1336, %v1435
    %v1437 = vlaneseq
    %v1438 = vshrl.u32 %v1437, 7
    %v1439 = vsub.s32 %v946, %v1438
    %v1440 = vrot.slane %v1339, %v1439
    %v1441 = vsel %vm951, %v1440, %v1436
    %v1442 = vlaneseq
    %v1443 = vshrl.u32 %v1442, 7
    %v1444 = vsub.s32 %v941, %v1443
    %v1445 = vrot.slane %v1342, %v1444
    %v1446 = vlaneseq
    %v1447 = vshrl.u32 %v1446, 7
    %v1448 = vsub.s32 %v946, %v1447
    %v1449 = vrot.slane %v1345, %v1448
    %v1450 = vsel %vm951, %v1449, %v1445
    %v1451 = vlaneseq
    %v1452 = vshrl.u32 %v1451, 7
    %v1453 = vsub.s32 %v941, %v1452
    %v1454 = vrot.slane %v1348, %v1453
    %v1455 = vlaneseq
    %v1456 = vshrl.u32 %v1455, 7
    %v1457 = vsub.s32 %v946, %v1456
    %v1458 = vrot.slane %v1351, %v1457
    %v1459 = vsel %vm951, %v1458, %v1454
    %v1460 = vlaneseq
    %v1461 = vshrl.u32 %v1460, 7
    %v1462 = vsub.s32 %v941, %v1461
    %v1463 = vrot.slane %v1354, %v1462
    %v1464 = vlaneseq
    %v1465 = vshrl.u32 %v1464, 7
    %v1466 = vsub.s32 %v946, %v1465
    %v1467 = vrot.slane %v1357, %v1466
    %v1468 = vsel %vm951, %v1467, %v1463
    %v1469 = vlaneseq
    %v1470 = vshrl.u32 %v1469, 7
    %v1471 = vsub.s32 %v941, %v1470
    %v1472 = vrot.slane %v1360, %v1471
    %v1473 = vlaneseq
    %v1474 = vshrl.u32 %v1473, 7
    %v1475 = vsub.s32 %v946, %v1474
    %v1476 = vrot.slane %v1363, %v1475
    %v1477 = vsel %vm951, %v1476, %v1472
    %v1478 = vlaneseq
    %v1479 = vshrl.u32 %v1478, 7
    %v1480 = vsub.s32 %v941, %v1479
    %v1481 = vrot.slane %v1366, %v1480
    %v1482 = vlaneseq
    %v1483 = vshrl.u32 %v1482, 7
    %v1484 = vsub.s32 %v946, %v1483
    %v1485 = vrot.slane %v1369, %v1484
    %v1486 = vsel %vm951, %v1485, %v1481
    %v1487 = vlaneseq
    %v1488 = vshrl.u32 %v1487, 7
    %v1489 = vsub.s32 %v941, %v1488
    %v1490 = vrot.slane %v1372, %v1489
    %v1491 = vlaneseq
    %v1492 = vshrl.u32 %v1491, 7
    %v1493 = vsub.s32 %v946, %v1492
    %v1494 = vrot.slane %v1375, %v1493
    %v1495 = vsel %vm951, %v1494, %v1490
    %v1496 = vlaneseq
    %v1497 = vshrl.u32 %v1496, 7
    %v1498 = vsub.s32 %v941, %v1497
    %v1499 = vrot.slane %v1378, %v1498
    %v1500 = vlaneseq
    %v1501 = vshrl.u32 %v1500, 7
    %v1502 = vsub.s32 %v946, %v1501
    %v1503 = vrot.slane %v1381, %v1502
    %v1504 = vsel %vm951, %v1503, %v1499
    %v1505 = vlaneseq
    %v1506 = vshrl.u32 %v1505, 7
    %v1507 = vsub.s32 %v941, %v1506
    %v1508 = vrot.slane %v1384, %v1507
    %v1509 = vlaneseq
    %v1510 = vshrl.u32 %v1509, 7
    %v1511 = vsub.s32 %v946, %v1510
    %v1512 = vrot.slane %v1387, %v1511
    %v1513 = vsel %vm951, %v1512, %v1508
    %v1514 = vlaneseq
    %v1515 = vshrl.u32 %v1514, 7
    %v1516 = vsub.s32 %v941, %v1515
    %v1517 = vrot.slane %v1390, %v1516
    %v1518 = vlaneseq
    %v1519 = vshrl.u32 %v1518, 7
    %v1520 = vsub.s32 %v946, %v1519
    %v1521 = vrot.slane %v1393, %v1520
    %v1522 = vsel %vm951, %v1521, %v1517
    %v1523 = vlaneseq
    %v1524 = vshrl.u32 %v1523, 7
    %v1525 = vsub.s32 %v941, %v1524
    %v1526 = vrot.slane %v1396, %v1525
    %v1527 = vlaneseq
    %v1528 = vshrl.u32 %v1527, 7
    %v1529 = vsub.s32 %v946, %v1528
    %v1530 = vrot.slane %v1399, %v1529
    %v1531 = vsel %vm951, %v1530, %v1526
    %v1532 = vlaneseq
    %v1533 = vshrl.u32 %v1532, 7
    %v1534 = vsub.s32 %v941, %v1533
    %v1535 = vrot.slane %v1402, %v1534
    %v1536 = vlaneseq
    %v1537 = vshrl.u32 %v1536, 7
    %v1538 = vsub.s32 %v946, %v1537
    %v1539 = vrot.slane %v1405, %v1538
    %v1540 = vsel %vm951, %v1539, %v1535
    %v1541 = vlaneseq
    %v1542 = vshrl.u32 %v1541, 7
    %v1543 = vsub.s32 %v941, %v1542
    %v1544 = vrot.slane %v1408, %v1543
    %v1545 = vlaneseq
    %v1546 = vshrl.u32 %v1545, 7
    %v1547 = vsub.s32 %v946, %v1546
    %v1548 = vrot.slane %v1411, %v1547
    %v1549 = vsel %vm951, %v1548, %v1544
    %v1550 = vlaneseq
    %v1551 = vshrl.u32 %v1550, 7
    %v1552 = vsub.s32 %v941, %v1551
    %v1553 = vrot.slane %v1414, %v1552
    %v1554 = vlaneseq
    %v1555 = vshrl.u32 %v1554, 7
    %v1556 = vsub.s32 %v946, %v1555
    %v1557 = vrot.slane %v1417, %v1556
    %v1558 = vsel %vm951, %v1557, %v1553
    %v1559 = vlaneseq
    %v1560 = vshrl.u32 %v1559, 7
    %v1561 = vsub.s32 %v941, %v1560
    %v1562 = vrot.slane %v1420, %v1561
    %v1563 = vlaneseq
    %v1564 = vshrl.u32 %v1563, 7
    %v1565 = vsub.s32 %v946, %v1564
    %v1566 = vrot.slane %v1423, %v1565
    %v1567 = vsel %vm951, %v1566, %v1562
    %v1568 = vsel %vm1088, %v1441, %v1432
    %v1569 = vsel %vm1090, %v1450, %v1568
    %v1570 = vsel %vm1092, %v1459, %v1569
    %v1571 = vsel %vm1094, %v1468, %v1570
    %v1572 = vsel %vm1096, %v1477, %v1571
    %v1573 = vsel %vm1098, %v1486, %v1572
    %v1574 = vsel %vm1100, %v1495, %v1573
    %v1575 = vsel %vm1088, %v1513, %v1504
    %v1576 = vsel %vm1090, %v1522, %v1575
    %v1577 = vsel %vm1092, %v1531, %v1576
    %v1578 = vsel %vm1094, %v1540, %v1577
    %v1579 = vsel %vm1096, %v1549, %v1578
    %v1580 = vsel %vm1098, %v1558, %v1579
    %v1581 = vsel %vm1100, %v1567, %v1580
    %v1584 = vsel %vm1111, %v1574, 0.0
    %1585 = vadd.xlane.f32.xlu0 %v1584
    %v1586 = vpop.xlane.xlu0 %1585
    %v1587 = vsel %vm1111, %v1581, 0.0
    %1588 = vadd.xlane.f32.xlu0 %v1587
    %v1589 = vpop.xlane.xlu0 %1588
    %v1590 = vrcp.pop %v1586
    %v1591 = vrcp.pop %v1589
    %v1594 = vlaneseq
    %v1595 = vshrl.u32 %v1594, 7
    %v1596 = vsub.s32 0, %v1595
    %v1597 = vrot.slane %v1590, %v1596
    %v1598 = vlaneseq
    %v1599 = vshrl.u32 %v1598, 7
    %v1600 = vsub.s32 1, %v1599
    %v1601 = vrot.slane %v1590, %v1600
    %v1602 = vlaneseq
    %v1603 = vshrl.u32 %v1602, 7
    %v1604 = vsub.s32 2, %v1603
    %v1605 = vrot.slane %v1590, %v1604
    %v1606 = vlaneseq
    %v1607 = vshrl.u32 %v1606, 7
    %v1608 = vsub.s32 3, %v1607
    %v1609 = vrot.slane %v1590, %v1608
    %v1610 = vlaneseq
    %v1611 = vshrl.u32 %v1610, 7
    %v1612 = vsub.s32 4, %v1611
    %v1613 = vrot.slane %v1590, %v1612
    %v1614 = vlaneseq
    %v1615 = vshrl.u32 %v1614, 7
    %v1616 = vsub.s32 5, %v1615
    %v1617 = vrot.slane %v1590, %v1616
    %v1618 = vlaneseq
    %v1619 = vshrl.u32 %v1618, 7
    %v1620 = vsub.s32 6, %v1619
    %v1621 = vrot.slane %v1590, %v1620
    %v1622 = vlaneseq
    %v1623 = vshrl.u32 %v1622, 7
    %v1624 = vsub.s32 7, %v1623
    %v1625 = vrot.slane %v1590, %v1624
    %v1626 = vlaneseq
    %v1627 = vshrl.u32 %v1626, 7
    %v1628 = vsub.s32 0, %v1627
    %v1629 = vrot.slane %v1591, %v1628
    %v1630 = vlaneseq
    %v1631 = vshrl.u32 %v1630, 7
    %v1632 = vsub.s32 1, %v1631
    %v1633 = vrot.slane %v1591, %v1632
    %v1634 = vlaneseq
    %v1635 = vshrl.u32 %v1634, 7
    %v1636 = vsub.s32 2, %v1635
    %v1637 = vrot.slane %v1591, %v1636
    %v1638 = vlaneseq
    %v1639 = vshrl.u32 %v1638, 7
    %v1640 = vsub.s32 3, %v1639
    %v1641 = vrot.slane %v1591, %v1640
    %v1642 = vlaneseq
    %v1643 = vshrl.u32 %v1642, 7
    %v1644 = vsub.s32 4, %v1643
    %v1645 = vrot.slane %v1591, %v1644
    %v1646 = vlaneseq
    %v1647 = vshrl.u32 %v1646, 7
    %v1648 = vsub.s32 5, %v1647
    %v1649 = vrot.slane %v1591, %v1648
    %v1650 = vlaneseq
    %v1651 = vshrl.u32 %v1650, 7
    %v1652 = vsub.s32 6, %v1651
    %v1653 = vrot.slane %v1591, %v1652
    %v1654 = vlaneseq
    %v1655 = vshrl.u32 %v1654, 7
    %v1656 = vsub.s32 7, %v1655
    %v1657 = vrot.slane %v1591, %v1656
    %v1674 = vmul.f32 %v1233, %v1597
    %v1675 = vmul.f32 %v1235, %v1597
    %v1676 = vmul.f32 %v1237, %v1601
    %v1677 = vmul.f32 %v1239, %v1601
    %v1678 = vmul.f32 %v1241, %v1605
    %v1679 = vmul.f32 %v1243, %v1605
    %v1680 = vmul.f32 %v1245, %v1609
    %v1681 = vmul.f32 %v1247, %v1609
    %v1682 = vmul.f32 %v1249, %v1613
    %v1683 = vmul.f32 %v1251, %v1613
    %v1684 = vmul.f32 %v1253, %v1617
    %v1685 = vmul.f32 %v1255, %v1617
    %v1686 = vmul.f32 %v1257, %v1621
    %v1687 = vmul.f32 %v1259, %v1621
    %v1688 = vmul.f32 %v1261, %v1625
    %v1689 = vmul.f32 %v1263, %v1625
    %v1690 = vmul.f32 %v1265, %v1629
    %v1691 = vmul.f32 %v1267, %v1629
    %v1692 = vmul.f32 %v1269, %v1633
    %v1693 = vmul.f32 %v1271, %v1633
    %v1694 = vmul.f32 %v1273, %v1637
    %v1695 = vmul.f32 %v1275, %v1637
    %v1696 = vmul.f32 %v1277, %v1641
    %v1697 = vmul.f32 %v1279, %v1641
    %v1698 = vmul.f32 %v1281, %v1645
    %v1699 = vmul.f32 %v1283, %v1645
    %v1700 = vmul.f32 %v1285, %v1649
    %v1701 = vmul.f32 %v1287, %v1649
    %v1702 = vmul.f32 %v1289, %v1653
    %v1703 = vmul.f32 %v1291, %v1653
    %v1704 = vmul.f32 %v1293, %v1657
    %v1705 = vmul.f32 %v1295, %v1657
    %v1706 = vld [vmem:[%s6] sm:$0x1]
    %v1708 = vlaneseq
    %v1709 = vshrl.u32 %v1708, 7
    %v1710 = vsub.s32 0, %v1709
    %v1711 = vrot.slane %v1706, %v1710
    %1745 = vset.pattern.permute.xlu0 0
    %1746 = vperm.xlu0 %1745, %v1674
    %v1747 = vpop.permute.xlu0 %1746
    %1748 = vset.pattern.permute.xlu0 0
    %1749 = vperm.xlu0 %1748, %v1675
    %v1750 = vpop.permute.xlu0 %1749
    %1751 = vset.pattern.permute.xlu0 0
    %1752 = vperm.xlu0 %1751, %v1676
    %v1753 = vpop.permute.xlu0 %1752
    %1754 = vset.pattern.permute.xlu0 0
    %1755 = vperm.xlu0 %1754, %v1677
    %v1756 = vpop.permute.xlu0 %1755
    %1757 = vset.pattern.permute.xlu0 0
    %1758 = vperm.xlu0 %1757, %v1678
    %v1759 = vpop.permute.xlu0 %1758
    %1760 = vset.pattern.permute.xlu0 0
    %1761 = vperm.xlu0 %1760, %v1679
    %v1762 = vpop.permute.xlu0 %1761
    %1763 = vset.pattern.permute.xlu0 0
    %1764 = vperm.xlu0 %1763, %v1680
    %v1765 = vpop.permute.xlu0 %1764
    %1766 = vset.pattern.permute.xlu0 0
    %1767 = vperm.xlu0 %1766, %v1681
    %v1768 = vpop.permute.xlu0 %1767
    %1769 = vset.pattern.permute.xlu0 0
    %1770 = vperm.xlu0 %1769, %v1682
    %v1771 = vpop.permute.xlu0 %1770
    %1772 = vset.pattern.permute.xlu0 0
    %1773 = vperm.xlu0 %1772, %v1683
    %v1774 = vpop.permute.xlu0 %1773
    %1775 = vset.pattern.permute.xlu0 0
    %1776 = vperm.xlu0 %1775, %v1684
    %v1777 = vpop.permute.xlu0 %1776
    %1778 = vset.pattern.permute.xlu0 0
    %1779 = vperm.xlu0 %1778, %v1685
    %v1780 = vpop.permute.xlu0 %1779
    %1781 = vset.pattern.permute.xlu0 0
    %1782 = vperm.xlu0 %1781, %v1686
    %v1783 = vpop.permute.xlu0 %1782
    %1784 = vset.pattern.permute.xlu0 0
    %1785 = vperm.xlu0 %1784, %v1687
    %v1786 = vpop.permute.xlu0 %1785
    %1787 = vset.pattern.permute.xlu0 0
    %1788 = vperm.xlu0 %1787, %v1688
    %v1789 = vpop.permute.xlu0 %1788
    %1790 = vset.pattern.permute.xlu0 0
    %1791 = vperm.xlu0 %1790, %v1689
    %v1792 = vpop.permute.xlu0 %1791
    %1793 = vset.pattern.permute.xlu0 0
    %1794 = vperm.xlu0 %1793, %v1690
    %v1795 = vpop.permute.xlu0 %1794
    %1796 = vset.pattern.permute.xlu0 0
    %1797 = vperm.xlu0 %1796, %v1691
    %v1798 = vpop.permute.xlu0 %1797
    %1799 = vset.pattern.permute.xlu0 0
    %1800 = vperm.xlu0 %1799, %v1692
    %v1801 = vpop.permute.xlu0 %1800
    %1802 = vset.pattern.permute.xlu0 0
    %1803 = vperm.xlu0 %1802, %v1693
    %v1804 = vpop.permute.xlu0 %1803
    %1805 = vset.pattern.permute.xlu0 0
    %1806 = vperm.xlu0 %1805, %v1694
    %v1807 = vpop.permute.xlu0 %1806
    %1808 = vset.pattern.permute.xlu0 0
    %1809 = vperm.xlu0 %1808, %v1695
    %v1810 = vpop.permute.xlu0 %1809
    %1811 = vset.pattern.permute.xlu0 0
    %1812 = vperm.xlu0 %1811, %v1696
    %v1813 = vpop.permute.xlu0 %1812
    %1814 = vset.pattern.permute.xlu0 0
    %1815 = vperm.xlu0 %1814, %v1697
    %v1816 = vpop.permute.xlu0 %1815
    %1817 = vset.pattern.permute.xlu0 0
    %1818 = vperm.xlu0 %1817, %v1698
    %v1819 = vpop.permute.xlu0 %1818
    %1820 = vset.pattern.permute.xlu0 0
    %1821 = vperm.xlu0 %1820, %v1699
    %v1822 = vpop.permute.xlu0 %1821
    %1823 = vset.pattern.permute.xlu0 0
    %1824 = vperm.xlu0 %1823, %v1700
    %v1825 = vpop.permute.xlu0 %1824
    %1826 = vset.pattern.permute.xlu0 0
    %1827 = vperm.xlu0 %1826, %v1701
    %v1828 = vpop.permute.xlu0 %1827
    %1829 = vset.pattern.permute.xlu0 0
    %1830 = vperm.xlu0 %1829, %v1702
    %v1831 = vpop.permute.xlu0 %1830
    %1832 = vset.pattern.permute.xlu0 0
    %1833 = vperm.xlu0 %1832, %v1703
    %v1834 = vpop.permute.xlu0 %1833
    %1835 = vset.pattern.permute.xlu0 0
    %1836 = vperm.xlu0 %1835, %v1704
    %v1837 = vpop.permute.xlu0 %1836
    %1838 = vset.pattern.permute.xlu0 0
    %1839 = vperm.xlu0 %1838, %v1705
    %v1840 = vpop.permute.xlu0 %1839
    %v1841 = vlaneseq
    %v1842 = vshrl.u32 %v1841, 7
    %v1843 = vsub.s32 %v941, %v1842
    %v1844 = vrot.slane %v1747, %v1843
    %v1845 = vlaneseq
    %v1846 = vshrl.u32 %v1845, 7
    %v1847 = vsub.s32 %v946, %v1846
    %v1848 = vrot.slane %v1750, %v1847
    %v1849 = vsel %vm951, %v1848, %v1844
    %v1850 = vlaneseq
    %v1851 = vshrl.u32 %v1850, 7
    %v1852 = vsub.s32 %v941, %v1851
    %v1853 = vrot.slane %v1753, %v1852
    %v1854 = vlaneseq
    %v1855 = vshrl.u32 %v1854, 7
    %v1856 = vsub.s32 %v946, %v1855
    %v1857 = vrot.slane %v1756, %v1856
    %v1858 = vsel %vm951, %v1857, %v1853
    %v1859 = vlaneseq
    %v1860 = vshrl.u32 %v1859, 7
    %v1861 = vsub.s32 %v941, %v1860
    %v1862 = vrot.slane %v1759, %v1861
    %v1863 = vlaneseq
    %v1864 = vshrl.u32 %v1863, 7
    %v1865 = vsub.s32 %v946, %v1864
    %v1866 = vrot.slane %v1762, %v1865
    %v1867 = vsel %vm951, %v1866, %v1862
    %v1868 = vlaneseq
    %v1869 = vshrl.u32 %v1868, 7
    %v1870 = vsub.s32 %v941, %v1869
    %v1871 = vrot.slane %v1765, %v1870
    %v1872 = vlaneseq
    %v1873 = vshrl.u32 %v1872, 7
    %v1874 = vsub.s32 %v946, %v1873
    %v1875 = vrot.slane %v1768, %v1874
    %v1876 = vsel %vm951, %v1875, %v1871
    %v1877 = vlaneseq
    %v1878 = vshrl.u32 %v1877, 7
    %v1879 = vsub.s32 %v941, %v1878
    %v1880 = vrot.slane %v1771, %v1879
    %v1881 = vlaneseq
    %v1882 = vshrl.u32 %v1881, 7
    %v1883 = vsub.s32 %v946, %v1882
    %v1884 = vrot.slane %v1774, %v1883
    %v1885 = vsel %vm951, %v1884, %v1880
    %v1886 = vlaneseq
    %v1887 = vshrl.u32 %v1886, 7
    %v1888 = vsub.s32 %v941, %v1887
    %v1889 = vrot.slane %v1777, %v1888
    %v1890 = vlaneseq
    %v1891 = vshrl.u32 %v1890, 7
    %v1892 = vsub.s32 %v946, %v1891
    %v1893 = vrot.slane %v1780, %v1892
    %v1894 = vsel %vm951, %v1893, %v1889
    %v1895 = vlaneseq
    %v1896 = vshrl.u32 %v1895, 7
    %v1897 = vsub.s32 %v941, %v1896
    %v1898 = vrot.slane %v1783, %v1897
    %v1899 = vlaneseq
    %v1900 = vshrl.u32 %v1899, 7
    %v1901 = vsub.s32 %v946, %v1900
    %v1902 = vrot.slane %v1786, %v1901
    %v1903 = vsel %vm951, %v1902, %v1898
    %v1904 = vlaneseq
    %v1905 = vshrl.u32 %v1904, 7
    %v1906 = vsub.s32 %v941, %v1905
    %v1907 = vrot.slane %v1789, %v1906
    %v1908 = vlaneseq
    %v1909 = vshrl.u32 %v1908, 7
    %v1910 = vsub.s32 %v946, %v1909
    %v1911 = vrot.slane %v1792, %v1910
    %v1912 = vsel %vm951, %v1911, %v1907
    %v1913 = vlaneseq
    %v1914 = vshrl.u32 %v1913, 7
    %v1915 = vsub.s32 %v941, %v1914
    %v1916 = vrot.slane %v1795, %v1915
    %v1917 = vlaneseq
    %v1918 = vshrl.u32 %v1917, 7
    %v1919 = vsub.s32 %v946, %v1918
    %v1920 = vrot.slane %v1798, %v1919
    %v1921 = vsel %vm951, %v1920, %v1916
    %v1922 = vlaneseq
    %v1923 = vshrl.u32 %v1922, 7
    %v1924 = vsub.s32 %v941, %v1923
    %v1925 = vrot.slane %v1801, %v1924
    %v1926 = vlaneseq
    %v1927 = vshrl.u32 %v1926, 7
    %v1928 = vsub.s32 %v946, %v1927
    %v1929 = vrot.slane %v1804, %v1928
    %v1930 = vsel %vm951, %v1929, %v1925
    %v1931 = vlaneseq
    %v1932 = vshrl.u32 %v1931, 7
    %v1933 = vsub.s32 %v941, %v1932
    %v1934 = vrot.slane %v1807, %v1933
    %v1935 = vlaneseq
    %v1936 = vshrl.u32 %v1935, 7
    %v1937 = vsub.s32 %v946, %v1936
    %v1938 = vrot.slane %v1810, %v1937
    %v1939 = vsel %vm951, %v1938, %v1934
    %v1940 = vlaneseq
    %v1941 = vshrl.u32 %v1940, 7
    %v1942 = vsub.s32 %v941, %v1941
    %v1943 = vrot.slane %v1813, %v1942
    %v1944 = vlaneseq
    %v1945 = vshrl.u32 %v1944, 7
    %v1946 = vsub.s32 %v946, %v1945
    %v1947 = vrot.slane %v1816, %v1946
    %v1948 = vsel %vm951, %v1947, %v1943
    %v1949 = vlaneseq
    %v1950 = vshrl.u32 %v1949, 7
    %v1951 = vsub.s32 %v941, %v1950
    %v1952 = vrot.slane %v1819, %v1951
    %v1953 = vlaneseq
    %v1954 = vshrl.u32 %v1953, 7
    %v1955 = vsub.s32 %v946, %v1954
    %v1956 = vrot.slane %v1822, %v1955
    %v1957 = vsel %vm951, %v1956, %v1952
    %v1958 = vlaneseq
    %v1959 = vshrl.u32 %v1958, 7
    %v1960 = vsub.s32 %v941, %v1959
    %v1961 = vrot.slane %v1825, %v1960
    %v1962 = vlaneseq
    %v1963 = vshrl.u32 %v1962, 7
    %v1964 = vsub.s32 %v946, %v1963
    %v1965 = vrot.slane %v1828, %v1964
    %v1966 = vsel %vm951, %v1965, %v1961
    %v1967 = vlaneseq
    %v1968 = vshrl.u32 %v1967, 7
    %v1969 = vsub.s32 %v941, %v1968
    %v1970 = vrot.slane %v1831, %v1969
    %v1971 = vlaneseq
    %v1972 = vshrl.u32 %v1971, 7
    %v1973 = vsub.s32 %v946, %v1972
    %v1974 = vrot.slane %v1834, %v1973
    %v1975 = vsel %vm951, %v1974, %v1970
    %v1976 = vlaneseq
    %v1977 = vshrl.u32 %v1976, 7
    %v1978 = vsub.s32 %v941, %v1977
    %v1979 = vrot.slane %v1837, %v1978
    %v1980 = vlaneseq
    %v1981 = vshrl.u32 %v1980, 7
    %v1982 = vsub.s32 %v946, %v1981
    %v1983 = vrot.slane %v1840, %v1982
    %v1984 = vsel %vm951, %v1983, %v1979
    %v1985 = vsel %vm1088, %v1858, %v1849
    %v1986 = vsel %vm1090, %v1867, %v1985
    %v1987 = vsel %vm1092, %v1876, %v1986
    %v1988 = vsel %vm1094, %v1885, %v1987
    %v1989 = vsel %vm1096, %v1894, %v1988
    %v1990 = vsel %vm1098, %v1903, %v1989
    %v1991 = vsel %vm1100, %v1912, %v1990
    %v1992 = vsel %vm1088, %v1930, %v1921
    %v1993 = vsel %vm1090, %v1939, %v1992
    %v1994 = vsel %vm1092, %v1948, %v1993
    %v1995 = vsel %vm1094, %v1957, %v1994
    %v1996 = vsel %vm1096, %v1966, %v1995
    %v1997 = vsel %vm1098, %v1975, %v1996
    %v1998 = vsel %vm1100, %v1984, %v1997
    %v1999 = vsel %vm1111, %v1991, 0
    %v2001 = vsel %vm1111, %v1998, 0
    %2003 = vmatprep.subr.mxu0 0.0
    %2004 = vmatpush1.msra.mxu0 %v181
    %2005 = vmatprep.subr.mxu0 0.0
    %2006 = vmatpush1.msra.mxu0 %v187
    %2007 = vmatprep.subr.mxu0 0.0
    %2008 = vmatpush1.msra.mxu0 0.0
    %2009 = vmatprep.subr.mxu0 0.0
    %2010 = vmatpush1.msra.mxu0 0.0
    %2011 = vmatprep.subr.mxu0 0.0
    %2012 = vmatpush1.msra.mxu0 0.0
    %2013 = vmatprep.subr.mxu0 0.0
    %2014 = vmatpush1.msra.mxu0 0.0
    %2015 = vmatprep.subr.mxu0 0.0
    %2016 = vmatpush1.msra.mxu0 0.0
    %2017 = vmatprep.subr.mxu0 0.0
    %2018 = vmatpush1.msra.mxu0 0.0
    %2019 = vmatprep.subr.mxu0 0.0
    %2020 = vmatpush1.msra.mxu0 0.0
    %2021 = vmatprep.subr.mxu0 0.0
    %2022 = vmatpush1.msra.mxu0 0.0
    %2023 = vmatprep.subr.mxu0 0.0
    %2024 = vmatpush1.msra.mxu0 0.0
    %2025 = vmatprep.subr.mxu0 0.0
    %2026 = vmatpush1.msra.mxu0 0.0
    %2027 = vmatprep.subr.mxu0 0.0
    %2028 = vmatpush1.msra.mxu0 0.0
    %2029 = vmatprep.subr.mxu0 0.0
    %2030 = vmatpush1.msra.mxu0 0.0
    %2031 = vmatprep.subr.mxu0 0.0
    %2032 = vmatpush1.msra.mxu0 0.0
    %2033 = vmatprep.subr.mxu0 0.0
    %2034 = vmatpush1.msra.mxu0 0.0
    %2035 = vmatprep.subr.mxu0 0.0
    %2036 = vmatpush1.msra.mxu0 0.0
    %2037 = vmatprep.subr.mxu0 0.0
    %2038 = vmatpush1.msra.mxu0 0.0
    %2039 = vmatprep.subr.mxu0 0.0
    %2040 = vmatpush1.msra.mxu0 0.0
    %2041 = vmatprep.subr.mxu0 0.0
    %2042 = vmatpush1.msra.mxu0 0.0
    %2043 = vmatprep.subr.mxu0 0.0
    %2044 = vmatpush1.msra.mxu0 0.0
    %2045 = vmatprep.subr.mxu0 0.0
    %2046 = vmatpush1.msra.mxu0 0.0
    %2047 = vmatprep.subr.mxu0 0.0
    %2048 = vmatpush1.msra.mxu0 0.0
    %2049 = vmatprep.subr.mxu0 0.0
    %2050 = vmatpush1.msra.mxu0 0.0
    %2051 = vmatprep.subr.mxu0 0.0
    %2052 = vmatpush1.msra.mxu0 0.0
    %2053 = vmatprep.subr.mxu0 0.0
    %2054 = vmatpush1.msra.mxu0 0.0
    %2055 = vmatprep.subr.mxu0 0.0
    %2056 = vmatpush1.msra.mxu0 0.0
    %2057 = vmatprep.subr.mxu0 0.0
    %2058 = vmatpush1.msra.mxu0 0.0
    %2059 = vmatprep.subr.mxu0 0.0
    %2060 = vmatpush1.msra.mxu0 0.0
    %2061 = vmatprep.subr.mxu0 0.0
    %2062 = vmatpush1.msra.mxu0 0.0
    %2063 = vmatprep.subr.mxu0 0.0
    %2064 = vmatpush1.msra.mxu0 0.0
    %2065 = vmatprep.subr.mxu0 0.0
    %2066 = vmatpush1.msra.mxu0 0.0
    %2067 = vmatprep.mubr.f32.mxu0 0.0
    %2068 = vmatmul.mubr.f32.gmra.mrb[0].mxu0 %v1999
    %v2069 = vpop.f32.mrb[0].mxu0
    %v2070 = vadd.f32 %v1711, %v2069
    %v2071 = vpop.f32.mrb[0].mxu0
    %2072 = vmatprep.mubr.f32.mxu0 0.0
    %2073 = vmatmul.mubr.f32.gmra.mrb[0].mxu0 %v2001
    %v2074 = vpop.f32.mrb[0].mxu0
    %v2075 = vadd.f32 %v1711, %v2074
    %v2076 = vpop.f32.mrb[0].mxu0
    %2077 = vdwg.mxu0
    %2079 = vset.pattern.permute.xlu0 0
    %2080 = vperm.xlu0 %2079, %v66
    %v2081 = vpop.permute.xlu0 %2080
    %2084 = vset.pattern.permute.xlu0 0
    %2085 = vperm.xlu0 %2084, %v67
    %v2086 = vpop.permute.xlu0 %2085
    %v2088 = vmul.f32 %v2070, %v2081
    %v2089 = vmul.f32 %v2075, %v2086
    %v2090 = vadd.f32 %v2088, %v2089
    %v2091 = vrot.slane %v2090, 4
    %v2092 = vadd.f32 %v2090, %v2091
    %v2093 = vrot.slane %v2092, 2
    %v2094 = vadd.f32 %v2092, %v2093
    %v2095 = vrot.slane %v2094, 1
    %v2096 = vadd.f32 %v2094, %v2095
    %v2097 = vmul.f32 %v2096, 0.0625
    %v2098 = vld [vmem:[%s9] sm:$0x1]
    %v2099 = vmul.f32 %v2097, %v2098
    %v2100 = vlaneseq
    %v2101 = vshrl.u32 %v2100, 7
    %v2102 = vsub.s32 0, %v2101
    %v2103 = vrot.slane %v2099, %v2102
    %v2104 = vsub.f32 %v2070, %v2103
    %v2105 = vsub.f32 %v2075, %v2103
    %v2106 = vmul.f32 %v2104, %v2081
    %v2107 = vmul.f32 %v2105, %v2086
    %v2108 = vmul.f32 %v2106, %v2106
    %v2109 = vmul.f32 %v2107, %v2107
    %v2110 = vadd.f32 %v2108, %v2109
    %v2111 = vrot.slane %v2110, 4
    %v2112 = vadd.f32 %v2110, %v2111
    %v2113 = vrot.slane %v2112, 2
    %v2114 = vadd.f32 %v2112, %v2113
    %v2115 = vrot.slane %v2114, 1
    %v2116 = vadd.f32 %v2114, %v2115
    %v2117 = vmul.f32 %v2116, 0.0625
    %v2118 = vadd.f32 %v2117, 1e-05
    %v2119 = vrsqrt.pop %v2118
    %v2120 = vld [vmem:[%s7] sm:$0x1]
    %v2122 = vlaneseq
    %v2123 = vshrl.u32 %v2122, 7
    %v2124 = vsub.s32 0, %v2123
    %v2125 = vrot.slane %v2120, %v2124
    %v2127 = vmul.f32 %v2125, %v2104
    %v2128 = vmul.f32 %v2125, %v2105
    %v2129 = vmul.f32 %v2127, %v2119
    %v2130 = vmul.f32 %v2128, %v2119
    %v2131 = vld [vmem:[%s8] sm:$0x1]
    %v2133 = vlaneseq
    %v2134 = vshrl.u32 %v2133, 7
    %v2135 = vsub.s32 0, %v2134
    %v2136 = vrot.slane %v2131, %v2135
    %v2138 = vadd.f32 %v2129, %v2136
    %v2139 = vadd.f32 %v2130, %v2136
    %v2140 = vmax.f32 %v2138, 0.0
    %v2141 = vmax.f32 %v2139, 0.0
    %v2142 = vmul.f32 %v2140, %v2081
    %v2143 = vmul.f32 %v2141, %v2086
    %s2144 = scalar_lea.vmem [#allocation5], 256
    %v2145 = vld [vmem:[%s2144] sm:$0xff]
    %v2146 = vld [vmem:[%s2144 + $0x8] sm:$0xff]
    %v2147 = vld [vmem:[%s2144 + $0x10] sm:$0xff]
    %v2148 = vld [vmem:[%s2144 + $0x18] sm:$0xff]
    %v2149 = vld [vmem:[%s2144 + $0x20] sm:$0xff]
    %v2150 = vld [vmem:[%s2144 + $0x28] sm:$0xff]
    %v2151 = vld [vmem:[%s2144 + $0x30] sm:$0xff]
    %v2152 = vld [vmem:[%s2144 + $0x38] sm:$0xff]
    %v2153 = vld [vmem:[%s2144 + $0x40] sm:$0xff]
    %v2154 = vld [vmem:[%s2144 + $0x48] sm:$0xff]
    %v2155 = vld [vmem:[%s2144 + $0x50] sm:$0xff]
    %v2156 = vld [vmem:[%s2144 + $0x58] sm:$0xff]
    %v2157 = vld [vmem:[%s2144 + $0x60] sm:$0xff]
    %v2158 = vld [vmem:[%s2144 + $0x68] sm:$0xff]
    %v2159 = vld [vmem:[%s2144 + $0x70] sm:$0xff]
    %v2160 = vld [vmem:[%s2144 + $0x78] sm:$0xff]
    %v2161 = vld [vmem:[%s2144 + $0x80] sm:$0xff]
    %v2162 = vld [vmem:[%s2144 + $0x88] sm:$0xff]
    %v2163 = vld [vmem:[%s2144 + $0x90] sm:$0xff]
    %v2164 = vld [vmem:[%s2144 + $0x98] sm:$0xff]
    %v2165 = vld [vmem:[%s2144 + $0xa0] sm:$0xff]
    %v2166 = vld [vmem:[%s2144 + $0xa8] sm:$0xff]
    %v2167 = vld [vmem:[%s2144 + $0xb0] sm:$0xff]
    %v2168 = vld [vmem:[%s2144 + $0xb8] sm:$0xff]
    %v2169 = vld [vmem:[%s2144 + $0xc0] sm:$0xff]
    %v2170 = vld [vmem:[%s2144 + $0xc8] sm:$0xff]
    %v2171 = vld [vmem:[%s2144 + $0xd0] sm:$0xff]
    %v2172 = vld [vmem:[%s2144 + $0xd8] sm:$0xff]
    %v2173 = vld [vmem:[%s2144 + $0xe0] sm:$0xff]
    %v2174 = vld [vmem:[%s2144 + $0xe8] sm:$0xff]
    %v2175 = vld [vmem:[%s2144 + $0xf0] sm:$0xff]
    %v2176 = vld [vmem:[%s2144 + $0xf8] sm:$0xff]
    %s2177 = scalar_lea.vmem %s4, 2
    %v2178 = vld [vmem:[%s2177] sm:$0x3]
    %v2180 = vlaneseq
    %v2181 = vshrl.u32 %v2180, 7
    %v2182 = vsub.s32 0, %v2181
    %v2183 = vrot.slane %v2178, %v2182
    %v2184 = vlaneseq
    %v2185 = vshrl.u32 %v2184, 7
    %v2186 = vsub.s32 1, %v2185
    %v2187 = vrot.slane %v2178, %v2186
    %2190 = vmatprep.subr.mxu0 %v2146
    %2191 = vmatpush1.msra.mxu0 %v2145
    %2192 = vmatprep.subr.mxu0 %v2148
    %2193 = vmatpush1.msra.mxu0 %v2147
    %2194 = vmatprep.subr.mxu0 %v2150
    %2195 = vmatpush1.msra.mxu0 %v2149
    %2196 = vmatprep.subr.mxu0 %v2152
    %2197 = vmatpush1.msra.mxu0 %v2151
    %2198 = vmatprep.subr.mxu0 %v2154
    %2199 = vmatpush1.msra.mxu0 %v2153
    %2200 = vmatprep.subr.mxu0 %v2156
    %2201 = vmatpush1.msra.mxu0 %v2155
    %2202 = vmatprep.subr.mxu0 %v2158
    %2203 = vmatpush1.msra.mxu0 %v2157
    %2204 = vmatprep.subr.mxu0 %v2160
    %2205 = vmatpush1.msra.mxu0 %v2159
    %2206 = vmatprep.subr.mxu0 %v2162
    %2207 = vmatpush1.msra.mxu0 %v2161
    %2208 = vmatprep.subr.mxu0 %v2164
    %2209 = vmatpush1.msra.mxu0 %v2163
    %2210 = vmatprep.subr.mxu0 %v2166
    %2211 = vmatpush1.msra.mxu0 %v2165
    %2212 = vmatprep.subr.mxu0 %v2168
    %2213 = vmatpush1.msra.mxu0 %v2167
    %2214 = vmatprep.subr.mxu0 %v2170
    %2215 = vmatpush1.msra.mxu0 %v2169
    %2216 = vmatprep.subr.mxu0 %v2172
    %2217 = vmatpush1.msra.mxu0 %v2171
    %2218 = vmatprep.subr.mxu0 %v2174
    %2219 = vmatpush1.msra.mxu0 %v2173
    %2220 = vmatprep.subr.mxu0 %v2176
    %2221 = vmatpush1.msra.mxu0 %v2175
    %2222 = vmatprep.subr.mxu0 0.0
    %2223 = vmatpush1.msra.mxu0 0.0
    %2224 = vmatprep.subr.mxu0 0.0
    %2225 = vmatpush1.msra.mxu0 0.0
    %2226 = vmatprep.subr.mxu0 0.0
    %2227 = vmatpush1.msra.mxu0 0.0
    %2228 = vmatprep.subr.mxu0 0.0
    %2229 = vmatpush1.msra.mxu0 0.0
    %2230 = vmatprep.subr.mxu0 0.0
    %2231 = vmatpush1.msra.mxu0 0.0
    %2232 = vmatprep.subr.mxu0 0.0
    %2233 = vmatpush1.msra.mxu0 0.0
    %2234 = vmatprep.subr.mxu0 0.0
    %2235 = vmatpush1.msra.mxu0 0.0
    %2236 = vmatprep.subr.mxu0 0.0
    %2237 = vmatpush1.msra.mxu0 0.0
    %2238 = vmatprep.subr.mxu0 0.0
    %2239 = vmatpush1.msra.mxu0 0.0
    %2240 = vmatprep.subr.mxu0 0.0
    %2241 = vmatpush1.msra.mxu0 0.0
    %2242 = vmatprep.subr.mxu0 0.0
    %2243 = vmatpush1.msra.mxu0 0.0
    %2244 = vmatprep.subr.mxu0 0.0
    %2245 = vmatpush1.msra.mxu0 0.0
    %2246 = vmatprep.subr.mxu0 0.0
    %2247 = vmatpush1.msra.mxu0 0.0
    %2248 = vmatprep.subr.mxu0 0.0
    %2249 = vmatpush1.msra.mxu0 0.0
    %2250 = vmatprep.subr.mxu0 0.0
    %2251 = vmatpush1.msra.mxu0 0.0
    %2252 = vmatprep.subr.mxu0 0.0
    %2253 = vmatpush1.msra.mxu0 0.0
    %2254 = vmatprep.mubr.f32.mxu0 0.0
    %2255 = vmatmul.mubr.f32.gmra.mrb[0].mxu0 %v2142
    %v2256 = vpop.f32.mrb[0].mxu0
    %v2257 = vadd.f32 %v2183, %v2256
    %v2258 = vpop.f32.mrb[0].mxu0
    %v2259 = vadd.f32 %v2187, %v2258
    %2260 = vmatprep.mubr.f32.mxu0 0.0
    %2261 = vmatmul.mubr.f32.gmra.mrb[0].mxu0 %v2143
    %v2262 = vpop.f32.mrb[0].mxu0
    %v2263 = vadd.f32 %v2183, %v2262
    %v2264 = vpop.f32.mrb[0].mxu0
    %v2265 = vadd.f32 %v2187, %v2264
    %2266 = vdwg.mxu0
    %v2269 = vcombine.high %v2259, %v2259
    %v2271 = vunpack.c.l.s4 1966171168
    %v2272 = vunpack.c.0.s8 %v2271
    %v2273 = vlaneseq
    %v2274 = vshrl.u32 %v2273, 7
    %v2275 = vsub.s32 %v2272, %v2274
    %v2276 = vrot.slane %v2259, %v2275
    %v2278 = vunpack.c.l.s4 1966171168
    %v2279 = vunpack.c.0.s8 %v2278
    %v2280 = vlaneseq
    %v2281 = vshrl.u32 %v2280, 7
    %v2282 = vsub.s32 %v2279, %v2281
    %v2283 = vrot.slane %v2269, %v2282
    %v2284 = vcombine.high %v2276, %v2276
    %v2285 = vcombine.high %v2283, %v2283
    %v2287 = vunpack.c.l.s4 1966171168
    %v2288 = vunpack.c.0.s8 %v2287
    %v2289 = vlaneseq
    %v2290 = vshrl.u32 %v2289, 7
    %v2291 = vsub.s32 %v2288, %v2290
    %v2292 = vrot.slane %v2276, %v2291
    %v2294 = vunpack.c.l.s4 1966171168
    %v2295 = vunpack.c.0.s8 %v2294
    %v2296 = vlaneseq
    %v2297 = vshrl.u32 %v2296, 7
    %v2298 = vsub.s32 %v2295, %v2297
    %v2299 = vrot.slane %v2283, %v2298
    %v2301 = vunpack.c.l.s4 1966171168
    %v2302 = vunpack.c.0.s8 %v2301
    %v2303 = vlaneseq
    %v2304 = vshrl.u32 %v2303, 7
    %v2305 = vsub.s32 %v2302, %v2304
    %v2306 = vrot.slane %v2284, %v2305
    %v2308 = vunpack.c.l.s4 1966171168
    %v2309 = vunpack.c.0.s8 %v2308
    %v2310 = vlaneseq
    %v2311 = vshrl.u32 %v2310, 7
    %v2312 = vsub.s32 %v2309, %v2311
    %v2313 = vrot.slane %v2285, %v2312
    %v2314 = vcombine.high %v2292, %v2292
    %v2315 = vcombine.high %v2299, %v2299
    %v2316 = vcombine.high %v2306, %v2306
    %v2317 = vcombine.high %v2313, %v2313
    %v2318 = vcombine.high %v2265, %v2265
    %v2320 = vunpack.c.l.s4 1966171168
    %v2321 = vunpack.c.0.s8 %v2320
    %v2322 = vlaneseq
    %v2323 = vshrl.u32 %v2322, 7
    %v2324 = vsub.s32 %v2321, %v2323
    %v2325 = vrot.slane %v2265, %v2324
    %v2327 = vunpack.c.l.s4 1966171168
    %v2328 = vunpack.c.0.s8 %v2327
    %v2329 = vlaneseq
    %v2330 = vshrl.u32 %v2329, 7
    %v2331 = vsub.s32 %v2328, %v2330
    %v2332 = vrot.slane %v2318, %v2331
    %v2333 = vcombine.high %v2325, %v2325
    %v2334 = vcombine.high %v2332, %v2332
    %v2336 = vunpack.c.l.s4 1966171168
    %v2337 = vunpack.c.0.s8 %v2336
    %v2338 = vlaneseq
    %v2339 = vshrl.u32 %v2338, 7
    %v2340 = vsub.s32 %v2337, %v2339
    %v2341 = vrot.slane %v2325, %v2340
    %v2343 = vunpack.c.l.s4 1966171168
    %v2344 = vunpack.c.0.s8 %v2343
    %v2345 = vlaneseq
    %v2346 = vshrl.u32 %v2345, 7
    %v2347 = vsub.s32 %v2344, %v2346
    %v2348 = vrot.slane %v2332, %v2347
    %v2350 = vunpack.c.l.s4 1966171168
    %v2351 = vunpack.c.0.s8 %v2350
    %v2352 = vlaneseq
    %v2353 = vshrl.u32 %v2352, 7
    %v2354 = vsub.s32 %v2351, %v2353
    %v2355 = vrot.slane %v2333, %v2354
    %v2357 = vunpack.c.l.s4 1966171168
    %v2358 = vunpack.c.0.s8 %v2357
    %v2359 = vlaneseq
    %v2360 = vshrl.u32 %v2359, 7
    %v2361 = vsub.s32 %v2358, %v2360
    %v2362 = vrot.slane %v2334, %v2361
    %v2363 = vcombine.high %v2341, %v2341
    %v2364 = vcombine.high %v2348, %v2348
    %v2365 = vcombine.high %v2355, %v2355
    %v2366 = vcombine.high %v2362, %v2362
    %v2367 = vlaneseq
    %v2368 = vshrl.u32 %v2367, 7
    %v2369 = vsub.s32 0, %v2368
    %v2370 = vrot.slane %v2292, %v2369
    %v2371 = vlaneseq
    %v2372 = vshrl.u32 %v2371, 7
    %v2373 = vsub.s32 0, %v2372
    %v2374 = vrot.slane %v2306, %v2373
    %v2375 = vlaneseq
    %v2376 = vshrl.u32 %v2375, 7
    %v2377 = vsub.s32 0, %v2376
    %v2378 = vrot.slane %v2314, %v2377
    %v2379 = vlaneseq
    %v2380 = vshrl.u32 %v2379, 7
    %v2381 = vsub.s32 0, %v2380
    %v2382 = vrot.slane %v2316, %v2381
    %v2383 = vlaneseq
    %v2384 = vshrl.u32 %v2383, 7
    %v2385 = vsub.s32 0, %v2384
    %v2386 = vrot.slane %v2299, %v2385
    %v2387 = vlaneseq
    %v2388 = vshrl.u32 %v2387, 7
    %v2389 = vsub.s32 0, %v2388
    %v2390 = vrot.slane %v2313, %v2389
    %v2391 = vlaneseq
    %v2392 = vshrl.u32 %v2391, 7
    %v2393 = vsub.s32 0, %v2392
    %v2394 = vrot.slane %v2315, %v2393
    %v2395 = vlaneseq
    %v2396 = vshrl.u32 %v2395, 7
    %v2397 = vsub.s32 0, %v2396
    %v2398 = vrot.slane %v2317, %v2397
    %v2399 = vlaneseq
    %v2400 = vshrl.u32 %v2399, 7
    %v2401 = vsub.s32 0, %v2400
    %v2402 = vrot.slane %v2341, %v2401
    %v2403 = vlaneseq
    %v2404 = vshrl.u32 %v2403, 7
    %v2405 = vsub.s32 0, %v2404
    %v2406 = vrot.slane %v2355, %v2405
    %v2407 = vlaneseq
    %v2408 = vshrl.u32 %v2407, 7
    %v2409 = vsub.s32 0, %v2408
    %v2410 = vrot.slane %v2363, %v2409
    %v2411 = vlaneseq
    %v2412 = vshrl.u32 %v2411, 7
    %v2413 = vsub.s32 0, %v2412
    %v2414 = vrot.slane %v2365, %v2413
    %v2415 = vlaneseq
    %v2416 = vshrl.u32 %v2415, 7
    %v2417 = vsub.s32 0, %v2416
    %v2418 = vrot.slane %v2348, %v2417
    %v2419 = vlaneseq
    %v2420 = vshrl.u32 %v2419, 7
    %v2421 = vsub.s32 0, %v2420
    %v2422 = vrot.slane %v2362, %v2421
    %v2423 = vlaneseq
    %v2424 = vshrl.u32 %v2423, 7
    %v2425 = vsub.s32 0, %v2424
    %v2426 = vrot.slane %v2364, %v2425
    %v2427 = vlaneseq
    %v2428 = vshrl.u32 %v2427, 7
    %v2429 = vsub.s32 0, %v2428
    %v2430 = vrot.slane %v2366, %v2429
    %v2447 = vadd.f32 %v2370, %v2257
    %v2448 = vadd.f32 %v2370, %v2263
    %v2449 = vadd.f32 %v2374, %v2257
    %v2450 = vadd.f32 %v2374, %v2263
    %v2451 = vadd.f32 %v2378, %v2257
    %v2452 = vadd.f32 %v2378, %v2263
    %v2453 = vadd.f32 %v2382, %v2257
    %v2454 = vadd.f32 %v2382, %v2263
    %v2455 = vadd.f32 %v2386, %v2257
    %v2456 = vadd.f32 %v2386, %v2263
    %v2457 = vadd.f32 %v2390, %v2257
    %v2458 = vadd.f32 %v2390, %v2263
    %v2459 = vadd.f32 %v2394, %v2257
    %v2460 = vadd.f32 %v2394, %v2263
    %v2461 = vadd.f32 %v2398, %v2257
    %v2462 = vadd.f32 %v2398, %v2263
    %v2463 = vadd.f32 %v2402, %v2257
    %v2464 = vadd.f32 %v2402, %v2263
    %v2465 = vadd.f32 %v2406, %v2257
    %v2466 = vadd.f32 %v2406, %v2263
    %v2467 = vadd.f32 %v2410, %v2257
    %v2468 = vadd.f32 %v2410, %v2263
    %v2469 = vadd.f32 %v2414, %v2257
    %v2470 = vadd.f32 %v2414, %v2263
    %v2471 = vadd.f32 %v2418, %v2257
    %v2472 = vadd.f32 %v2418, %v2263
    %v2473 = vadd.f32 %v2422, %v2257
    %v2474 = vadd.f32 %v2422, %v2263
    %v2475 = vadd.f32 %v2426, %v2257
    %v2476 = vadd.f32 %v2426, %v2263
    %v2477 = vadd.f32 %v2430, %v2257
    %v2478 = vadd.f32 %v2430, %v2263
    %v2479 = vmul.f32 %v2447, 0.2
    %v2480 = vmul.f32 %v2448, 0.2
    %v2481 = vmul.f32 %v2449, 0.2
    %v2482 = vmul.f32 %v2450, 0.2
    %v2483 = vmul.f32 %v2451, 0.2
    %v2484 = vmul.f32 %v2452, 0.2
    %v2485 = vmul.f32 %v2453, 0.2
    %v2486 = vmul.f32 %v2454, 0.2
    %v2487 = vmul.f32 %v2455, 0.2
    %v2488 = vmul.f32 %v2456, 0.2
    %v2489 = vmul.f32 %v2457, 0.2
    %v2490 = vmul.f32 %v2458, 0.2
    %v2491 = vmul.f32 %v2459, 0.2
    %v2492 = vmul.f32 %v2460, 0.2
    %v2493 = vmul.f32 %v2461, 0.2
    %v2494 = vmul.f32 %v2462, 0.2
    %v2495 = vmul.f32 %v2463, 0.2
    %v2496 = vmul.f32 %v2464, 0.2
    %v2497 = vmul.f32 %v2465, 0.2
    %v2498 = vmul.f32 %v2466, 0.2
    %v2499 = vmul.f32 %v2467, 0.2
    %v2500 = vmul.f32 %v2468, 0.2
    %v2501 = vmul.f32 %v2469, 0.2
    %v2502 = vmul.f32 %v2470, 0.2
    %v2503 = vmul.f32 %v2471, 0.2
    %v2504 = vmul.f32 %v2472, 0.2
    %v2505 = vmul.f32 %v2473, 0.2
    %v2506 = vmul.f32 %v2474, 0.2
    %v2507 = vmul.f32 %v2475, 0.2
    %v2508 = vmul.f32 %v2476, 0.2
    %v2509 = vmul.f32 %v2477, 0.2
    %v2510 = vmul.f32 %v2478, 0.2
    %v2511 = vmax.f32 %v2447, %v2479
    %v2512 = vmax.f32 %v2448, %v2480
    %v2513 = vmax.f32 %v2449, %v2481
    %v2514 = vmax.f32 %v2450, %v2482
    %v2515 = vmax.f32 %v2451, %v2483
    %v2516 = vmax.f32 %v2452, %v2484
    %v2517 = vmax.f32 %v2453, %v2485
    %v2518 = vmax.f32 %v2454, %v2486
    %v2519 = vmax.f32 %v2455, %v2487
    %v2520 = vmax.f32 %v2456, %v2488
    %v2521 = vmax.f32 %v2457, %v2489
    %v2522 = vmax.f32 %v2458, %v2490
    %v2523 = vmax.f32 %v2459, %v2491
    %v2524 = vmax.f32 %v2460, %v2492
    %v2525 = vmax.f32 %v2461, %v2493
    %v2526 = vmax.f32 %v2462, %v2494
    %v2527 = vmax.f32 %v2463, %v2495
    %v2528 = vmax.f32 %v2464, %v2496
    %v2529 = vmax.f32 %v2465, %v2497
    %v2530 = vmax.f32 %v2466, %v2498
    %v2531 = vmax.f32 %v2467, %v2499
    %v2532 = vmax.f32 %v2468, %v2500
    %v2533 = vmax.f32 %v2469, %v2501
    %v2534 = vmax.f32 %v2470, %v2502
    %v2535 = vmax.f32 %v2471, %v2503
    %v2536 = vmax.f32 %v2472, %v2504
    %v2537 = vmax.f32 %v2473, %v2505
    %v2538 = vmax.f32 %v2474, %v2506
    %v2539 = vmax.f32 %v2475, %v2507
    %v2540 = vmax.f32 %v2476, %v2508
    %v2541 = vmax.f32 %v2477, %v2509
    %v2542 = vmax.f32 %v2478, %v2510
    %s2543 = scalar_lea.vmem %s5, 1
    %v2544 = vld [vmem:[%s2543] sm:$0x1]
    %v2546 = vlaneseq
    %v2547 = vshrl.u32 %v2546, 7
    %v2548 = vsub.s32 0, %v2547
    %v2549 = vrot.slane %v2544, %v2548
    %v2551 = vmul.f32 %v2511, %v2549
    %v2552 = vmul.f32 %v2512, %v2549
    %v2553 = vmul.f32 %v2513, %v2549
    %v2554 = vmul.f32 %v2514, %v2549
    %v2555 = vmul.f32 %v2515, %v2549
    %v2556 = vmul.f32 %v2516, %v2549
    %v2557 = vmul.f32 %v2517, %v2549
    %v2558 = vmul.f32 %v2518, %v2549
    %v2559 = vmul.f32 %v2519, %v2549
    %v2560 = vmul.f32 %v2520, %v2549
    %v2561 = vmul.f32 %v2521, %v2549
    %v2562 = vmul.f32 %v2522, %v2549
    %v2563 = vmul.f32 %v2523, %v2549
    %v2564 = vmul.f32 %v2524, %v2549
    %v2565 = vmul.f32 %v2525, %v2549
    %v2566 = vmul.f32 %v2526, %v2549
    %v2567 = vmul.f32 %v2527, %v2549
    %v2568 = vmul.f32 %v2528, %v2549
    %v2569 = vmul.f32 %v2529, %v2549
    %v2570 = vmul.f32 %v2530, %v2549
    %v2571 = vmul.f32 %v2531, %v2549
    %v2572 = vmul.f32 %v2532, %v2549
    %v2573 = vmul.f32 %v2533, %v2549
    %v2574 = vmul.f32 %v2534, %v2549
    %v2575 = vmul.f32 %v2535, %v2549
    %v2576 = vmul.f32 %v2536, %v2549
    %v2577 = vmul.f32 %v2537, %v2549
    %v2578 = vmul.f32 %v2538, %v2549
    %v2579 = vmul.f32 %v2539, %v2549
    %v2580 = vmul.f32 %v2540, %v2549
    %v2581 = vmul.f32 %v2541, %v2549
    %v2582 = vmul.f32 %v2542, %v2549
    %2583 = vadd.xlane.f32.xlu0 %v2551
    %v2584 = vpop.xlane.xlu0 %2583
    %2585 = vadd.xlane.f32.xlu0 %v2552
    %v2586 = vpop.xlane.xlu0 %2585
    %2587 = vadd.xlane.f32.xlu0 %v2553
    %v2588 = vpop.xlane.xlu0 %2587
    %2589 = vadd.xlane.f32.xlu0 %v2554
    %v2590 = vpop.xlane.xlu0 %2589
    %2591 = vadd.xlane.f32.xlu0 %v2555
    %v2592 = vpop.xlane.xlu0 %2591
    %2593 = vadd.xlane.f32.xlu0 %v2556
    %v2594 = vpop.xlane.xlu0 %2593
    %2595 = vadd.xlane.f32.xlu0 %v2557
    %v2596 = vpop.xlane.xlu0 %2595
    %2597 = vadd.xlane.f32.xlu0 %v2558
    %v2598 = vpop.xlane.xlu0 %2597
    %2599 = vadd.xlane.f32.xlu0 %v2559
    %v2600 = vpop.xlane.xlu0 %2599
    %2601 = vadd.xlane.f32.xlu0 %v2560
    %v2602 = vpop.xlane.xlu0 %2601
    %2603 = vadd.xlane.f32.xlu0 %v2561
    %v2604 = vpop.xlane.xlu0 %2603
    %2605 = vadd.xlane.f32.xlu0 %v2562
    %v2606 = vpop.xlane.xlu0 %2605
    %2607 = vadd.xlane.f32.xlu0 %v2563
    %v2608 = vpop.xlane.xlu0 %2607
    %2609 = vadd.xlane.f32.xlu0 %v2564
    %v2610 = vpop.xlane.xlu0 %2609
    %2611 = vadd.xlane.f32.xlu0 %v2565
    %v2612 = vpop.xlane.xlu0 %2611
    %2613 = vadd.xlane.f32.xlu0 %v2566
    %v2614 = vpop.xlane.xlu0 %2613
    %2615 = vadd.xlane.f32.xlu0 %v2567
    %v2616 = vpop.xlane.xlu0 %2615
    %2617 = vadd.xlane.f32.xlu0 %v2568
    %v2618 = vpop.xlane.xlu0 %2617
    %2619 = vadd.xlane.f32.xlu0 %v2569
    %v2620 = vpop.xlane.xlu0 %2619
    %2621 = vadd.xlane.f32.xlu0 %v2570
    %v2622 = vpop.xlane.xlu0 %2621
    %2623 = vadd.xlane.f32.xlu0 %v2571
    %v2624 = vpop.xlane.xlu0 %2623
    %2625 = vadd.xlane.f32.xlu0 %v2572
    %v2626 = vpop.xlane.xlu0 %2625
    %2627 = vadd.xlane.f32.xlu0 %v2573
    %v2628 = vpop.xlane.xlu0 %2627
    %2629 = vadd.xlane.f32.xlu0 %v2574
    %v2630 = vpop.xlane.xlu0 %2629
    %2631 = vadd.xlane.f32.xlu0 %v2575
    %v2632 = vpop.xlane.xlu0 %2631
    %2633 = vadd.xlane.f32.xlu0 %v2576
    %v2634 = vpop.xlane.xlu0 %2633
    %2635 = vadd.xlane.f32.xlu0 %v2577
    %v2636 = vpop.xlane.xlu0 %2635
    %2637 = vadd.xlane.f32.xlu0 %v2578
    %v2638 = vpop.xlane.xlu0 %2637
    %2639 = vadd.xlane.f32.xlu0 %v2579
    %v2640 = vpop.xlane.xlu0 %2639
    %2641 = vadd.xlane.f32.xlu0 %v2580
    %v2642 = vpop.xlane.xlu0 %2641
    %2643 = vadd.xlane.f32.xlu0 %v2581
    %v2644 = vpop.xlane.xlu0 %2643
    %2645 = vadd.xlane.f32.xlu0 %v2582
    %v2646 = vpop.xlane.xlu0 %2645
    %v2647 = vadd.f32 %v2584, %v578
    %v2648 = vadd.f32 %v2586, %v582
    %v2649 = vadd.f32 %v2588, %v589
    %v2650 = vadd.f32 %v2590, %v593
    %v2651 = vadd.f32 %v2592, %v600
    %v2652 = vadd.f32 %v2594, %v604
    %v2653 = vadd.f32 %v2596, %v611
    %v2654 = vadd.f32 %v2598, %v615
    %v2655 = vadd.f32 %v2600, %v622
    %v2656 = vadd.f32 %v2602, %v626
    %v2657 = vadd.f32 %v2604, %v633
    %v2658 = vadd.f32 %v2606, %v637
    %v2659 = vadd.f32 %v2608, %v644
    %v2660 = vadd.f32 %v2610, %v648
    %v2661 = vadd.f32 %v2612, %v655
    %v2662 = vadd.f32 %v2614, %v659
    %v2663 = vadd.f32 %v2616, %v666
    %v2664 = vadd.f32 %v2618, %v670
    %v2665 = vadd.f32 %v2620, %v677
    %v2666 = vadd.f32 %v2622, %v681
    %v2667 = vadd.f32 %v2624, %v688
    %v2668 = vadd.f32 %v2626, %v692
    %v2669 = vadd.f32 %v2628, %v699
    %v2670 = vadd.f32 %v2630, %v703
    %v2671 = vadd.f32 %v2632, %v710
    %v2672 = vadd.f32 %v2634, %v714
    %v2673 = vadd.f32 %v2636, %v721
    %v2674 = vadd.f32 %v2638, %v725
    %v2675 = vadd.f32 %v2640, %v732
    %v2676 = vadd.f32 %v2642, %v736
    %v2677 = vadd.f32 %v2644, %v743
    %v2678 = vadd.f32 %v2646, %v747
    %2711 = vset.pattern.permute.xlu0 0
    %2712 = vperm.xlu0 %2711, %v2647
    %v2713 = vpop.permute.xlu0 %2712
    %2714 = vset.pattern.permute.xlu0 0
    %2715 = vperm.xlu0 %2714, %v2648
    %v2716 = vpop.permute.xlu0 %2715
    %2717 = vset.pattern.permute.xlu0 0
    %2718 = vperm.xlu0 %2717, %v2649
    %v2719 = vpop.permute.xlu0 %2718
    %2720 = vset.pattern.permute.xlu0 0
    %2721 = vperm.xlu0 %2720, %v2650
    %v2722 = vpop.permute.xlu0 %2721
    %2723 = vset.pattern.permute.xlu0 0
    %2724 = vperm.xlu0 %2723, %v2651
    %v2725 = vpop.permute.xlu0 %2724
    %2726 = vset.pattern.permute.xlu0 0
    %2727 = vperm.xlu0 %2726, %v2652
    %v2728 = vpop.permute.xlu0 %2727
    %2729 = vset.pattern.permute.xlu0 0
    %2730 = vperm.xlu0 %2729, %v2653
    %v2731 = vpop.permute.xlu0 %2730
    %2732 = vset.pattern.permute.xlu0 0
    %2733 = vperm.xlu0 %2732, %v2654
    %v2734 = vpop.permute.xlu0 %2733
    %2735 = vset.pattern.permute.xlu0 0
    %2736 = vperm.xlu0 %2735, %v2655
    %v2737 = vpop.permute.xlu0 %2736
    %2738 = vset.pattern.permute.xlu0 0
    %2739 = vperm.xlu0 %2738, %v2656
    %v2740 = vpop.permute.xlu0 %2739
    %2741 = vset.pattern.permute.xlu0 0
    %2742 = vperm.xlu0 %2741, %v2657
    %v2743 = vpop.permute.xlu0 %2742
    %2744 = vset.pattern.permute.xlu0 0
    %2745 = vperm.xlu0 %2744, %v2658
    %v2746 = vpop.permute.xlu0 %2745
    %2747 = vset.pattern.permute.xlu0 0
    %2748 = vperm.xlu0 %2747, %v2659
    %v2749 = vpop.permute.xlu0 %2748
    %2750 = vset.pattern.permute.xlu0 0
    %2751 = vperm.xlu0 %2750, %v2660
    %v2752 = vpop.permute.xlu0 %2751
    %2753 = vset.pattern.permute.xlu0 0
    %2754 = vperm.xlu0 %2753, %v2661
    %v2755 = vpop.permute.xlu0 %2754
    %2756 = vset.pattern.permute.xlu0 0
    %2757 = vperm.xlu0 %2756, %v2662
    %v2758 = vpop.permute.xlu0 %2757
    %2759 = vset.pattern.permute.xlu0 0
    %2760 = vperm.xlu0 %2759, %v2663
    %v2761 = vpop.permute.xlu0 %2760
    %2762 = vset.pattern.permute.xlu0 0
    %2763 = vperm.xlu0 %2762, %v2664
    %v2764 = vpop.permute.xlu0 %2763
    %2765 = vset.pattern.permute.xlu0 0
    %2766 = vperm.xlu0 %2765, %v2665
    %v2767 = vpop.permute.xlu0 %2766
    %2768 = vset.pattern.permute.xlu0 0
    %2769 = vperm.xlu0 %2768, %v2666
    %v2770 = vpop.permute.xlu0 %2769
    %2771 = vset.pattern.permute.xlu0 0
    %2772 = vperm.xlu0 %2771, %v2667
    %v2773 = vpop.permute.xlu0 %2772
    %2774 = vset.pattern.permute.xlu0 0
    %2775 = vperm.xlu0 %2774, %v2668
    %v2776 = vpop.permute.xlu0 %2775
    %2777 = vset.pattern.permute.xlu0 0
    %2778 = vperm.xlu0 %2777, %v2669
    %v2779 = vpop.permute.xlu0 %2778
    %2780 = vset.pattern.permute.xlu0 0
    %2781 = vperm.xlu0 %2780, %v2670
    %v2782 = vpop.permute.xlu0 %2781
    %2783 = vset.pattern.permute.xlu0 0
    %2784 = vperm.xlu0 %2783, %v2671
    %v2785 = vpop.permute.xlu0 %2784
    %2786 = vset.pattern.permute.xlu0 0
    %2787 = vperm.xlu0 %2786, %v2672
    %v2788 = vpop.permute.xlu0 %2787
    %2789 = vset.pattern.permute.xlu0 0
    %2790 = vperm.xlu0 %2789, %v2673
    %v2791 = vpop.permute.xlu0 %2790
    %2792 = vset.pattern.permute.xlu0 0
    %2793 = vperm.xlu0 %2792, %v2674
    %v2794 = vpop.permute.xlu0 %2793
    %2795 = vset.pattern.permute.xlu0 0
    %2796 = vperm.xlu0 %2795, %v2675
    %v2797 = vpop.permute.xlu0 %2796
    %2798 = vset.pattern.permute.xlu0 0
    %2799 = vperm.xlu0 %2798, %v2676
    %v2800 = vpop.permute.xlu0 %2799
    %2801 = vset.pattern.permute.xlu0 0
    %2802 = vperm.xlu0 %2801, %v2677
    %v2803 = vpop.permute.xlu0 %2802
    %2804 = vset.pattern.permute.xlu0 0
    %2805 = vperm.xlu0 %2804, %v2678
    %v2806 = vpop.permute.xlu0 %2805
    %v2807 = vlaneseq
    %v2808 = vshrl.u32 %v2807, 7
    %v2809 = vsub.s32 %v941, %v2808
    %v2810 = vrot.slane %v2713, %v2809
    %v2811 = vlaneseq
    %v2812 = vshrl.u32 %v2811, 7
    %v2813 = vsub.s32 %v946, %v2812
    %v2814 = vrot.slane %v2716, %v2813
    %v2815 = vsel %vm951, %v2814, %v2810
    %v2816 = vlaneseq
    %v2817 = vshrl.u32 %v2816, 7
    %v2818 = vsub.s32 %v941, %v2817
    %v2819 = vrot.slane %v2719, %v2818
    %v2820 = vlaneseq
    %v2821 = vshrl.u32 %v2820, 7
    %v2822 = vsub.s32 %v946, %v2821
    %v2823 = vrot.slane %v2722, %v2822
    %v2824 = vsel %vm951, %v2823, %v2819
    %v2825 = vlaneseq
    %v2826 = vshrl.u32 %v2825, 7
    %v2827 = vsub.s32 %v941, %v2826
    %v2828 = vrot.slane %v2725, %v2827
    %v2829 = vlaneseq
    %v2830 = vshrl.u32 %v2829, 7
    %v2831 = vsub.s32 %v946, %v2830
    %v2832 = vrot.slane %v2728, %v2831
    %v2833 = vsel %vm951, %v2832, %v2828
    %v2834 = vlaneseq
    %v2835 = vshrl.u32 %v2834, 7
    %v2836 = vsub.s32 %v941, %v2835
    %v2837 = vrot.slane %v2731, %v2836
    %v2838 = vlaneseq
    %v2839 = vshrl.u32 %v2838, 7
    %v2840 = vsub.s32 %v946, %v2839
    %v2841 = vrot.slane %v2734, %v2840
    %v2842 = vsel %vm951, %v2841, %v2837
    %v2843 = vlaneseq
    %v2844 = vshrl.u32 %v2843, 7
    %v2845 = vsub.s32 %v941, %v2844
    %v2846 = vrot.slane %v2737, %v2845
    %v2847 = vlaneseq
    %v2848 = vshrl.u32 %v2847, 7
    %v2849 = vsub.s32 %v946, %v2848
    %v2850 = vrot.slane %v2740, %v2849
    %v2851 = vsel %vm951, %v2850, %v2846
    %v2852 = vlaneseq
    %v2853 = vshrl.u32 %v2852, 7
    %v2854 = vsub.s32 %v941, %v2853
    %v2855 = vrot.slane %v2743, %v2854
    %v2856 = vlaneseq
    %v2857 = vshrl.u32 %v2856, 7
    %v2858 = vsub.s32 %v946, %v2857
    %v2859 = vrot.slane %v2746, %v2858
    %v2860 = vsel %vm951, %v2859, %v2855
    %v2861 = vlaneseq
    %v2862 = vshrl.u32 %v2861, 7
    %v2863 = vsub.s32 %v941, %v2862
    %v2864 = vrot.slane %v2749, %v2863
    %v2865 = vlaneseq
    %v2866 = vshrl.u32 %v2865, 7
    %v2867 = vsub.s32 %v946, %v2866
    %v2868 = vrot.slane %v2752, %v2867
    %v2869 = vsel %vm951, %v2868, %v2864
    %v2870 = vlaneseq
    %v2871 = vshrl.u32 %v2870, 7
    %v2872 = vsub.s32 %v941, %v2871
    %v2873 = vrot.slane %v2755, %v2872
    %v2874 = vlaneseq
    %v2875 = vshrl.u32 %v2874, 7
    %v2876 = vsub.s32 %v946, %v2875
    %v2877 = vrot.slane %v2758, %v2876
    %v2878 = vsel %vm951, %v2877, %v2873
    %v2879 = vlaneseq
    %v2880 = vshrl.u32 %v2879, 7
    %v2881 = vsub.s32 %v941, %v2880
    %v2882 = vrot.slane %v2761, %v2881
    %v2883 = vlaneseq
    %v2884 = vshrl.u32 %v2883, 7
    %v2885 = vsub.s32 %v946, %v2884
    %v2886 = vrot.slane %v2764, %v2885
    %v2887 = vsel %vm951, %v2886, %v2882
    %v2888 = vlaneseq
    %v2889 = vshrl.u32 %v2888, 7
    %v2890 = vsub.s32 %v941, %v2889
    %v2891 = vrot.slane %v2767, %v2890
    %v2892 = vlaneseq
    %v2893 = vshrl.u32 %v2892, 7
    %v2894 = vsub.s32 %v946, %v2893
    %v2895 = vrot.slane %v2770, %v2894
    %v2896 = vsel %vm951, %v2895, %v2891
    %v2897 = vlaneseq
    %v2898 = vshrl.u32 %v2897, 7
    %v2899 = vsub.s32 %v941, %v2898
    %v2900 = vrot.slane %v2773, %v2899
    %v2901 = vlaneseq
    %v2902 = vshrl.u32 %v2901, 7
    %v2903 = vsub.s32 %v946, %v2902
    %v2904 = vrot.slane %v2776, %v2903
    %v2905 = vsel %vm951, %v2904, %v2900
    %v2906 = vlaneseq
    %v2907 = vshrl.u32 %v2906, 7
    %v2908 = vsub.s32 %v941, %v2907
    %v2909 = vrot.slane %v2779, %v2908
    %v2910 = vlaneseq
    %v2911 = vshrl.u32 %v2910, 7
    %v2912 = vsub.s32 %v946, %v2911
    %v2913 = vrot.slane %v2782, %v2912
    %v2914 = vsel %vm951, %v2913, %v2909
    %v2915 = vlaneseq
    %v2916 = vshrl.u32 %v2915, 7
    %v2917 = vsub.s32 %v941, %v2916
    %v2918 = vrot.slane %v2785, %v2917
    %v2919 = vlaneseq
    %v2920 = vshrl.u32 %v2919, 7
    %v2921 = vsub.s32 %v946, %v2920
    %v2922 = vrot.slane %v2788, %v2921
    %v2923 = vsel %vm951, %v2922, %v2918
    %v2924 = vlaneseq
    %v2925 = vshrl.u32 %v2924, 7
    %v2926 = vsub.s32 %v941, %v2925
    %v2927 = vrot.slane %v2791, %v2926
    %v2928 = vlaneseq
    %v2929 = vshrl.u32 %v2928, 7
    %v2930 = vsub.s32 %v946, %v2929
    %v2931 = vrot.slane %v2794, %v2930
    %v2932 = vsel %vm951, %v2931, %v2927
    %v2933 = vlaneseq
    %v2934 = vshrl.u32 %v2933, 7
    %v2935 = vsub.s32 %v941, %v2934
    %v2936 = vrot.slane %v2797, %v2935
    %v2937 = vlaneseq
    %v2938 = vshrl.u32 %v2937, 7
    %v2939 = vsub.s32 %v946, %v2938
    %v2940 = vrot.slane %v2800, %v2939
    %v2941 = vsel %vm951, %v2940, %v2936
    %v2942 = vlaneseq
    %v2943 = vshrl.u32 %v2942, 7
    %v2944 = vsub.s32 %v941, %v2943
    %v2945 = vrot.slane %v2803, %v2944
    %v2946 = vlaneseq
    %v2947 = vshrl.u32 %v2946, 7
    %v2948 = vsub.s32 %v946, %v2947
    %v2949 = vrot.slane %v2806, %v2948
    %v2950 = vsel %vm951, %v2949, %v2945
    %v2951 = vsel %vm1088, %v2824, %v2815
    %v2952 = vsel %vm1090, %v2833, %v2951
    %v2953 = vsel %vm1092, %v2842, %v2952
    %v2954 = vsel %vm1094, %v2851, %v2953
    %v2955 = vsel %vm1096, %v2860, %v2954
    %v2956 = vsel %vm1098, %v2869, %v2955
    %v2957 = vsel %vm1100, %v2878, %v2956
    %v2958 = vsel %vm1088, %v2896, %v2887
    %v2959 = vsel %vm1090, %v2905, %v2958
    %v2960 = vsel %vm1092, %v2914, %v2959
    %v2961 = vsel %vm1094, %v2923, %v2960
    %v2962 = vsel %vm1096, %v2932, %v2961
    %v2963 = vsel %vm1098, %v2941, %v2962
    %v2964 = vsel %vm1100, %v2950, %v2963
    %v2967 = vsel %vm1111, %v2957, -inf
    %2968 = vmax.xlane.f32.xlu0 %v2967
    %v2969 = vpop.xlane.xlu0 %2968
    %v2970 = vsel %vm1111, %v2964, -inf
    %2971 = vmax.xlane.f32.xlu0 %v2970
    %v2972 = vpop.xlane.xlu0 %2971
    %v2975 = vlaneseq
    %v2976 = vshrl.u32 %v2975, 7
    %v2977 = vsub.s32 0, %v2976
    %v2978 = vrot.slane %v2969, %v2977
    %v2979 = vlaneseq
    %v2980 = vshrl.u32 %v2979, 7
    %v2981 = vsub.s32 1, %v2980
    %v2982 = vrot.slane %v2969, %v2981
    %v2983 = vlaneseq
    %v2984 = vshrl.u32 %v2983, 7
    %v2985 = vsub.s32 2, %v2984
    %v2986 = vrot.slane %v2969, %v2985
    %v2987 = vlaneseq
    %v2988 = vshrl.u32 %v2987, 7
    %v2989 = vsub.s32 3, %v2988
    %v2990 = vrot.slane %v2969, %v2989
    %v2991 = vlaneseq
    %v2992 = vshrl.u32 %v2991, 7
    %v2993 = vsub.s32 4, %v2992
    %v2994 = vrot.slane %v2969, %v2993
    %v2995 = vlaneseq
    %v2996 = vshrl.u32 %v2995, 7
    %v2997 = vsub.s32 5, %v2996
    %v2998 = vrot.slane %v2969, %v2997
    %v2999 = vlaneseq
    %v3000 = vshrl.u32 %v2999, 7
    %v3001 = vsub.s32 6, %v3000
    %v3002 = vrot.slane %v2969, %v3001
    %v3003 = vlaneseq
    %v3004 = vshrl.u32 %v3003, 7
    %v3005 = vsub.s32 7, %v3004
    %v3006 = vrot.slane %v2969, %v3005
    %v3007 = vlaneseq
    %v3008 = vshrl.u32 %v3007, 7
    %v3009 = vsub.s32 0, %v3008
    %v3010 = vrot.slane %v2972, %v3009
    %v3011 = vlaneseq
    %v3012 = vshrl.u32 %v3011, 7
    %v3013 = vsub.s32 1, %v3012
    %v3014 = vrot.slane %v2972, %v3013
    %v3015 = vlaneseq
    %v3016 = vshrl.u32 %v3015, 7
    %v3017 = vsub.s32 2, %v3016
    %v3018 = vrot.slane %v2972, %v3017
    %v3019 = vlaneseq
    %v3020 = vshrl.u32 %v3019, 7
    %v3021 = vsub.s32 3, %v3020
    %v3022 = vrot.slane %v2972, %v3021
    %v3023 = vlaneseq
    %v3024 = vshrl.u32 %v3023, 7
    %v3025 = vsub.s32 4, %v3024
    %v3026 = vrot.slane %v2972, %v3025
    %v3027 = vlaneseq
    %v3028 = vshrl.u32 %v3027, 7
    %v3029 = vsub.s32 5, %v3028
    %v3030 = vrot.slane %v2972, %v3029
    %v3031 = vlaneseq
    %v3032 = vshrl.u32 %v3031, 7
    %v3033 = vsub.s32 6, %v3032
    %v3034 = vrot.slane %v2972, %v3033
    %v3035 = vlaneseq
    %v3036 = vshrl.u32 %v3035, 7
    %v3037 = vsub.s32 7, %v3036
    %v3038 = vrot.slane %v2972, %v3037
    %v3055 = vsub.f32 %v2647, %v2978
    %v3056 = vsub.f32 %v2648, %v2978
    %v3057 = vsub.f32 %v2649, %v2982
    %v3058 = vsub.f32 %v2650, %v2982
    %v3059 = vsub.f32 %v2651, %v2986
    %v3060 = vsub.f32 %v2652, %v2986
    %v3061 = vsub.f32 %v2653, %v2990
    %v3062 = vsub.f32 %v2654, %v2990
    %v3063 = vsub.f32 %v2655, %v2994
    %v3064 = vsub.f32 %v2656, %v2994
    %v3065 = vsub.f32 %v2657, %v2998
    %v3066 = vsub.f32 %v2658, %v2998
    %v3067 = vsub.f32 %v2659, %v3002
    %v3068 = vsub.f32 %v2660, %v3002
    %v3069 = vsub.f32 %v2661, %v3006
    %v3070 = vsub.f32 %v2662, %v3006
    %v3071 = vsub.f32 %v2663, %v3010
    %v3072 = vsub.f32 %v2664, %v3010
    %v3073 = vsub.f32 %v2665, %v3014
    %v3074 = vsub.f32 %v2666, %v3014
    %v3075 = vsub.f32 %v2667, %v3018
    %v3076 = vsub.f32 %v2668, %v3018
    %v3077 = vsub.f32 %v2669, %v3022
    %v3078 = vsub.f32 %v2670, %v3022
    %v3079 = vsub.f32 %v2671, %v3026
    %v3080 = vsub.f32 %v2672, %v3026
    %v3081 = vsub.f32 %v2673, %v3030
    %v3082 = vsub.f32 %v2674, %v3030
    %v3083 = vsub.f32 %v2675, %v3034
    %v3084 = vsub.f32 %v2676, %v3034
    %v3085 = vsub.f32 %v2677, %v3038
    %v3086 = vsub.f32 %v2678, %v3038
    %v3087 = vmul.f32 %v3055, 1.442695
    %v3088 = vpow.pop %v3087
    %v3089 = vmul.f32 %v3056, 1.442695
    %v3090 = vpow.pop %v3089
    %v3091 = vmul.f32 %v3057, 1.442695
    %v3092 = vpow.pop %v3091
    %v3093 = vmul.f32 %v3058, 1.442695
    %v3094 = vpow.pop %v3093
    %v3095 = vmul.f32 %v3059, 1.442695
    %v3096 = vpow.pop %v3095
    %v3097 = vmul.f32 %v3060, 1.442695
    %v3098 = vpow.pop %v3097
    %v3099 = vmul.f32 %v3061, 1.442695
    %v3100 = vpow.pop %v3099
    %v3101 = vmul.f32 %v3062, 1.442695
    %v3102 = vpow.pop %v3101
    %v3103 = vmul.f32 %v3063, 1.442695
    %v3104 = vpow.pop %v3103
    %v3105 = vmul.f32 %v3064, 1.442695
    %v3106 = vpow.pop %v3105
    %v3107 = vmul.f32 %v3065, 1.442695
    %v3108 = vpow.pop %v3107
    %v3109 = vmul.f32 %v3066, 1.442695
    %v3110 = vpow.pop %v3109
    %v3111 = vmul.f32 %v3067, 1.442695
    %v3112 = vpow.pop %v3111
    %v3113 = vmul.f32 %v3068, 1.442695
    %v3114 = vpow.pop %v3113
    %v3115 = vmul.f32 %v3069, 1.442695
    %v3116 = vpow.pop %v3115
    %v3117 = vmul.f32 %v3070, 1.442695
    %v3118 = vpow.pop %v3117
    %v3119 = vmul.f32 %v3071, 1.442695
    %v3120 = vpow.pop %v3119
    %v3121 = vmul.f32 %v3072, 1.442695
    %v3122 = vpow.pop %v3121
    %v3123 = vmul.f32 %v3073, 1.442695
    %v3124 = vpow.pop %v3123
    %v3125 = vmul.f32 %v3074, 1.442695
    %v3126 = vpow.pop %v3125
    %v3127 = vmul.f32 %v3075, 1.442695
    %v3128 = vpow.pop %v3127
    %v3129 = vmul.f32 %v3076, 1.442695
    %v3130 = vpow.pop %v3129
    %v3131 = vmul.f32 %v3077, 1.442695
    %v3132 = vpow.pop %v3131
    %v3133 = vmul.f32 %v3078, 1.442695
    %v3134 = vpow.pop %v3133
    %v3135 = vmul.f32 %v3079, 1.442695
    %v3136 = vpow.pop %v3135
    %v3137 = vmul.f32 %v3080, 1.442695
    %v3138 = vpow.pop %v3137
    %v3139 = vmul.f32 %v3081, 1.442695
    %v3140 = vpow.pop %v3139
    %v3141 = vmul.f32 %v3082, 1.442695
    %v3142 = vpow.pop %v3141
    %v3143 = vmul.f32 %v3083, 1.442695
    %v3144 = vpow.pop %v3143
    %v3145 = vmul.f32 %v3084, 1.442695
    %v3146 = vpow.pop %v3145
    %v3147 = vmul.f32 %v3085, 1.442695
    %v3148 = vpow.pop %v3147
    %v3149 = vmul.f32 %v3086, 1.442695
    %v3150 = vpow.pop %v3149
    %3183 = vset.pattern.permute.xlu0 0
    %3184 = vperm.xlu0 %3183, %v3088
    %v3185 = vpop.permute.xlu0 %3184
    %3186 = vset.pattern.permute.xlu0 0
    %3187 = vperm.xlu0 %3186, %v3090
    %v3188 = vpop.permute.xlu0 %3187
    %3189 = vset.pattern.permute.xlu0 0
    %3190 = vperm.xlu0 %3189, %v3092
    %v3191 = vpop.permute.xlu0 %3190
    %3192 = vset.pattern.permute.xlu0 0
    %3193 = vperm.xlu0 %3192, %v3094
    %v3194 = vpop.permute.xlu0 %3193
    %3195 = vset.pattern.permute.xlu0 0
    %3196 = vperm.xlu0 %3195, %v3096
    %v3197 = vpop.permute.xlu0 %3196
    %3198 = vset.pattern.permute.xlu0 0
    %3199 = vperm.xlu0 %3198, %v3098
    %v3200 = vpop.permute.xlu0 %3199
    %3201 = vset.pattern.permute.xlu0 0
    %3202 = vperm.xlu0 %3201, %v3100
    %v3203 = vpop.permute.xlu0 %3202
    %3204 = vset.pattern.permute.xlu0 0
    %3205 = vperm.xlu0 %3204, %v3102
    %v3206 = vpop.permute.xlu0 %3205
    %3207 = vset.pattern.permute.xlu0 0
    %3208 = vperm.xlu0 %3207, %v3104
    %v3209 = vpop.permute.xlu0 %3208
    %3210 = vset.pattern.permute.xlu0 0
    %3211 = vperm.xlu0 %3210, %v3106
    %v3212 = vpop.permute.xlu0 %3211
    %3213 = vset.pattern.permute.xlu0 0
    %3214 = vperm.xlu0 %3213, %v3108
    %v3215 = vpop.permute.xlu0 %3214
    %3216 = vset.pattern.permute.xlu0 0
    %3217 = vperm.xlu0 %3216, %v3110
    %v3218 = vpop.permute.xlu0 %3217
    %3219 = vset.pattern.permute.xlu0 0
    %3220 = vperm.xlu0 %3219, %v3112
    %v3221 = vpop.permute.xlu0 %3220
    %3222 = vset.pattern.permute.xlu0 0
    %3223 = vperm.xlu0 %3222, %v3114
    %v3224 = vpop.permute.xlu0 %3223
    %3225 = vset.pattern.permute.xlu0 0
    %3226 = vperm.xlu0 %3225, %v3116
    %v3227 = vpop.permute.xlu0 %3226
    %3228 = vset.pattern.permute.xlu0 0
    %3229 = vperm.xlu0 %3228, %v3118
    %v3230 = vpop.permute.xlu0 %3229
    %3231 = vset.pattern.permute.xlu0 0
    %3232 = vperm.xlu0 %3231, %v3120
    %v3233 = vpop.permute.xlu0 %3232
    %3234 = vset.pattern.permute.xlu0 0
    %3235 = vperm.xlu0 %3234, %v3122
    %v3236 = vpop.permute.xlu0 %3235
    %3237 = vset.pattern.permute.xlu0 0
    %3238 = vperm.xlu0 %3237, %v3124
    %v3239 = vpop.permute.xlu0 %3238
    %3240 = vset.pattern.permute.xlu0 0
    %3241 = vperm.xlu0 %3240, %v3126
    %v3242 = vpop.permute.xlu0 %3241
    %3243 = vset.pattern.permute.xlu0 0
    %3244 = vperm.xlu0 %3243, %v3128
    %v3245 = vpop.permute.xlu0 %3244
    %3246 = vset.pattern.permute.xlu0 0
    %3247 = vperm.xlu0 %3246, %v3130
    %v3248 = vpop.permute.xlu0 %3247
    %3249 = vset.pattern.permute.xlu0 0
    %3250 = vperm.xlu0 %3249, %v3132
    %v3251 = vpop.permute.xlu0 %3250
    %3252 = vset.pattern.permute.xlu0 0
    %3253 = vperm.xlu0 %3252, %v3134
    %v3254 = vpop.permute.xlu0 %3253
    %3255 = vset.pattern.permute.xlu0 0
    %3256 = vperm.xlu0 %3255, %v3136
    %v3257 = vpop.permute.xlu0 %3256
    %3258 = vset.pattern.permute.xlu0 0
    %3259 = vperm.xlu0 %3258, %v3138
    %v3260 = vpop.permute.xlu0 %3259
    %3261 = vset.pattern.permute.xlu0 0
    %3262 = vperm.xlu0 %3261, %v3140
    %v3263 = vpop.permute.xlu0 %3262
    %3264 = vset.pattern.permute.xlu0 0
    %3265 = vperm.xlu0 %3264, %v3142
    %v3266 = vpop.permute.xlu0 %3265
    %3267 = vset.pattern.permute.xlu0 0
    %3268 = vperm.xlu0 %3267, %v3144
    %v3269 = vpop.permute.xlu0 %3268
    %3270 = vset.pattern.permute.xlu0 0
    %3271 = vperm.xlu0 %3270, %v3146
    %v3272 = vpop.permute.xlu0 %3271
    %3273 = vset.pattern.permute.xlu0 0
    %3274 = vperm.xlu0 %3273, %v3148
    %v3275 = vpop.permute.xlu0 %3274
    %3276 = vset.pattern.permute.xlu0 0
    %3277 = vperm.xlu0 %3276, %v3150
    %v3278 = vpop.permute.xlu0 %3277
    %v3279 = vlaneseq
    %v3280 = vshrl.u32 %v3279, 7
    %v3281 = vsub.s32 %v941, %v3280
    %v3282 = vrot.slane %v3185, %v3281
    %v3283 = vlaneseq
    %v3284 = vshrl.u32 %v3283, 7
    %v3285 = vsub.s32 %v946, %v3284
    %v3286 = vrot.slane %v3188, %v3285
    %v3287 = vsel %vm951, %v3286, %v3282
    %v3288 = vlaneseq
    %v3289 = vshrl.u32 %v3288, 7
    %v3290 = vsub.s32 %v941, %v3289
    %v3291 = vrot.slane %v3191, %v3290
    %v3292 = vlaneseq
    %v3293 = vshrl.u32 %v3292, 7
    %v3294 = vsub.s32 %v946, %v3293
    %v3295 = vrot.slane %v3194, %v3294
    %v3296 = vsel %vm951, %v3295, %v3291
    %v3297 = vlaneseq
    %v3298 = vshrl.u32 %v3297, 7
    %v3299 = vsub.s32 %v941, %v3298
    %v3300 = vrot.slane %v3197, %v3299
    %v3301 = vlaneseq
    %v3302 = vshrl.u32 %v3301, 7
    %v3303 = vsub.s32 %v946, %v3302
    %v3304 = vrot.slane %v3200, %v3303
    %v3305 = vsel %vm951, %v3304, %v3300
    %v3306 = vlaneseq
    %v3307 = vshrl.u32 %v3306, 7
    %v3308 = vsub.s32 %v941, %v3307
    %v3309 = vrot.slane %v3203, %v3308
    %v3310 = vlaneseq
    %v3311 = vshrl.u32 %v3310, 7
    %v3312 = vsub.s32 %v946, %v3311
    %v3313 = vrot.slane %v3206, %v3312
    %v3314 = vsel %vm951, %v3313, %v3309
    %v3315 = vlaneseq
    %v3316 = vshrl.u32 %v3315, 7
    %v3317 = vsub.s32 %v941, %v3316
    %v3318 = vrot.slane %v3209, %v3317
    %v3319 = vlaneseq
    %v3320 = vshrl.u32 %v3319, 7
    %v3321 = vsub.s32 %v946, %v3320
    %v3322 = vrot.slane %v3212, %v3321
    %v3323 = vsel %vm951, %v3322, %v3318
    %v3324 = vlaneseq
    %v3325 = vshrl.u32 %v3324, 7
    %v3326 = vsub.s32 %v941, %v3325
    %v3327 = vrot.slane %v3215, %v3326
    %v3328 = vlaneseq
    %v3329 = vshrl.u32 %v3328, 7
    %v3330 = vsub.s32 %v946, %v3329
    %v3331 = vrot.slane %v3218, %v3330
    %v3332 = vsel %vm951, %v3331, %v3327
    %v3333 = vlaneseq
    %v3334 = vshrl.u32 %v3333, 7
    %v3335 = vsub.s32 %v941, %v3334
    %v3336 = vrot.slane %v3221, %v3335
    %v3337 = vlaneseq
    %v3338 = vshrl.u32 %v3337, 7
    %v3339 = vsub.s32 %v946, %v3338
    %v3340 = vrot.slane %v3224, %v3339
    %v3341 = vsel %vm951, %v3340, %v3336
    %v3342 = vlaneseq
    %v3343 = vshrl.u32 %v3342, 7
    %v3344 = vsub.s32 %v941, %v3343
    %v3345 = vrot.slane %v3227, %v3344
    %v3346 = vlaneseq
    %v3347 = vshrl.u32 %v3346, 7
    %v3348 = vsub.s32 %v946, %v3347
    %v3349 = vrot.slane %v3230, %v3348
    %v3350 = vsel %vm951, %v3349, %v3345
    %v3351 = vlaneseq
    %v3352 = vshrl.u32 %v3351, 7
    %v3353 = vsub.s32 %v941, %v3352
    %v3354 = vrot.slane %v3233, %v3353
    %v3355 = vlaneseq
    %v3356 = vshrl.u32 %v3355, 7
    %v3357 = vsub.s32 %v946, %v3356
    %v3358 = vrot.slane %v3236, %v3357
    %v3359 = vsel %vm951, %v3358, %v3354
    %v3360 = vlaneseq
    %v3361 = vshrl.u32 %v3360, 7
    %v3362 = vsub.s32 %v941, %v3361
    %v3363 = vrot.slane %v3239, %v3362
    %v3364 = vlaneseq
    %v3365 = vshrl.u32 %v3364, 7
    %v3366 = vsub.s32 %v946, %v3365
    %v3367 = vrot.slane %v3242, %v3366
    %v3368 = vsel %vm951, %v3367, %v3363
    %v3369 = vlaneseq
    %v3370 = vshrl.u32 %v3369, 7
    %v3371 = vsub.s32 %v941, %v3370
    %v3372 = vrot.slane %v3245, %v3371
    %v3373 = vlaneseq
    %v3374 = vshrl.u32 %v3373, 7
    %v3375 = vsub.s32 %v946, %v3374
    %v3376 = vrot.slane %v3248, %v3375
    %v3377 = vsel %vm951, %v3376, %v3372
    %v3378 = vlaneseq
    %v3379 = vshrl.u32 %v3378, 7
    %v3380 = vsub.s32 %v941, %v3379
    %v3381 = vrot.slane %v3251, %v3380
    %v3382 = vlaneseq
    %v3383 = vshrl.u32 %v3382, 7
    %v3384 = vsub.s32 %v946, %v3383
    %v3385 = vrot.slane %v3254, %v3384
    %v3386 = vsel %vm951, %v3385, %v3381
    %v3387 = vlaneseq
    %v3388 = vshrl.u32 %v3387, 7
    %v3389 = vsub.s32 %v941, %v3388
    %v3390 = vrot.slane %v3257, %v3389
    %v3391 = vlaneseq
    %v3392 = vshrl.u32 %v3391, 7
    %v3393 = vsub.s32 %v946, %v3392
    %v3394 = vrot.slane %v3260, %v3393
    %v3395 = vsel %vm951, %v3394, %v3390
    %v3396 = vlaneseq
    %v3397 = vshrl.u32 %v3396, 7
    %v3398 = vsub.s32 %v941, %v3397
    %v3399 = vrot.slane %v3263, %v3398
    %v3400 = vlaneseq
    %v3401 = vshrl.u32 %v3400, 7
    %v3402 = vsub.s32 %v946, %v3401
    %v3403 = vrot.slane %v3266, %v3402
    %v3404 = vsel %vm951, %v3403, %v3399
    %v3405 = vlaneseq
    %v3406 = vshrl.u32 %v3405, 7
    %v3407 = vsub.s32 %v941, %v3406
    %v3408 = vrot.slane %v3269, %v3407
    %v3409 = vlaneseq
    %v3410 = vshrl.u32 %v3409, 7
    %v3411 = vsub.s32 %v946, %v3410
    %v3412 = vrot.slane %v3272, %v3411
    %v3413 = vsel %vm951, %v3412, %v3408
    %v3414 = vlaneseq
    %v3415 = vshrl.u32 %v3414, 7
    %v3416 = vsub.s32 %v941, %v3415
    %v3417 = vrot.slane %v3275, %v3416
    %v3418 = vlaneseq
    %v3419 = vshrl.u32 %v3418, 7
    %v3420 = vsub.s32 %v946, %v3419
    %v3421 = vrot.slane %v3278, %v3420
    %v3422 = vsel %vm951, %v3421, %v3417
    %v3423 = vsel %vm1088, %v3296, %v3287
    %v3424 = vsel %vm1090, %v3305, %v3423
    %v3425 = vsel %vm1092, %v3314, %v3424
    %v3426 = vsel %vm1094, %v3323, %v3425
    %v3427 = vsel %vm1096, %v3332, %v3426
    %v3428 = vsel %vm1098, %v3341, %v3427
    %v3429 = vsel %vm1100, %v3350, %v3428
    %v3430 = vsel %vm1088, %v3368, %v3359
    %v3431 = vsel %vm1090, %v3377, %v3430
    %v3432 = vsel %vm1092, %v3386, %v3431
    %v3433 = vsel %vm1094, %v3395, %v3432
    %v3434 = vsel %vm1096, %v3404, %v3433
    %v3435 = vsel %vm1098, %v3413, %v3434
    %v3436 = vsel %vm1100, %v3422, %v3435
    %v3439 = vsel %vm1111, %v3429, 0.0
    %3440 = vadd.xlane.f32.xlu0 %v3439
    %v3441 = vpop.xlane.xlu0 %3440
    %v3442 = vsel %vm1111, %v3436, 0.0
    %3443 = vadd.xlane.f32.xlu0 %v3442
    %v3444 = vpop.xlane.xlu0 %3443
    %v3445 = vrcp.pop %v3441
    %v3446 = vrcp.pop %v3444
    %v3449 = vlaneseq
    %v3450 = vshrl.u32 %v3449, 7
    %v3451 = vsub.s32 0, %v3450
    %v3452 = vrot.slane %v3445, %v3451
    %v3453 = vlaneseq
    %v3454 = vshrl.u32 %v3453, 7
    %v3455 = vsub.s32 1, %v3454
    %v3456 = vrot.slane %v3445, %v3455
    %v3457 = vlaneseq
    %v3458 = vshrl.u32 %v3457, 7
    %v3459 = vsub.s32 2, %v3458
    %v3460 = vrot.slane %v3445, %v3459
    %v3461 = vlaneseq
    %v3462 = vshrl.u32 %v3461, 7
    %v3463 = vsub.s32 3, %v3462
    %v3464 = vrot.slane %v3445, %v3463
    %v3465 = vlaneseq
    %v3466 = vshrl.u32 %v3465, 7
    %v3467 = vsub.s32 4, %v3466
    %v3468 = vrot.slane %v3445, %v3467
    %v3469 = vlaneseq
    %v3470 = vshrl.u32 %v3469, 7
    %v3471 = vsub.s32 5, %v3470
    %v3472 = vrot.slane %v3445, %v3471
    %v3473 = vlaneseq
    %v3474 = vshrl.u32 %v3473, 7
    %v3475 = vsub.s32 6, %v3474
    %v3476 = vrot.slane %v3445, %v3475
    %v3477 = vlaneseq
    %v3478 = vshrl.u32 %v3477, 7
    %v3479 = vsub.s32 7, %v3478
    %v3480 = vrot.slane %v3445, %v3479
    %v3481 = vlaneseq
    %v3482 = vshrl.u32 %v3481, 7
    %v3483 = vsub.s32 0, %v3482
    %v3484 = vrot.slane %v3446, %v3483
    %v3485 = vlaneseq
    %v3486 = vshrl.u32 %v3485, 7
    %v3487 = vsub.s32 1, %v3486
    %v3488 = vrot.slane %v3446, %v3487
    %v3489 = vlaneseq
    %v3490 = vshrl.u32 %v3489, 7
    %v3491 = vsub.s32 2, %v3490
    %v3492 = vrot.slane %v3446, %v3491
    %v3493 = vlaneseq
    %v3494 = vshrl.u32 %v3493, 7
    %v3495 = vsub.s32 3, %v3494
    %v3496 = vrot.slane %v3446, %v3495
    %v3497 = vlaneseq
    %v3498 = vshrl.u32 %v3497, 7
    %v3499 = vsub.s32 4, %v3498
    %v3500 = vrot.slane %v3446, %v3499
    %v3501 = vlaneseq
    %v3502 = vshrl.u32 %v3501, 7
    %v3503 = vsub.s32 5, %v3502
    %v3504 = vrot.slane %v3446, %v3503
    %v3505 = vlaneseq
    %v3506 = vshrl.u32 %v3505, 7
    %v3507 = vsub.s32 6, %v3506
    %v3508 = vrot.slane %v3446, %v3507
    %v3509 = vlaneseq
    %v3510 = vshrl.u32 %v3509, 7
    %v3511 = vsub.s32 7, %v3510
    %v3512 = vrot.slane %v3446, %v3511
    %v3529 = vmul.f32 %v3088, %v3452
    %v3530 = vmul.f32 %v3090, %v3452
    %v3531 = vmul.f32 %v3092, %v3456
    %v3532 = vmul.f32 %v3094, %v3456
    %v3533 = vmul.f32 %v3096, %v3460
    %v3534 = vmul.f32 %v3098, %v3460
    %v3535 = vmul.f32 %v3100, %v3464
    %v3536 = vmul.f32 %v3102, %v3464
    %v3537 = vmul.f32 %v3104, %v3468
    %v3538 = vmul.f32 %v3106, %v3468
    %v3539 = vmul.f32 %v3108, %v3472
    %v3540 = vmul.f32 %v3110, %v3472
    %v3541 = vmul.f32 %v3112, %v3476
    %v3542 = vmul.f32 %v3114, %v3476
    %v3543 = vmul.f32 %v3116, %v3480
    %v3544 = vmul.f32 %v3118, %v3480
    %v3545 = vmul.f32 %v3120, %v3484
    %v3546 = vmul.f32 %v3122, %v3484
    %v3547 = vmul.f32 %v3124, %v3488
    %v3548 = vmul.f32 %v3126, %v3488
    %v3549 = vmul.f32 %v3128, %v3492
    %v3550 = vmul.f32 %v3130, %v3492
    %v3551 = vmul.f32 %v3132, %v3496
    %v3552 = vmul.f32 %v3134, %v3496
    %v3553 = vmul.f32 %v3136, %v3500
    %v3554 = vmul.f32 %v3138, %v3500
    %v3555 = vmul.f32 %v3140, %v3504
    %v3556 = vmul.f32 %v3142, %v3504
    %v3557 = vmul.f32 %v3144, %v3508
    %v3558 = vmul.f32 %v3146, %v3508
    %v3559 = vmul.f32 %v3148, %v3512
    %v3560 = vmul.f32 %v3150, %v3512
    %s3561 = scalar_lea.vmem %s6, 1
    %v3562 = vld [vmem:[%s3561] sm:$0x1]
    %v3564 = vlaneseq
    %v3565 = vshrl.u32 %v3564, 7
    %v3566 = vsub.s32 0, %v3565
    %v3567 = vrot.slane %v3562, %v3566
    %3601 = vset.pattern.permute.xlu0 0
    %3602 = vperm.xlu0 %3601, %v3529
    %v3603 = vpop.permute.xlu0 %3602
    %3604 = vset.pattern.permute.xlu0 0
    %3605 = vperm.xlu0 %3604, %v3530
    %v3606 = vpop.permute.xlu0 %3605
    %3607 = vset.pattern.permute.xlu0 0
    %3608 = vperm.xlu0 %3607, %v3531
    %v3609 = vpop.permute.xlu0 %3608
    %3610 = vset.pattern.permute.xlu0 0
    %3611 = vperm.xlu0 %3610, %v3532
    %v3612 = vpop.permute.xlu0 %3611
    %3613 = vset.pattern.permute.xlu0 0
    %3614 = vperm.xlu0 %3613, %v3533
    %v3615 = vpop.permute.xlu0 %3614
    %3616 = vset.pattern.permute.xlu0 0
    %3617 = vperm.xlu0 %3616, %v3534
    %v3618 = vpop.permute.xlu0 %3617
    %3619 = vset.pattern.permute.xlu0 0
    %3620 = vperm.xlu0 %3619, %v3535
    %v3621 = vpop.permute.xlu0 %3620
    %3622 = vset.pattern.permute.xlu0 0
    %3623 = vperm.xlu0 %3622, %v3536
    %v3624 = vpop.permute.xlu0 %3623
    %3625 = vset.pattern.permute.xlu0 0
    %3626 = vperm.xlu0 %3625, %v3537
    %v3627 = vpop.permute.xlu0 %3626
    %3628 = vset.pattern.permute.xlu0 0
    %3629 = vperm.xlu0 %3628, %v3538
    %v3630 = vpop.permute.xlu0 %3629
    %3631 = vset.pattern.permute.xlu0 0
    %3632 = vperm.xlu0 %3631, %v3539
    %v3633 = vpop.permute.xlu0 %3632
    %3634 = vset.pattern.permute.xlu0 0
    %3635 = vperm.xlu0 %3634, %v3540
    %v3636 = vpop.permute.xlu0 %3635
    %3637 = vset.pattern.permute.xlu0 0
    %3638 = vperm.xlu0 %3637, %v3541
    %v3639 = vpop.permute.xlu0 %3638
    %3640 = vset.pattern.permute.xlu0 0
    %3641 = vperm.xlu0 %3640, %v3542
    %v3642 = vpop.permute.xlu0 %3641
    %3643 = vset.pattern.permute.xlu0 0
    %3644 = vperm.xlu0 %3643, %v3543
    %v3645 = vpop.permute.xlu0 %3644
    %3646 = vset.pattern.permute.xlu0 0
    %3647 = vperm.xlu0 %3646, %v3544
    %v3648 = vpop.permute.xlu0 %3647
    %3649 = vset.pattern.permute.xlu0 0
    %3650 = vperm.xlu0 %3649, %v3545
    %v3651 = vpop.permute.xlu0 %3650
    %3652 = vset.pattern.permute.xlu0 0
    %3653 = vperm.xlu0 %3652, %v3546
    %v3654 = vpop.permute.xlu0 %3653
    %3655 = vset.pattern.permute.xlu0 0
    %3656 = vperm.xlu0 %3655, %v3547
    %v3657 = vpop.permute.xlu0 %3656
    %3658 = vset.pattern.permute.xlu0 0
    %3659 = vperm.xlu0 %3658, %v3548
    %v3660 = vpop.permute.xlu0 %3659
    %3661 = vset.pattern.permute.xlu0 0
    %3662 = vperm.xlu0 %3661, %v3549
    %v3663 = vpop.permute.xlu0 %3662
    %3664 = vset.pattern.permute.xlu0 0
    %3665 = vperm.xlu0 %3664, %v3550
    %v3666 = vpop.permute.xlu0 %3665
    %3667 = vset.pattern.permute.xlu0 0
    %3668 = vperm.xlu0 %3667, %v3551
    %v3669 = vpop.permute.xlu0 %3668
    %3670 = vset.pattern.permute.xlu0 0
    %3671 = vperm.xlu0 %3670, %v3552
    %v3672 = vpop.permute.xlu0 %3671
    %3673 = vset.pattern.permute.xlu0 0
    %3674 = vperm.xlu0 %3673, %v3553
    %v3675 = vpop.permute.xlu0 %3674
    %3676 = vset.pattern.permute.xlu0 0
    %3677 = vperm.xlu0 %3676, %v3554
    %v3678 = vpop.permute.xlu0 %3677
    %3679 = vset.pattern.permute.xlu0 0
    %3680 = vperm.xlu0 %3679, %v3555
    %v3681 = vpop.permute.xlu0 %3680
    %3682 = vset.pattern.permute.xlu0 0
    %3683 = vperm.xlu0 %3682, %v3556
    %v3684 = vpop.permute.xlu0 %3683
    %3685 = vset.pattern.permute.xlu0 0
    %3686 = vperm.xlu0 %3685, %v3557
    %v3687 = vpop.permute.xlu0 %3686
    %3688 = vset.pattern.permute.xlu0 0
    %3689 = vperm.xlu0 %3688, %v3558
    %v3690 = vpop.permute.xlu0 %3689
    %3691 = vset.pattern.permute.xlu0 0
    %3692 = vperm.xlu0 %3691, %v3559
    %v3693 = vpop.permute.xlu0 %3692
    %3694 = vset.pattern.permute.xlu0 0
    %3695 = vperm.xlu0 %3694, %v3560
    %v3696 = vpop.permute.xlu0 %3695
    %v3697 = vlaneseq
    %v3698 = vshrl.u32 %v3697, 7
    %v3699 = vsub.s32 %v941, %v3698
    %v3700 = vrot.slane %v3603, %v3699
    %v3701 = vlaneseq
    %v3702 = vshrl.u32 %v3701, 7
    %v3703 = vsub.s32 %v946, %v3702
    %v3704 = vrot.slane %v3606, %v3703
    %v3705 = vsel %vm951, %v3704, %v3700
    %v3706 = vlaneseq
    %v3707 = vshrl.u32 %v3706, 7
    %v3708 = vsub.s32 %v941, %v3707
    %v3709 = vrot.slane %v3609, %v3708
    %v3710 = vlaneseq
    %v3711 = vshrl.u32 %v3710, 7
    %v3712 = vsub.s32 %v946, %v3711
    %v3713 = vrot.slane %v3612, %v3712
    %v3714 = vsel %vm951, %v3713, %v3709
    %v3715 = vlaneseq
    %v3716 = vshrl.u32 %v3715, 7
    %v3717 = vsub.s32 %v941, %v3716
    %v3718 = vrot.slane %v3615, %v3717
    %v3719 = vlaneseq
    %v3720 = vshrl.u32 %v3719, 7
    %v3721 = vsub.s32 %v946, %v3720
    %v3722 = vrot.slane %v3618, %v3721
    %v3723 = vsel %vm951, %v3722, %v3718
    %v3724 = vlaneseq
    %v3725 = vshrl.u32 %v3724, 7
    %v3726 = vsub.s32 %v941, %v3725
    %v3727 = vrot.slane %v3621, %v3726
    %v3728 = vlaneseq
    %v3729 = vshrl.u32 %v3728, 7
    %v3730 = vsub.s32 %v946, %v3729
    %v3731 = vrot.slane %v3624, %v3730
    %v3732 = vsel %vm951, %v3731, %v3727
    %v3733 = vlaneseq
    %v3734 = vshrl.u32 %v3733, 7
    %v3735 = vsub.s32 %v941, %v3734
    %v3736 = vrot.slane %v3627, %v3735
    %v3737 = vlaneseq
    %v3738 = vshrl.u32 %v3737, 7
    %v3739 = vsub.s32 %v946, %v3738
    %v3740 = vrot.slane %v3630, %v3739
    %v3741 = vsel %vm951, %v3740, %v3736
    %v3742 = vlaneseq
    %v3743 = vshrl.u32 %v3742, 7
    %v3744 = vsub.s32 %v941, %v3743
    %v3745 = vrot.slane %v3633, %v3744
    %v3746 = vlaneseq
    %v3747 = vshrl.u32 %v3746, 7
    %v3748 = vsub.s32 %v946, %v3747
    %v3749 = vrot.slane %v3636, %v3748
    %v3750 = vsel %vm951, %v3749, %v3745
    %v3751 = vlaneseq
    %v3752 = vshrl.u32 %v3751, 7
    %v3753 = vsub.s32 %v941, %v3752
    %v3754 = vrot.slane %v3639, %v3753
    %v3755 = vlaneseq
    %v3756 = vshrl.u32 %v3755, 7
    %v3757 = vsub.s32 %v946, %v3756
    %v3758 = vrot.slane %v3642, %v3757
    %v3759 = vsel %vm951, %v3758, %v3754
    %v3760 = vlaneseq
    %v3761 = vshrl.u32 %v3760, 7
    %v3762 = vsub.s32 %v941, %v3761
    %v3763 = vrot.slane %v3645, %v3762
    %v3764 = vlaneseq
    %v3765 = vshrl.u32 %v3764, 7
    %v3766 = vsub.s32 %v946, %v3765
    %v3767 = vrot.slane %v3648, %v3766
    %v3768 = vsel %vm951, %v3767, %v3763
    %v3769 = vlaneseq
    %v3770 = vshrl.u32 %v3769, 7
    %v3771 = vsub.s32 %v941, %v3770
    %v3772 = vrot.slane %v3651, %v3771
    %v3773 = vlaneseq
    %v3774 = vshrl.u32 %v3773, 7
    %v3775 = vsub.s32 %v946, %v3774
    %v3776 = vrot.slane %v3654, %v3775
    %v3777 = vsel %vm951, %v3776, %v3772
    %v3778 = vlaneseq
    %v3779 = vshrl.u32 %v3778, 7
    %v3780 = vsub.s32 %v941, %v3779
    %v3781 = vrot.slane %v3657, %v3780
    %v3782 = vlaneseq
    %v3783 = vshrl.u32 %v3782, 7
    %v3784 = vsub.s32 %v946, %v3783
    %v3785 = vrot.slane %v3660, %v3784
    %v3786 = vsel %vm951, %v3785, %v3781
    %v3787 = vlaneseq
    %v3788 = vshrl.u32 %v3787, 7
    %v3789 = vsub.s32 %v941, %v3788
    %v3790 = vrot.slane %v3663, %v3789
    %v3791 = vlaneseq
    %v3792 = vshrl.u32 %v3791, 7
    %v3793 = vsub.s32 %v946, %v3792
    %v3794 = vrot.slane %v3666, %v3793
    %v3795 = vsel %vm951, %v3794, %v3790
    %v3796 = vlaneseq
    %v3797 = vshrl.u32 %v3796, 7
    %v3798 = vsub.s32 %v941, %v3797
    %v3799 = vrot.slane %v3669, %v3798
    %v3800 = vlaneseq
    %v3801 = vshrl.u32 %v3800, 7
    %v3802 = vsub.s32 %v946, %v3801
    %v3803 = vrot.slane %v3672, %v3802
    %v3804 = vsel %vm951, %v3803, %v3799
    %v3805 = vlaneseq
    %v3806 = vshrl.u32 %v3805, 7
    %v3807 = vsub.s32 %v941, %v3806
    %v3808 = vrot.slane %v3675, %v3807
    %v3809 = vlaneseq
    %v3810 = vshrl.u32 %v3809, 7
    %v3811 = vsub.s32 %v946, %v3810
    %v3812 = vrot.slane %v3678, %v3811
    %v3813 = vsel %vm951, %v3812, %v3808
    %v3814 = vlaneseq
    %v3815 = vshrl.u32 %v3814, 7
    %v3816 = vsub.s32 %v941, %v3815
    %v3817 = vrot.slane %v3681, %v3816
    %v3818 = vlaneseq
    %v3819 = vshrl.u32 %v3818, 7
    %v3820 = vsub.s32 %v946, %v3819
    %v3821 = vrot.slane %v3684, %v3820
    %v3822 = vsel %vm951, %v3821, %v3817
    %v3823 = vlaneseq
    %v3824 = vshrl.u32 %v3823, 7
    %v3825 = vsub.s32 %v941, %v3824
    %v3826 = vrot.slane %v3687, %v3825
    %v3827 = vlaneseq
    %v3828 = vshrl.u32 %v3827, 7
    %v3829 = vsub.s32 %v946, %v3828
    %v3830 = vrot.slane %v3690, %v3829
    %v3831 = vsel %vm951, %v3830, %v3826
    %v3832 = vlaneseq
    %v3833 = vshrl.u32 %v3832, 7
    %v3834 = vsub.s32 %v941, %v3833
    %v3835 = vrot.slane %v3693, %v3834
    %v3836 = vlaneseq
    %v3837 = vshrl.u32 %v3836, 7
    %v3838 = vsub.s32 %v946, %v3837
    %v3839 = vrot.slane %v3696, %v3838
    %v3840 = vsel %vm951, %v3839, %v3835
    %v3841 = vsel %vm1088, %v3714, %v3705
    %v3842 = vsel %vm1090, %v3723, %v3841
    %v3843 = vsel %vm1092, %v3732, %v3842
    %v3844 = vsel %vm1094, %v3741, %v3843
    %v3845 = vsel %vm1096, %v3750, %v3844
    %v3846 = vsel %vm1098, %v3759, %v3845
    %v3847 = vsel %vm1100, %v3768, %v3846
    %v3848 = vsel %vm1088, %v3786, %v3777
    %v3849 = vsel %vm1090, %v3795, %v3848
    %v3850 = vsel %vm1092, %v3804, %v3849
    %v3851 = vsel %vm1094, %v3813, %v3850
    %v3852 = vsel %vm1096, %v3822, %v3851
    %v3853 = vsel %vm1098, %v3831, %v3852
    %v3854 = vsel %vm1100, %v3840, %v3853
    %v3855 = vsel %vm1111, %v3847, 0
    %v3857 = vsel %vm1111, %v3854, 0
    %3859 = vmatprep.subr.mxu0 0.0
    %3860 = vmatpush1.msra.mxu0 %v2257
    %3861 = vmatprep.subr.mxu0 0.0
    %3862 = vmatpush1.msra.mxu0 %v2263
    %3863 = vmatprep.subr.mxu0 0.0
    %3864 = vmatpush1.msra.mxu0 0.0
    %3865 = vmatprep.subr.mxu0 0.0
    %3866 = vmatpush1.msra.mxu0 0.0
    %3867 = vmatprep.subr.mxu0 0.0
    %3868 = vmatpush1.msra.mxu0 0.0
    %3869 = vmatprep.subr.mxu0 0.0
    %3870 = vmatpush1.msra.mxu0 0.0
    %3871 = vmatprep.subr.mxu0 0.0
    %3872 = vmatpush1.msra.mxu0 0.0
    %3873 = vmatprep.subr.mxu0 0.0
    %3874 = vmatpush1.msra.mxu0 0.0
    %3875 = vmatprep.subr.mxu0 0.0
    %3876 = vmatpush1.msra.mxu0 0.0
    %3877 = vmatprep.subr.mxu0 0.0
    %3878 = vmatpush1.msra.mxu0 0.0
    %3879 = vmatprep.subr.mxu0 0.0
    %3880 = vmatpush1.msra.mxu0 0.0
    %3881 = vmatprep.subr.mxu0 0.0
    %3882 = vmatpush1.msra.mxu0 0.0
    %3883 = vmatprep.subr.mxu0 0.0
    %3884 = vmatpush1.msra.mxu0 0.0
    %3885 = vmatprep.subr.mxu0 0.0
    %3886 = vmatpush1.msra.mxu0 0.0
    %3887 = vmatprep.subr.mxu0 0.0
    %3888 = vmatpush1.msra.mxu0 0.0
    %3889 = vmatprep.subr.mxu0 0.0
    %3890 = vmatpush1.msra.mxu0 0.0
    %3891 = vmatprep.subr.mxu0 0.0
    %3892 = vmatpush1.msra.mxu0 0.0
    %3893 = vmatprep.subr.mxu0 0.0
    %3894 = vmatpush1.msra.mxu0 0.0
    %3895 = vmatprep.subr.mxu0 0.0
    %3896 = vmatpush1.msra.mxu0 0.0
    %3897 = vmatprep.subr.mxu0 0.0
    %3898 = vmatpush1.msra.mxu0 0.0
    %3899 = vmatprep.subr.mxu0 0.0
    %3900 = vmatpush1.msra.mxu0 0.0
    %3901 = vmatprep.subr.mxu0 0.0
    %3902 = vmatpush1.msra.mxu0 0.0
    %3903 = vmatprep.subr.mxu0 0.0
    %3904 = vmatpush1.msra.mxu0 0.0
    %3905 = vmatprep.subr.mxu0 0.0
    %3906 = vmatpush1.msra.mxu0 0.0
    %3907 = vmatprep.subr.mxu0 0.0
    %3908 = vmatpush1.msra.mxu0 0.0
    %3909 = vmatprep.subr.mxu0 0.0
    %3910 = vmatpush1.msra.mxu0 0.0
    %3911 = vmatprep.subr.mxu0 0.0
    %3912 = vmatpush1.msra.mxu0 0.0
    %3913 = vmatprep.subr.mxu0 0.0
    %3914 = vmatpush1.msra.mxu0 0.0
    %3915 = vmatprep.subr.mxu0 0.0
    %3916 = vmatpush1.msra.mxu0 0.0
    %3917 = vmatprep.subr.mxu0 0.0
    %3918 = vmatpush1.msra.mxu0 0.0
    %3919 = vmatprep.subr.mxu0 0.0
    %3920 = vmatpush1.msra.mxu0 0.0
    %3921 = vmatprep.subr.mxu0 0.0
    %3922 = vmatpush1.msra.mxu0 0.0
    %3923 = vmatprep.mubr.f32.mxu0 0.0
    %3924 = vmatmul.mubr.f32.gmra.mrb[0].mxu0 %v3855
    %v3925 = vpop.f32.mrb[0].mxu0
    %v3926 = vadd.f32 %v3567, %v3925
    %v3927 = vpop.f32.mrb[0].mxu0
    %3928 = vmatprep.mubr.f32.mxu0 0.0
    %3929 = vmatmul.mubr.f32.gmra.mrb[0].mxu0 %v3857
    %v3930 = vpop.f32.mrb[0].mxu0
    %v3931 = vadd.f32 %v3567, %v3930
    %v3932 = vpop.f32.mrb[0].mxu0
    %3933 = vdwg.mxu0
    %v3934 = vmul.f32 %v3926, %v2081
    %v3935 = vmul.f32 %v3931, %v2086
    %v3936 = vadd.f32 %v3934, %v3935
    %v3937 = vrot.slane %v3936, 4
    %v3938 = vadd.f32 %v3936, %v3937
    %v3939 = vrot.slane %v3938, 2
    %v3940 = vadd.f32 %v3938, %v3939
    %v3941 = vrot.slane %v3940, 1
    %v3942 = vadd.f32 %v3940, %v3941
    %v3943 = vmul.f32 %v3942, 0.0625
    %s3944 = scalar_lea.vmem %s9, 1
    %v3945 = vld [vmem:[%s3944] sm:$0x1]
    %v3946 = vmul.f32 %v3943, %v3945
    %v3947 = vlaneseq
    %v3948 = vshrl.u32 %v3947, 7
    %v3949 = vsub.s32 0, %v3948
    %v3950 = vrot.slane %v3946, %v3949
    %v3951 = vsub.f32 %v3926, %v3950
    %v3952 = vsub.f32 %v3931, %v3950
    %v3953 = vmul.f32 %v3951, %v2081
    %v3954 = vmul.f32 %v3952, %v2086
    %v3955 = vmul.f32 %v3953, %v3953
    %v3956 = vmul.f32 %v3954, %v3954
    %v3957 = vadd.f32 %v3955, %v3956
    %v3958 = vrot.slane %v3957, 4
    %v3959 = vadd.f32 %v3957, %v3958
    %v3960 = vrot.slane %v3959, 2
    %v3961 = vadd.f32 %v3959, %v3960
    %v3962 = vrot.slane %v3961, 1
    %v3963 = vadd.f32 %v3961, %v3962
    %v3964 = vmul.f32 %v3963, 0.0625
    %v3965 = vadd.f32 %v3964, 1e-05
    %v3966 = vrsqrt.pop %v3965
    %s3967 = scalar_lea.vmem %s7, 1
    %v3968 = vld [vmem:[%s3967] sm:$0x1]
    %v3970 = vlaneseq
    %v3971 = vshrl.u32 %v3970, 7
    %v3972 = vsub.s32 0, %v3971
    %v3973 = vrot.slane %v3968, %v3972
    %v3975 = vmul.f32 %v3973, %v3951
    %v3976 = vmul.f32 %v3973, %v3952
    %v3977 = vmul.f32 %v3975, %v3966
    %v3978 = vmul.f32 %v3976, %v3966
    %s3979 = scalar_lea.vmem %s8, 1
    %v3980 = vld [vmem:[%s3979] sm:$0x1]
    %v3982 = vlaneseq
    %v3983 = vshrl.u32 %v3982, 7
    %v3984 = vsub.s32 0, %v3983
    %v3985 = vrot.slane %v3980, %v3984
    %v3987 = vadd.f32 %v3977, %v3985
    %v3988 = vadd.f32 %v3978, %v3985
    %v3989 = vmax.f32 %v3987, 0.0
    %v3990 = vmax.f32 %v3988, 0.0
    %v3991 = vmul.f32 %v3989, %v2081
    %v3992 = vmul.f32 %v3990, %v2086
    %s3993 = scalar_lea.vmem [#allocation5], 512
    %v3994 = vld [vmem:[%s3993] sm:$0xff]
    %v3995 = vld [vmem:[%s3993 + $0x8] sm:$0xff]
    %v3996 = vld [vmem:[%s3993 + $0x10] sm:$0xff]
    %v3997 = vld [vmem:[%s3993 + $0x18] sm:$0xff]
    %v3998 = vld [vmem:[%s3993 + $0x20] sm:$0xff]
    %v3999 = vld [vmem:[%s3993 + $0x28] sm:$0xff]
    %v4000 = vld [vmem:[%s3993 + $0x30] sm:$0xff]
    %v4001 = vld [vmem:[%s3993 + $0x38] sm:$0xff]
    %v4002 = vld [vmem:[%s3993 + $0x40] sm:$0xff]
    %v4003 = vld [vmem:[%s3993 + $0x48] sm:$0xff]
    %v4004 = vld [vmem:[%s3993 + $0x50] sm:$0xff]
    %v4005 = vld [vmem:[%s3993 + $0x58] sm:$0xff]
    %v4006 = vld [vmem:[%s3993 + $0x60] sm:$0xff]
    %v4007 = vld [vmem:[%s3993 + $0x68] sm:$0xff]
    %v4008 = vld [vmem:[%s3993 + $0x70] sm:$0xff]
    %v4009 = vld [vmem:[%s3993 + $0x78] sm:$0xff]
    %v4010 = vld [vmem:[%s3993 + $0x80] sm:$0xff]
    %v4011 = vld [vmem:[%s3993 + $0x88] sm:$0xff]
    %v4012 = vld [vmem:[%s3993 + $0x90] sm:$0xff]
    %v4013 = vld [vmem:[%s3993 + $0x98] sm:$0xff]
    %v4014 = vld [vmem:[%s3993 + $0xa0] sm:$0xff]
    %v4015 = vld [vmem:[%s3993 + $0xa8] sm:$0xff]
    %v4016 = vld [vmem:[%s3993 + $0xb0] sm:$0xff]
    %v4017 = vld [vmem:[%s3993 + $0xb8] sm:$0xff]
    %v4018 = vld [vmem:[%s3993 + $0xc0] sm:$0xff]
    %v4019 = vld [vmem:[%s3993 + $0xc8] sm:$0xff]
    %v4020 = vld [vmem:[%s3993 + $0xd0] sm:$0xff]
    %v4021 = vld [vmem:[%s3993 + $0xd8] sm:$0xff]
    %v4022 = vld [vmem:[%s3993 + $0xe0] sm:$0xff]
    %v4023 = vld [vmem:[%s3993 + $0xe8] sm:$0xff]
    %v4024 = vld [vmem:[%s3993 + $0xf0] sm:$0xff]
    %v4025 = vld [vmem:[%s3993 + $0xf8] sm:$0xff]
    %s4026 = scalar_lea.vmem %s4, 4
    %v4027 = vld [vmem:[%s4026] sm:$0x3]
    %v4029 = vlaneseq
    %v4030 = vshrl.u32 %v4029, 7
    %v4031 = vsub.s32 0, %v4030
    %v4032 = vrot.slane %v4027, %v4031
    %v4033 = vlaneseq
    %v4034 = vshrl.u32 %v4033, 7
    %v4035 = vsub.s32 1, %v4034
    %v4036 = vrot.slane %v4027, %v4035
    %4039 = vmatprep.subr.mxu0 %v3995
    %4040 = vmatpush1.msra.mxu0 %v3994
    %4041 = vmatprep.subr.mxu0 %v3997
    %4042 = vmatpush1.msra.mxu0 %v3996
    %4043 = vmatprep.subr.mxu0 %v3999
    %4044 = vmatpush1.msra.mxu0 %v3998
    %4045 = vmatprep.subr.mxu0 %v4001
    %4046 = vmatpush1.msra.mxu0 %v4000
    %4047 = vmatprep.subr.mxu0 %v4003
    %4048 = vmatpush1.msra.mxu0 %v4002
    %4049 = vmatprep.subr.mxu0 %v4005
    %4050 = vmatpush1.msra.mxu0 %v4004
    %4051 = vmatprep.subr.mxu0 %v4007
    %4052 = vmatpush1.msra.mxu0 %v4006
    %4053 = vmatprep.subr.mxu0 %v4009
    %4054 = vmatpush1.msra.mxu0 %v4008
    %4055 = vmatprep.subr.mxu0 %v4011
    %4056 = vmatpush1.msra.mxu0 %v4010
    %4057 = vmatprep.subr.mxu0 %v4013
    %4058 = vmatpush1.msra.mxu0 %v4012
    %4059 = vmatprep.subr.mxu0 %v4015
    %4060 = vmatpush1.msra.mxu0 %v4014
    %4061 = vmatprep.subr.mxu0 %v4017
    %4062 = vmatpush1.msra.mxu0 %v4016
    %4063 = vmatprep.subr.mxu0 %v4019
    %4064 = vmatpush1.msra.mxu0 %v4018
    %4065 = vmatprep.subr.mxu0 %v4021
    %4066 = vmatpush1.msra.mxu0 %v4020
    %4067 = vmatprep.subr.mxu0 %v4023
    %4068 = vmatpush1.msra.mxu0 %v4022
    %4069 = vmatprep.subr.mxu0 %v4025
    %4070 = vmatpush1.msra.mxu0 %v4024
    %4071 = vmatprep.subr.mxu0 0.0
    %4072 = vmatpush1.msra.mxu0 0.0
    %4073 = vmatprep.subr.mxu0 0.0
    %4074 = vmatpush1.msra.mxu0 0.0
    %4075 = vmatprep.subr.mxu0 0.0
    %4076 = vmatpush1.msra.mxu0 0.0
    %4077 = vmatprep.subr.mxu0 0.0
    %4078 = vmatpush1.msra.mxu0 0.0
    %4079 = vmatprep.subr.mxu0 0.0
    %4080 = vmatpush1.msra.mxu0 0.0
    %4081 = vmatprep.subr.mxu0 0.0
    %4082 = vmatpush1.msra.mxu0 0.0
    %4083 = vmatprep.subr.mxu0 0.0
    %4084 = vmatpush1.msra.mxu0 0.0
    %4085 = vmatprep.subr.mxu0 0.0
    %4086 = vmatpush1.msra.mxu0 0.0
    %4087 = vmatprep.subr.mxu0 0.0
    %4088 = vmatpush1.msra.mxu0 0.0
    %4089 = vmatprep.subr.mxu0 0.0
    %4090 = vmatpush1.msra.mxu0 0.0
    %4091 = vmatprep.subr.mxu0 0.0
    %4092 = vmatpush1.msra.mxu0 0.0
    %4093 = vmatprep.subr.mxu0 0.0
    %4094 = vmatpush1.msra.mxu0 0.0
    %4095 = vmatprep.subr.mxu0 0.0
    %4096 = vmatpush1.msra.mxu0 0.0
    %4097 = vmatprep.subr.mxu0 0.0
    %4098 = vmatpush1.msra.mxu0 0.0
    %4099 = vmatprep.subr.mxu0 0.0
    %4100 = vmatpush1.msra.mxu0 0.0
    %4101 = vmatprep.subr.mxu0 0.0
    %4102 = vmatpush1.msra.mxu0 0.0
    %4103 = vmatprep.mubr.f32.mxu0 0.0
    %4104 = vmatmul.mubr.f32.gmra.mrb[0].mxu0 %v3991
    %v4105 = vpop.f32.mrb[0].mxu0
    %v4106 = vadd.f32 %v4032, %v4105
    %v4107 = vpop.f32.mrb[0].mxu0
    %v4108 = vadd.f32 %v4036, %v4107
    %4109 = vmatprep.mubr.f32.mxu0 0.0
    %4110 = vmatmul.mubr.f32.gmra.mrb[0].mxu0 %v3992
    %v4111 = vpop.f32.mrb[0].mxu0
    %v4112 = vadd.f32 %v4032, %v4111
    %v4113 = vpop.f32.mrb[0].mxu0
    %v4114 = vadd.f32 %v4036, %v4113
    %4115 = vdwg.mxu0
    %v4118 = vcombine.high %v4108, %v4108
    %v4120 = vunpack.c.l.s4 1966171168
    %v4121 = vunpack.c.0.s8 %v4120
    %v4122 = vlaneseq
    %v4123 = vshrl.u32 %v4122, 7
    %v4124 = vsub.s32 %v4121, %v4123
    %v4125 = vrot.slane %v4108, %v4124
    %v4127 = vunpack.c.l.s4 1966171168
    %v4128 = vunpack.c.0.s8 %v4127
    %v4129 = vlaneseq
    %v4130 = vshrl.u32 %v4129, 7
    %v4131 = vsub.s32 %v4128, %v4130
    %v4132 = vrot.slane %v4118, %v4131
    %v4133 = vcombine.high %v4125, %v4125
    %v4134 = vcombine.high %v4132, %v4132
    %v4136 = vunpack.c.l.s4 1966171168
    %v4137 = vunpack.c.0.s8 %v4136
    %v4138 = vlaneseq
    %v4139 = vshrl.u32 %v4138, 7
    %v4140 = vsub.s32 %v4137, %v4139
    %v4141 = vrot.slane %v4125, %v4140
    %v4143 = vunpack.c.l.s4 1966171168
    %v4144 = vunpack.c.0.s8 %v4143
    %v4145 = vlaneseq
    %v4146 = vshrl.u32 %v4145, 7
    %v4147 = vsub.s32 %v4144, %v4146
    %v4148 = vrot.slane %v4132, %v4147
    %v4150 = vunpack.c.l.s4 1966171168
    %v4151 = vunpack.c.0.s8 %v4150
    %v4152 = vlaneseq
    %v4153 = vshrl.u32 %v4152, 7
    %v4154 = vsub.s32 %v4151, %v4153
    %v4155 = vrot.slane %v4133, %v4154
    %v4157 = vunpack.c.l.s4 1966171168
    %v4158 = vunpack.c.0.s8 %v4157
    %v4159 = vlaneseq
    %v4160 = vshrl.u32 %v4159, 7
    %v4161 = vsub.s32 %v4158, %v4160
    %v4162 = vrot.slane %v4134, %v4161
    %v4163 = vcombine.high %v4141, %v4141
    %v4164 = vcombine.high %v4148, %v4148
    %v4165 = vcombine.high %v4155, %v4155
    %v4166 = vcombine.high %v4162, %v4162
    %v4167 = vcombine.high %v4114, %v4114
    %v4169 = vunpack.c.l.s4 1966171168
    %v4170 = vunpack.c.0.s8 %v4169
    %v4171 = vlaneseq
    %v4172 = vshrl.u32 %v4171, 7
    %v4173 = vsub.s32 %v4170, %v4172
    %v4174 = vrot.slane %v4114, %v4173
    %v4176 = vunpack.c.l.s4 1966171168
    %v4177 = vunpack.c.0.s8 %v4176
    %v4178 = vlaneseq
    %v4179 = vshrl.u32 %v4178, 7
    %v4180 = vsub.s32 %v4177, %v4179
    %v4181 = vrot.slane %v4167, %v4180
    %v4182 = vcombine.high %v4174, %v4174
    %v4183 = vcombine.high %v4181, %v4181
    %v4185 = vunpack.c.l.s4 1966171168
    %v4186 = vunpack.c.0.s8 %v4185
    %v4187 = vlaneseq
    %v4188 = vshrl.u32 %v4187, 7
    %v4189 = vsub.s32 %v4186, %v4188
    %v4190 = vrot.slane %v4174, %v4189
    %v4192 = vunpack.c.l.s4 1966171168
    %v4193 = vunpack.c.0.s8 %v4192
    %v4194 = vlaneseq
    %v4195 = vshrl.u32 %v4194, 7
    %v4196 = vsub.s32 %v4193, %v4195
    %v4197 = vrot.slane %v4181, %v4196
    %v4199 = vunpack.c.l.s4 1966171168
    %v4200 = vunpack.c.0.s8 %v4199
    %v4201 = vlaneseq
    %v4202 = vshrl.u32 %v4201, 7
    %v4203 = vsub.s32 %v4200, %v4202
    %v4204 = vrot.slane %v4182, %v4203
    %v4206 = vunpack.c.l.s4 1966171168
    %v4207 = vunpack.c.0.s8 %v4206
    %v4208 = vlaneseq
    %v4209 = vshrl.u32 %v4208, 7
    %v4210 = vsub.s32 %v4207, %v4209
    %v4211 = vrot.slane %v4183, %v4210
    %v4212 = vcombine.high %v4190, %v4190
    %v4213 = vcombine.high %v4197, %v4197
    %v4214 = vcombine.high %v4204, %v4204
    %v4215 = vcombine.high %v4211, %v4211
    %v4216 = vlaneseq
    %v4217 = vshrl.u32 %v4216, 7
    %v4218 = vsub.s32 0, %v4217
    %v4219 = vrot.slane %v4141, %v4218
    %v4220 = vlaneseq
    %v4221 = vshrl.u32 %v4220, 7
    %v4222 = vsub.s32 0, %v4221
    %v4223 = vrot.slane %v4155, %v4222
    %v4224 = vlaneseq
    %v4225 = vshrl.u32 %v4224, 7
    %v4226 = vsub.s32 0, %v4225
    %v4227 = vrot.slane %v4163, %v4226
    %v4228 = vlaneseq
    %v4229 = vshrl.u32 %v4228, 7
    %v4230 = vsub.s32 0, %v4229
    %v4231 = vrot.slane %v4165, %v4230
    %v4232 = vlaneseq
    %v4233 = vshrl.u32 %v4232, 7
    %v4234 = vsub.s32 0, %v4233
    %v4235 = vrot.slane %v4148, %v4234
    %v4236 = vlaneseq
    %v4237 = vshrl.u32 %v4236, 7
    %v4238 = vsub.s32 0, %v4237
    %v4239 = vrot.slane %v4162, %v4238
    %v4240 = vlaneseq
    %v4241 = vshrl.u32 %v4240, 7
    %v4242 = vsub.s32 0, %v4241
    %v4243 = vrot.slane %v4164, %v4242
    %v4244 = vlaneseq
    %v4245 = vshrl.u32 %v4244, 7
    %v4246 = vsub.s32 0, %v4245
    %v4247 = vrot.slane %v4166, %v4246
    %v4248 = vlaneseq
    %v4249 = vshrl.u32 %v4248, 7
    %v4250 = vsub.s32 0, %v4249
    %v4251 = vrot.slane %v4190, %v4250
    %v4252 = vlaneseq
    %v4253 = vshrl.u32 %v4252, 7
    %v4254 = vsub.s32 0, %v4253
    %v4255 = vrot.slane %v4204, %v4254
    %v4256 = vlaneseq
    %v4257 = vshrl.u32 %v4256, 7
    %v4258 = vsub.s32 0, %v4257
    %v4259 = vrot.slane %v4212, %v4258
    %v4260 = vlaneseq
    %v4261 = vshrl.u32 %v4260, 7
    %v4262 = vsub.s32 0, %v4261
    %v4263 = vrot.slane %v4214, %v4262
    %v4264 = vlaneseq
    %v4265 = vshrl.u32 %v4264, 7
    %v4266 = vsub.s32 0, %v4265
    %v4267 = vrot.slane %v4197, %v4266
    %v4268 = vlaneseq
    %v4269 = vshrl.u32 %v4268, 7
    %v4270 = vsub.s32 0, %v4269
    %v4271 = vrot.slane %v4211, %v4270
    %v4272 = vlaneseq
    %v4273 = vshrl.u32 %v4272, 7
    %v4274 = vsub.s32 0, %v4273
    %v4275 = vrot.slane %v4213, %v4274
    %v4276 = vlaneseq
    %v4277 = vshrl.u32 %v4276, 7
    %v4278 = vsub.s32 0, %v4277
    %v4279 = vrot.slane %v4215, %v4278
    %v4296 = vadd.f32 %v4219, %v4106
    %v4297 = vadd.f32 %v4219, %v4112
    %v4298 = vadd.f32 %v4223, %v4106
    %v4299 = vadd.f32 %v4223, %v4112
    %v4300 = vadd.f32 %v4227, %v4106
    %v4301 = vadd.f32 %v4227, %v4112
    %v4302 = vadd.f32 %v4231, %v4106
    %v4303 = vadd.f32 %v4231, %v4112
    %v4304 = vadd.f32 %v4235, %v4106
    %v4305 = vadd.f32 %v4235, %v4112
    %v4306 = vadd.f32 %v4239, %v4106
    %v4307 = vadd.f32 %v4239, %v4112
    %v4308 = vadd.f32 %v4243, %v4106
    %v4309 = vadd.f32 %v4243, %v4112
    %v4310 = vadd.f32 %v4247, %v4106
    %v4311 = vadd.f32 %v4247, %v4112
    %v4312 = vadd.f32 %v4251, %v4106
    %v4313 = vadd.f32 %v4251, %v4112
    %v4314 = vadd.f32 %v4255, %v4106
    %v4315 = vadd.f32 %v4255, %v4112
    %v4316 = vadd.f32 %v4259, %v4106
    %v4317 = vadd.f32 %v4259, %v4112
    %v4318 = vadd.f32 %v4263, %v4106
    %v4319 = vadd.f32 %v4263, %v4112
    %v4320 = vadd.f32 %v4267, %v4106
    %v4321 = vadd.f32 %v4267, %v4112
    %v4322 = vadd.f32 %v4271, %v4106
    %v4323 = vadd.f32 %v4271, %v4112
    %v4324 = vadd.f32 %v4275, %v4106
    %v4325 = vadd.f32 %v4275, %v4112
    %v4326 = vadd.f32 %v4279, %v4106
    %v4327 = vadd.f32 %v4279, %v4112
    %v4328 = vmul.f32 %v4296, 0.2
    %v4329 = vmul.f32 %v4297, 0.2
    %v4330 = vmul.f32 %v4298, 0.2
    %v4331 = vmul.f32 %v4299, 0.2
    %v4332 = vmul.f32 %v4300, 0.2
    %v4333 = vmul.f32 %v4301, 0.2
    %v4334 = vmul.f32 %v4302, 0.2
    %v4335 = vmul.f32 %v4303, 0.2
    %v4336 = vmul.f32 %v4304, 0.2
    %v4337 = vmul.f32 %v4305, 0.2
    %v4338 = vmul.f32 %v4306, 0.2
    %v4339 = vmul.f32 %v4307, 0.2
    %v4340 = vmul.f32 %v4308, 0.2
    %v4341 = vmul.f32 %v4309, 0.2
    %v4342 = vmul.f32 %v4310, 0.2
    %v4343 = vmul.f32 %v4311, 0.2
    %v4344 = vmul.f32 %v4312, 0.2
    %v4345 = vmul.f32 %v4313, 0.2
    %v4346 = vmul.f32 %v4314, 0.2
    %v4347 = vmul.f32 %v4315, 0.2
    %v4348 = vmul.f32 %v4316, 0.2
    %v4349 = vmul.f32 %v4317, 0.2
    %v4350 = vmul.f32 %v4318, 0.2
    %v4351 = vmul.f32 %v4319, 0.2
    %v4352 = vmul.f32 %v4320, 0.2
    %v4353 = vmul.f32 %v4321, 0.2
    %v4354 = vmul.f32 %v4322, 0.2
    %v4355 = vmul.f32 %v4323, 0.2
    %v4356 = vmul.f32 %v4324, 0.2
    %v4357 = vmul.f32 %v4325, 0.2
    %v4358 = vmul.f32 %v4326, 0.2
    %v4359 = vmul.f32 %v4327, 0.2
    %v4360 = vmax.f32 %v4296, %v4328
    %v4361 = vmax.f32 %v4297, %v4329
    %v4362 = vmax.f32 %v4298, %v4330
    %v4363 = vmax.f32 %v4299, %v4331
    %v4364 = vmax.f32 %v4300, %v4332
    %v4365 = vmax.f32 %v4301, %v4333
    %v4366 = vmax.f32 %v4302, %v4334
    %v4367 = vmax.f32 %v4303, %v4335
    %v4368 = vmax.f32 %v4304, %v4336
    %v4369 = vmax.f32 %v4305, %v4337
    %v4370 = vmax.f32 %v4306, %v4338
    %v4371 = vmax.f32 %v4307, %v4339
    %v4372 = vmax.f32 %v4308, %v4340
    %v4373 = vmax.f32 %v4309, %v4341
    %v4374 = vmax.f32 %v4310, %v4342
    %v4375 = vmax.f32 %v4311, %v4343
    %v4376 = vmax.f32 %v4312, %v4344
    %v4377 = vmax.f32 %v4313, %v4345
    %v4378 = vmax.f32 %v4314, %v4346
    %v4379 = vmax.f32 %v4315, %v4347
    %v4380 = vmax.f32 %v4316, %v4348
    %v4381 = vmax.f32 %v4317, %v4349
    %v4382 = vmax.f32 %v4318, %v4350
    %v4383 = vmax.f32 %v4319, %v4351
    %v4384 = vmax.f32 %v4320, %v4352
    %v4385 = vmax.f32 %v4321, %v4353
    %v4386 = vmax.f32 %v4322, %v4354
    %v4387 = vmax.f32 %v4323, %v4355
    %v4388 = vmax.f32 %v4324, %v4356
    %v4389 = vmax.f32 %v4325, %v4357
    %v4390 = vmax.f32 %v4326, %v4358
    %v4391 = vmax.f32 %v4327, %v4359
    %s4392 = scalar_lea.vmem %s5, 2
    %v4393 = vld [vmem:[%s4392] sm:$0x1]
    %v4395 = vlaneseq
    %v4396 = vshrl.u32 %v4395, 7
    %v4397 = vsub.s32 0, %v4396
    %v4398 = vrot.slane %v4393, %v4397
    %v4400 = vmul.f32 %v4360, %v4398
    %v4401 = vmul.f32 %v4361, %v4398
    %v4402 = vmul.f32 %v4362, %v4398
    %v4403 = vmul.f32 %v4363, %v4398
    %v4404 = vmul.f32 %v4364, %v4398
    %v4405 = vmul.f32 %v4365, %v4398
    %v4406 = vmul.f32 %v4366, %v4398
    %v4407 = vmul.f32 %v4367, %v4398
    %v4408 = vmul.f32 %v4368, %v4398
    %v4409 = vmul.f32 %v4369, %v4398
    %v4410 = vmul.f32 %v4370, %v4398
    %v4411 = vmul.f32 %v4371, %v4398
    %v4412 = vmul.f32 %v4372, %v4398
    %v4413 = vmul.f32 %v4373, %v4398
    %v4414 = vmul.f32 %v4374, %v4398
    %v4415 = vmul.f32 %v4375, %v4398
    %v4416 = vmul.f32 %v4376, %v4398
    %v4417 = vmul.f32 %v4377, %v4398
    %v4418 = vmul.f32 %v4378, %v4398
    %v4419 = vmul.f32 %v4379, %v4398
    %v4420 = vmul.f32 %v4380, %v4398
    %v4421 = vmul.f32 %v4381, %v4398
    %v4422 = vmul.f32 %v4382, %v4398
    %v4423 = vmul.f32 %v4383, %v4398
    %v4424 = vmul.f32 %v4384, %v4398
    %v4425 = vmul.f32 %v4385, %v4398
    %v4426 = vmul.f32 %v4386, %v4398
    %v4427 = vmul.f32 %v4387, %v4398
    %v4428 = vmul.f32 %v4388, %v4398
    %v4429 = vmul.f32 %v4389, %v4398
    %v4430 = vmul.f32 %v4390, %v4398
    %v4431 = vmul.f32 %v4391, %v4398
    %4432 = vadd.xlane.f32.xlu0 %v4400
    %v4433 = vpop.xlane.xlu0 %4432
    %4434 = vadd.xlane.f32.xlu0 %v4401
    %v4435 = vpop.xlane.xlu0 %4434
    %4436 = vadd.xlane.f32.xlu0 %v4402
    %v4437 = vpop.xlane.xlu0 %4436
    %4438 = vadd.xlane.f32.xlu0 %v4403
    %v4439 = vpop.xlane.xlu0 %4438
    %4440 = vadd.xlane.f32.xlu0 %v4404
    %v4441 = vpop.xlane.xlu0 %4440
    %4442 = vadd.xlane.f32.xlu0 %v4405
    %v4443 = vpop.xlane.xlu0 %4442
    %4444 = vadd.xlane.f32.xlu0 %v4406
    %v4445 = vpop.xlane.xlu0 %4444
    %4446 = vadd.xlane.f32.xlu0 %v4407
    %v4447 = vpop.xlane.xlu0 %4446
    %4448 = vadd.xlane.f32.xlu0 %v4408
    %v4449 = vpop.xlane.xlu0 %4448
    %4450 = vadd.xlane.f32.xlu0 %v4409
    %v4451 = vpop.xlane.xlu0 %4450
    %4452 = vadd.xlane.f32.xlu0 %v4410
    %v4453 = vpop.xlane.xlu0 %4452
    %4454 = vadd.xlane.f32.xlu0 %v4411
    %v4455 = vpop.xlane.xlu0 %4454
    %4456 = vadd.xlane.f32.xlu0 %v4412
    %v4457 = vpop.xlane.xlu0 %4456
    %4458 = vadd.xlane.f32.xlu0 %v4413
    %v4459 = vpop.xlane.xlu0 %4458
    %4460 = vadd.xlane.f32.xlu0 %v4414
    %v4461 = vpop.xlane.xlu0 %4460
    %4462 = vadd.xlane.f32.xlu0 %v4415
    %v4463 = vpop.xlane.xlu0 %4462
    %4464 = vadd.xlane.f32.xlu0 %v4416
    %v4465 = vpop.xlane.xlu0 %4464
    %4466 = vadd.xlane.f32.xlu0 %v4417
    %v4467 = vpop.xlane.xlu0 %4466
    %4468 = vadd.xlane.f32.xlu0 %v4418
    %v4469 = vpop.xlane.xlu0 %4468
    %4470 = vadd.xlane.f32.xlu0 %v4419
    %v4471 = vpop.xlane.xlu0 %4470
    %4472 = vadd.xlane.f32.xlu0 %v4420
    %v4473 = vpop.xlane.xlu0 %4472
    %4474 = vadd.xlane.f32.xlu0 %v4421
    %v4475 = vpop.xlane.xlu0 %4474
    %4476 = vadd.xlane.f32.xlu0 %v4422
    %v4477 = vpop.xlane.xlu0 %4476
    %4478 = vadd.xlane.f32.xlu0 %v4423
    %v4479 = vpop.xlane.xlu0 %4478
    %4480 = vadd.xlane.f32.xlu0 %v4424
    %v4481 = vpop.xlane.xlu0 %4480
    %4482 = vadd.xlane.f32.xlu0 %v4425
    %v4483 = vpop.xlane.xlu0 %4482
    %4484 = vadd.xlane.f32.xlu0 %v4426
    %v4485 = vpop.xlane.xlu0 %4484
    %4486 = vadd.xlane.f32.xlu0 %v4427
    %v4487 = vpop.xlane.xlu0 %4486
    %4488 = vadd.xlane.f32.xlu0 %v4428
    %v4489 = vpop.xlane.xlu0 %4488
    %4490 = vadd.xlane.f32.xlu0 %v4429
    %v4491 = vpop.xlane.xlu0 %4490
    %4492 = vadd.xlane.f32.xlu0 %v4430
    %v4493 = vpop.xlane.xlu0 %4492
    %4494 = vadd.xlane.f32.xlu0 %v4431
    %v4495 = vpop.xlane.xlu0 %4494
    %v4496 = vadd.f32 %v4433, %v578
    %v4497 = vadd.f32 %v4435, %v582
    %v4498 = vadd.f32 %v4437, %v589
    %v4499 = vadd.f32 %v4439, %v593
    %v4500 = vadd.f32 %v4441, %v600
    %v4501 = vadd.f32 %v4443, %v604
    %v4502 = vadd.f32 %v4445, %v611
    %v4503 = vadd.f32 %v4447, %v615
    %v4504 = vadd.f32 %v4449, %v622
    %v4505 = vadd.f32 %v4451, %v626
    %v4506 = vadd.f32 %v4453, %v633
    %v4507 = vadd.f32 %v4455, %v637
    %v4508 = vadd.f32 %v4457, %v644
    %v4509 = vadd.f32 %v4459, %v648
    %v4510 = vadd.f32 %v4461, %v655
    %v4511 = vadd.f32 %v4463, %v659
    %v4512 = vadd.f32 %v4465, %v666
    %v4513 = vadd.f32 %v4467, %v670
    %v4514 = vadd.f32 %v4469, %v677
    %v4515 = vadd.f32 %v4471, %v681
    %v4516 = vadd.f32 %v4473, %v688
    %v4517 = vadd.f32 %v4475, %v692
    %v4518 = vadd.f32 %v4477, %v699
    %v4519 = vadd.f32 %v4479, %v703
    %v4520 = vadd.f32 %v4481, %v710
    %v4521 = vadd.f32 %v4483, %v714
    %v4522 = vadd.f32 %v4485, %v721
    %v4523 = vadd.f32 %v4487, %v725
    %v4524 = vadd.f32 %v4489, %v732
    %v4525 = vadd.f32 %v4491, %v736
    %v4526 = vadd.f32 %v4493, %v743
    %v4527 = vadd.f32 %v4495, %v747
    %4560 = vset.pattern.permute.xlu0 0
    %4561 = vperm.xlu0 %4560, %v4496
    %v4562 = vpop.permute.xlu0 %4561
    %4563 = vset.pattern.permute.xlu0 0
    %4564 = vperm.xlu0 %4563, %v4497
    %v4565 = vpop.permute.xlu0 %4564
    %4566 = vset.pattern.permute.xlu0 0
    %4567 = vperm.xlu0 %4566, %v4498
    %v4568 = vpop.permute.xlu0 %4567
    %4569 = vset.pattern.permute.xlu0 0
    %4570 = vperm.xlu0 %4569, %v4499
    %v4571 = vpop.permute.xlu0 %4570
    %4572 = vset.pattern.permute.xlu0 0
    %4573 = vperm.xlu0 %4572, %v4500
    %v4574 = vpop.permute.xlu0 %4573
    %4575 = vset.pattern.permute.xlu0 0
    %4576 = vperm.xlu0 %4575, %v4501
    %v4577 = vpop.permute.xlu0 %4576
    %4578 = vset.pattern.permute.xlu0 0
    %4579 = vperm.xlu0 %4578, %v4502
    %v4580 = vpop.permute.xlu0 %4579
    %4581 = vset.pattern.permute.xlu0 0
    %4582 = vperm.xlu0 %4581, %v4503
    %v4583 = vpop.permute.xlu0 %4582
    %4584 = vset.pattern.permute.xlu0 0
    %4585 = vperm.xlu0 %4584, %v4504
    %v4586 = vpop.permute.xlu0 %4585
    %4587 = vset.pattern.permute.xlu0 0
    %4588 = vperm.xlu0 %4587, %v4505
    %v4589 = vpop.permute.xlu0 %4588
    %4590 = vset.pattern.permute.xlu0 0
    %4591 = vperm.xlu0 %4590, %v4506
    %v4592 = vpop.permute.xlu0 %4591
    %4593 = vset.pattern.permute.xlu0 0
    %4594 = vperm.xlu0 %4593, %v4507
    %v4595 = vpop.permute.xlu0 %4594
    %4596 = vset.pattern.permute.xlu0 0
    %4597 = vperm.xlu0 %4596, %v4508
    %v4598 = vpop.permute.xlu0 %4597
    %4599 = vset.pattern.permute.xlu0 0
    %4600 = vperm.xlu0 %4599, %v4509
    %v4601 = vpop.permute.xlu0 %4600
    %4602 = vset.pattern.permute.xlu0 0
    %4603 = vperm.xlu0 %4602, %v4510
    %v4604 = vpop.permute.xlu0 %4603
    %4605 = vset.pattern.permute.xlu0 0
    %4606 = vperm.xlu0 %4605, %v4511
    %v4607 = vpop.permute.xlu0 %4606
    %4608 = vset.pattern.permute.xlu0 0
    %4609 = vperm.xlu0 %4608, %v4512
    %v4610 = vpop.permute.xlu0 %4609
    %4611 = vset.pattern.permute.xlu0 0
    %4612 = vperm.xlu0 %4611, %v4513
    %v4613 = vpop.permute.xlu0 %4612
    %4614 = vset.pattern.permute.xlu0 0
    %4615 = vperm.xlu0 %4614, %v4514
    %v4616 = vpop.permute.xlu0 %4615
    %4617 = vset.pattern.permute.xlu0 0
    %4618 = vperm.xlu0 %4617, %v4515
    %v4619 = vpop.permute.xlu0 %4618
    %4620 = vset.pattern.permute.xlu0 0
    %4621 = vperm.xlu0 %4620, %v4516
    %v4622 = vpop.permute.xlu0 %4621
    %4623 = vset.pattern.permute.xlu0 0
    %4624 = vperm.xlu0 %4623, %v4517
    %v4625 = vpop.permute.xlu0 %4624
    %4626 = vset.pattern.permute.xlu0 0
    %4627 = vperm.xlu0 %4626, %v4518
    %v4628 = vpop.permute.xlu0 %4627
    %4629 = vset.pattern.permute.xlu0 0
    %4630 = vperm.xlu0 %4629, %v4519
    %v4631 = vpop.permute.xlu0 %4630
    %4632 = vset.pattern.permute.xlu0 0
    %4633 = vperm.xlu0 %4632, %v4520
    %v4634 = vpop.permute.xlu0 %4633
    %4635 = vset.pattern.permute.xlu0 0
    %4636 = vperm.xlu0 %4635, %v4521
    %v4637 = vpop.permute.xlu0 %4636
    %4638 = vset.pattern.permute.xlu0 0
    %4639 = vperm.xlu0 %4638, %v4522
    %v4640 = vpop.permute.xlu0 %4639
    %4641 = vset.pattern.permute.xlu0 0
    %4642 = vperm.xlu0 %4641, %v4523
    %v4643 = vpop.permute.xlu0 %4642
    %4644 = vset.pattern.permute.xlu0 0
    %4645 = vperm.xlu0 %4644, %v4524
    %v4646 = vpop.permute.xlu0 %4645
    %4647 = vset.pattern.permute.xlu0 0
    %4648 = vperm.xlu0 %4647, %v4525
    %v4649 = vpop.permute.xlu0 %4648
    %4650 = vset.pattern.permute.xlu0 0
    %4651 = vperm.xlu0 %4650, %v4526
    %v4652 = vpop.permute.xlu0 %4651
    %4653 = vset.pattern.permute.xlu0 0
    %4654 = vperm.xlu0 %4653, %v4527
    %v4655 = vpop.permute.xlu0 %4654
    %v4656 = vlaneseq
    %v4657 = vshrl.u32 %v4656, 7
    %v4658 = vsub.s32 %v941, %v4657
    %v4659 = vrot.slane %v4562, %v4658
    %v4660 = vlaneseq
    %v4661 = vshrl.u32 %v4660, 7
    %v4662 = vsub.s32 %v946, %v4661
    %v4663 = vrot.slane %v4565, %v4662
    %v4664 = vsel %vm951, %v4663, %v4659
    %v4665 = vlaneseq
    %v4666 = vshrl.u32 %v4665, 7
    %v4667 = vsub.s32 %v941, %v4666
    %v4668 = vrot.slane %v4568, %v4667
    %v4669 = vlaneseq
    %v4670 = vshrl.u32 %v4669, 7
    %v4671 = vsub.s32 %v946, %v4670
    %v4672 = vrot.slane %v4571, %v4671
    %v4673 = vsel %vm951, %v4672, %v4668
    %v4674 = vlaneseq
    %v4675 = vshrl.u32 %v4674, 7
    %v4676 = vsub.s32 %v941, %v4675
    %v4677 = vrot.slane %v4574, %v4676
    %v4678 = vlaneseq
    %v4679 = vshrl.u32 %v4678, 7
    %v4680 = vsub.s32 %v946, %v4679
    %v4681 = vrot.slane %v4577, %v4680
    %v4682 = vsel %vm951, %v4681, %v4677
    %v4683 = vlaneseq
    %v4684 = vshrl.u32 %v4683, 7
    %v4685 = vsub.s32 %v941, %v4684
    %v4686 = vrot.slane %v4580, %v4685
    %v4687 = vlaneseq
    %v4688 = vshrl.u32 %v4687, 7
    %v4689 = vsub.s32 %v946, %v4688
    %v4690 = vrot.slane %v4583, %v4689
    %v4691 = vsel %vm951, %v4690, %v4686
    %v4692 = vlaneseq
    %v4693 = vshrl.u32 %v4692, 7
    %v4694 = vsub.s32 %v941, %v4693
    %v4695 = vrot.slane %v4586, %v4694
    %v4696 = vlaneseq
    %v4697 = vshrl.u32 %v4696, 7
    %v4698 = vsub.s32 %v946, %v4697
    %v4699 = vrot.slane %v4589, %v4698
    %v4700 = vsel %vm951, %v4699, %v4695
    %v4701 = vlaneseq
    %v4702 = vshrl.u32 %v4701, 7
    %v4703 = vsub.s32 %v941, %v4702
    %v4704 = vrot.slane %v4592, %v4703
    %v4705 = vlaneseq
    %v4706 = vshrl.u32 %v4705, 7
    %v4707 = vsub.s32 %v946, %v4706
    %v4708 = vrot.slane %v4595, %v4707
    %v4709 = vsel %vm951, %v4708, %v4704
    %v4710 = vlaneseq
    %v4711 = vshrl.u32 %v4710, 7
    %v4712 = vsub.s32 %v941, %v4711
    %v4713 = vrot.slane %v4598, %v4712
    %v4714 = vlaneseq
    %v4715 = vshrl.u32 %v4714, 7
    %v4716 = vsub.s32 %v946, %v4715
    %v4717 = vrot.slane %v4601, %v4716
    %v4718 = vsel %vm951, %v4717, %v4713
    %v4719 = vlaneseq
    %v4720 = vshrl.u32 %v4719, 7
    %v4721 = vsub.s32 %v941, %v4720
    %v4722 = vrot.slane %v4604, %v4721
    %v4723 = vlaneseq
    %v4724 = vshrl.u32 %v4723, 7
    %v4725 = vsub.s32 %v946, %v4724
    %v4726 = vrot.slane %v4607, %v4725
    %v4727 = vsel %vm951, %v4726, %v4722
    %v4728 = vlaneseq
    %v4729 = vshrl.u32 %v4728, 7
    %v4730 = vsub.s32 %v941, %v4729
    %v4731 = vrot.slane %v4610, %v4730
    %v4732 = vlaneseq
    %v4733 = vshrl.u32 %v4732, 7
    %v4734 = vsub.s32 %v946, %v4733
    %v4735 = vrot.slane %v4613, %v4734
    %v4736 = vsel %vm951, %v4735, %v4731
    %v4737 = vlaneseq
    %v4738 = vshrl.u32 %v4737, 7
    %v4739 = vsub.s32 %v941, %v4738
    %v4740 = vrot.slane %v4616, %v4739
    %v4741 = vlaneseq
    %v4742 = vshrl.u32 %v4741, 7
    %v4743 = vsub.s32 %v946, %v4742
    %v4744 = vrot.slane %v4619, %v4743
    %v4745 = vsel %vm951, %v4744, %v4740
    %v4746 = vlaneseq
    %v4747 = vshrl.u32 %v4746, 7
    %v4748 = vsub.s32 %v941, %v4747
    %v4749 = vrot.slane %v4622, %v4748
    %v4750 = vlaneseq
    %v4751 = vshrl.u32 %v4750, 7
    %v4752 = vsub.s32 %v946, %v4751
    %v4753 = vrot.slane %v4625, %v4752
    %v4754 = vsel %vm951, %v4753, %v4749
    %v4755 = vlaneseq
    %v4756 = vshrl.u32 %v4755, 7
    %v4757 = vsub.s32 %v941, %v4756
    %v4758 = vrot.slane %v4628, %v4757
    %v4759 = vlaneseq
    %v4760 = vshrl.u32 %v4759, 7
    %v4761 = vsub.s32 %v946, %v4760
    %v4762 = vrot.slane %v4631, %v4761
    %v4763 = vsel %vm951, %v4762, %v4758
    %v4764 = vlaneseq
    %v4765 = vshrl.u32 %v4764, 7
    %v4766 = vsub.s32 %v941, %v4765
    %v4767 = vrot.slane %v4634, %v4766
    %v4768 = vlaneseq
    %v4769 = vshrl.u32 %v4768, 7
    %v4770 = vsub.s32 %v946, %v4769
    %v4771 = vrot.slane %v4637, %v4770
    %v4772 = vsel %vm951, %v4771, %v4767
    %v4773 = vlaneseq
    %v4774 = vshrl.u32 %v4773, 7
    %v4775 = vsub.s32 %v941, %v4774
    %v4776 = vrot.slane %v4640, %v4775
    %v4777 = vlaneseq
    %v4778 = vshrl.u32 %v4777, 7
    %v4779 = vsub.s32 %v946, %v4778
    %v4780 = vrot.slane %v4643, %v4779
    %v4781 = vsel %vm951, %v4780, %v4776
    %v4782 = vlaneseq
    %v4783 = vshrl.u32 %v4782, 7
    %v4784 = vsub.s32 %v941, %v4783
    %v4785 = vrot.slane %v4646, %v4784
    %v4786 = vlaneseq
    %v4787 = vshrl.u32 %v4786, 7
    %v4788 = vsub.s32 %v946, %v4787
    %v4789 = vrot.slane %v4649, %v4788
    %v4790 = vsel %vm951, %v4789, %v4785
    %v4791 = vlaneseq
    %v4792 = vshrl.u32 %v4791, 7
    %v4793 = vsub.s32 %v941, %v4792
    %v4794 = vrot.slane %v4652, %v4793
    %v4795 = vlaneseq
    %v4796 = vshrl.u32 %v4795, 7
    %v4797 = vsub.s32 %v946, %v4796
    %v4798 = vrot.slane %v4655, %v4797
    %v4799 = vsel %vm951, %v4798, %v4794
    %v4800 = vsel %vm1088, %v4673, %v4664
    %v4801 = vsel %vm1090, %v4682, %v4800
    %v4802 = vsel %vm1092, %v4691, %v4801
    %v4803 = vsel %vm1094, %v4700, %v4802
    %v4804 = vsel %vm1096, %v4709, %v4803
    %v4805 = vsel %vm1098, %v4718, %v4804
    %v4806 = vsel %vm1100, %v4727, %v4805
    %v4807 = vsel %vm1088, %v4745, %v4736
    %v4808 = vsel %vm1090, %v4754, %v4807
    %v4809 = vsel %vm1092, %v4763, %v4808
    %v4810 = vsel %vm1094, %v4772, %v4809
    %v4811 = vsel %vm1096, %v4781, %v4810
    %v4812 = vsel %vm1098, %v4790, %v4811
    %v4813 = vsel %vm1100, %v4799, %v4812
    %v4816 = vsel %vm1111, %v4806, -inf
    %4817 = vmax.xlane.f32.xlu0 %v4816
    %v4818 = vpop.xlane.xlu0 %4817
    %v4819 = vsel %vm1111, %v4813, -inf
    %4820 = vmax.xlane.f32.xlu0 %v4819
    %v4821 = vpop.xlane.xlu0 %4820
    %v4824 = vlaneseq
    %v4825 = vshrl.u32 %v4824, 7
    %v4826 = vsub.s32 0, %v4825
    %v4827 = vrot.slane %v4818, %v4826
    %v4828 = vlaneseq
    %v4829 = vshrl.u32 %v4828, 7
    %v4830 = vsub.s32 1, %v4829
    %v4831 = vrot.slane %v4818, %v4830
    %v4832 = vlaneseq
    %v4833 = vshrl.u32 %v4832, 7
    %v4834 = vsub.s32 2, %v4833
    %v4835 = vrot.slane %v4818, %v4834
    %v4836 = vlaneseq
    %v4837 = vshrl.u32 %v4836, 7
    %v4838 = vsub.s32 3, %v4837
    %v4839 = vrot.slane %v4818, %v4838
    %v4840 = vlaneseq
    %v4841 = vshrl.u32 %v4840, 7
    %v4842 = vsub.s32 4, %v4841
    %v4843 = vrot.slane %v4818, %v4842
    %v4844 = vlaneseq
    %v4845 = vshrl.u32 %v4844, 7
    %v4846 = vsub.s32 5, %v4845
    %v4847 = vrot.slane %v4818, %v4846
    %v4848 = vlaneseq
    %v4849 = vshrl.u32 %v4848, 7
    %v4850 = vsub.s32 6, %v4849
    %v4851 = vrot.slane %v4818, %v4850
    %v4852 = vlaneseq
    %v4853 = vshrl.u32 %v4852, 7
    %v4854 = vsub.s32 7, %v4853
    %v4855 = vrot.slane %v4818, %v4854
    %v4856 = vlaneseq
    %v4857 = vshrl.u32 %v4856, 7
    %v4858 = vsub.s32 0, %v4857
    %v4859 = vrot.slane %v4821, %v4858
    %v4860 = vlaneseq
    %v4861 = vshrl.u32 %v4860, 7
    %v4862 = vsub.s32 1, %v4861
    %v4863 = vrot.slane %v4821, %v4862
    %v4864 = vlaneseq
    %v4865 = vshrl.u32 %v4864, 7
    %v4866 = vsub.s32 2, %v4865
    %v4867 = vrot.slane %v4821, %v4866
    %v4868 = vlaneseq
    %v4869 = vshrl.u32 %v4868, 7
    %v4870 = vsub.s32 3, %v4869
    %v4871 = vrot.slane %v4821, %v4870
    %v4872 = vlaneseq
    %v4873 = vshrl.u32 %v4872, 7
    %v4874 = vsub.s32 4, %v4873
    %v4875 = vrot.slane %v4821, %v4874
    %v4876 = vlaneseq
    %v4877 = vshrl.u32 %v4876, 7
    %v4878 = vsub.s32 5, %v4877
    %v4879 = vrot.slane %v4821, %v4878
    %v4880 = vlaneseq
    %v4881 = vshrl.u32 %v4880, 7
    %v4882 = vsub.s32 6, %v4881
    %v4883 = vrot.slane %v4821, %v4882
    %v4884 = vlaneseq
    %v4885 = vshrl.u32 %v4884, 7
    %v4886 = vsub.s32 7, %v4885
    %v4887 = vrot.slane %v4821, %v4886
    %v4904 = vsub.f32 %v4496, %v4827
    %v4905 = vsub.f32 %v4497, %v4827
    %v4906 = vsub.f32 %v4498, %v4831
    %v4907 = vsub.f32 %v4499, %v4831
    %v4908 = vsub.f32 %v4500, %v4835
    %v4909 = vsub.f32 %v4501, %v4835
    %v4910 = vsub.f32 %v4502, %v4839
    %v4911 = vsub.f32 %v4503, %v4839
    %v4912 = vsub.f32 %v4504, %v4843
    %v4913 = vsub.f32 %v4505, %v4843
    %v4914 = vsub.f32 %v4506, %v4847
    %v4915 = vsub.f32 %v4507, %v4847
    %v4916 = vsub.f32 %v4508, %v4851
    %v4917 = vsub.f32 %v4509, %v4851
    %v4918 = vsub.f32 %v4510, %v4855
    %v4919 = vsub.f32 %v4511, %v4855
    %v4920 = vsub.f32 %v4512, %v4859
    %v4921 = vsub.f32 %v4513, %v4859
    %v4922 = vsub.f32 %v4514, %v4863
    %v4923 = vsub.f32 %v4515, %v4863
    %v4924 = vsub.f32 %v4516, %v4867
    %v4925 = vsub.f32 %v4517, %v4867
    %v4926 = vsub.f32 %v4518, %v4871
    %v4927 = vsub.f32 %v4519, %v4871
    %v4928 = vsub.f32 %v4520, %v4875
    %v4929 = vsub.f32 %v4521, %v4875
    %v4930 = vsub.f32 %v4522, %v4879
    %v4931 = vsub.f32 %v4523, %v4879
    %v4932 = vsub.f32 %v4524, %v4883
    %v4933 = vsub.f32 %v4525, %v4883
    %v4934 = vsub.f32 %v4526, %v4887
    %v4935 = vsub.f32 %v4527, %v4887
    %v4936 = vmul.f32 %v4904, 1.442695
    %v4937 = vpow.pop %v4936
    %v4938 = vmul.f32 %v4905, 1.442695
    %v4939 = vpow.pop %v4938
    %v4940 = vmul.f32 %v4906, 1.442695
    %v4941 = vpow.pop %v4940
    %v4942 = vmul.f32 %v4907, 1.442695
    %v4943 = vpow.pop %v4942
    %v4944 = vmul.f32 %v4908, 1.442695
    %v4945 = vpow.pop %v4944
    %v4946 = vmul.f32 %v4909, 1.442695
    %v4947 = vpow.pop %v4946
    %v4948 = vmul.f32 %v4910, 1.442695
    %v4949 = vpow.pop %v4948
    %v4950 = vmul.f32 %v4911, 1.442695
    %v4951 = vpow.pop %v4950
    %v4952 = vmul.f32 %v4912, 1.442695
    %v4953 = vpow.pop %v4952
    %v4954 = vmul.f32 %v4913, 1.442695
    %v4955 = vpow.pop %v4954
    %v4956 = vmul.f32 %v4914, 1.442695
    %v4957 = vpow.pop %v4956
    %v4958 = vmul.f32 %v4915, 1.442695
    %v4959 = vpow.pop %v4958
    %v4960 = vmul.f32 %v4916, 1.442695
    %v4961 = vpow.pop %v4960
    %v4962 = vmul.f32 %v4917, 1.442695
    %v4963 = vpow.pop %v4962
    %v4964 = vmul.f32 %v4918, 1.442695
    %v4965 = vpow.pop %v4964
    %v4966 = vmul.f32 %v4919, 1.442695
    %v4967 = vpow.pop %v4966
    %v4968 = vmul.f32 %v4920, 1.442695
    %v4969 = vpow.pop %v4968
    %v4970 = vmul.f32 %v4921, 1.442695
    %v4971 = vpow.pop %v4970
    %v4972 = vmul.f32 %v4922, 1.442695
    %v4973 = vpow.pop %v4972
    %v4974 = vmul.f32 %v4923, 1.442695
    %v4975 = vpow.pop %v4974
    %v4976 = vmul.f32 %v4924, 1.442695
    %v4977 = vpow.pop %v4976
    %v4978 = vmul.f32 %v4925, 1.442695
    %v4979 = vpow.pop %v4978
    %v4980 = vmul.f32 %v4926, 1.442695
    %v4981 = vpow.pop %v4980
    %v4982 = vmul.f32 %v4927, 1.442695
    %v4983 = vpow.pop %v4982
    %v4984 = vmul.f32 %v4928, 1.442695
    %v4985 = vpow.pop %v4984
    %v4986 = vmul.f32 %v4929, 1.442695
    %v4987 = vpow.pop %v4986
    %v4988 = vmul.f32 %v4930, 1.442695
    %v4989 = vpow.pop %v4988
    %v4990 = vmul.f32 %v4931, 1.442695
    %v4991 = vpow.pop %v4990
    %v4992 = vmul.f32 %v4932, 1.442695
    %v4993 = vpow.pop %v4992
    %v4994 = vmul.f32 %v4933, 1.442695
    %v4995 = vpow.pop %v4994
    %v4996 = vmul.f32 %v4934, 1.442695
    %v4997 = vpow.pop %v4996
    %v4998 = vmul.f32 %v4935, 1.442695
    %v4999 = vpow.pop %v4998
    %5032 = vset.pattern.permute.xlu0 0
    %5033 = vperm.xlu0 %5032, %v4937
    %v5034 = vpop.permute.xlu0 %5033
    %5035 = vset.pattern.permute.xlu0 0
    %5036 = vperm.xlu0 %5035, %v4939
    %v5037 = vpop.permute.xlu0 %5036
    %5038 = vset.pattern.permute.xlu0 0
    %5039 = vperm.xlu0 %5038, %v4941
    %v5040 = vpop.permute.xlu0 %5039
    %5041 = vset.pattern.permute.xlu0 0
    %5042 = vperm.xlu0 %5041, %v4943
    %v5043 = vpop.permute.xlu0 %5042
    %5044 = vset.pattern.permute.xlu0 0
    %5045 = vperm.xlu0 %5044, %v4945
    %v5046 = vpop.permute.xlu0 %5045
    %5047 = vset.pattern.permute.xlu0 0
    %5048 = vperm.xlu0 %5047, %v4947
    %v5049 = vpop.permute.xlu0 %5048
    %5050 = vset.pattern.permute.xlu0 0
    %5051 = vperm.xlu0 %5050, %v4949
    %v5052 = vpop.permute.xlu0 %5051
    %5053 = vset.pattern.permute.xlu0 0
    %5054 = vperm.xlu0 %5053, %v4951
    %v5055 = vpop.permute.xlu0 %5054
    %5056 = vset.pattern.permute.xlu0 0
    %5057 = vperm.xlu0 %5056, %v4953
    %v5058 = vpop.permute.xlu0 %5057
    %5059 = vset.pattern.permute.xlu0 0
    %5060 = vperm.xlu0 %5059, %v4955
    %v5061 = vpop.permute.xlu0 %5060
    %5062 = vset.pattern.permute.xlu0 0
    %5063 = vperm.xlu0 %5062, %v4957
    %v5064 = vpop.permute.xlu0 %5063
    %5065 = vset.pattern.permute.xlu0 0
    %5066 = vperm.xlu0 %5065, %v4959
    %v5067 = vpop.permute.xlu0 %5066
    %5068 = vset.pattern.permute.xlu0 0
    %5069 = vperm.xlu0 %5068, %v4961
    %v5070 = vpop.permute.xlu0 %5069
    %5071 = vset.pattern.permute.xlu0 0
    %5072 = vperm.xlu0 %5071, %v4963
    %v5073 = vpop.permute.xlu0 %5072
    %5074 = vset.pattern.permute.xlu0 0
    %5075 = vperm.xlu0 %5074, %v4965
    %v5076 = vpop.permute.xlu0 %5075
    %5077 = vset.pattern.permute.xlu0 0
    %5078 = vperm.xlu0 %5077, %v4967
    %v5079 = vpop.permute.xlu0 %5078
    %5080 = vset.pattern.permute.xlu0 0
    %5081 = vperm.xlu0 %5080, %v4969
    %v5082 = vpop.permute.xlu0 %5081
    %5083 = vset.pattern.permute.xlu0 0
    %5084 = vperm.xlu0 %5083, %v4971
    %v5085 = vpop.permute.xlu0 %5084
    %5086 = vset.pattern.permute.xlu0 0
    %5087 = vperm.xlu0 %5086, %v4973
    %v5088 = vpop.permute.xlu0 %5087
    %5089 = vset.pattern.permute.xlu0 0
    %5090 = vperm.xlu0 %5089, %v4975
    %v5091 = vpop.permute.xlu0 %5090
    %5092 = vset.pattern.permute.xlu0 0
    %5093 = vperm.xlu0 %5092, %v4977
    %v5094 = vpop.permute.xlu0 %5093
    %5095 = vset.pattern.permute.xlu0 0
    %5096 = vperm.xlu0 %5095, %v4979
    %v5097 = vpop.permute.xlu0 %5096
    %5098 = vset.pattern.permute.xlu0 0
    %5099 = vperm.xlu0 %5098, %v4981
    %v5100 = vpop.permute.xlu0 %5099
    %5101 = vset.pattern.permute.xlu0 0
    %5102 = vperm.xlu0 %5101, %v4983
    %v5103 = vpop.permute.xlu0 %5102
    %5104 = vset.pattern.permute.xlu0 0
    %5105 = vperm.xlu0 %5104, %v4985
    %v5106 = vpop.permute.xlu0 %5105
    %5107 = vset.pattern.permute.xlu0 0
    %5108 = vperm.xlu0 %5107, %v4987
    %v5109 = vpop.permute.xlu0 %5108
    %5110 = vset.pattern.permute.xlu0 0
    %5111 = vperm.xlu0 %5110, %v4989
    %v5112 = vpop.permute.xlu0 %5111
    %5113 = vset.pattern.permute.xlu0 0
    %5114 = vperm.xlu0 %5113, %v4991
    %v5115 = vpop.permute.xlu0 %5114
    %5116 = vset.pattern.permute.xlu0 0
    %5117 = vperm.xlu0 %5116, %v4993
    %v5118 = vpop.permute.xlu0 %5117
    %5119 = vset.pattern.permute.xlu0 0
    %5120 = vperm.xlu0 %5119, %v4995
    %v5121 = vpop.permute.xlu0 %5120
    %5122 = vset.pattern.permute.xlu0 0
    %5123 = vperm.xlu0 %5122, %v4997
    %v5124 = vpop.permute.xlu0 %5123
    %5125 = vset.pattern.permute.xlu0 0
    %5126 = vperm.xlu0 %5125, %v4999
    %v5127 = vpop.permute.xlu0 %5126
    %v5128 = vlaneseq
    %v5129 = vshrl.u32 %v5128, 7
    %v5130 = vsub.s32 %v941, %v5129
    %v5131 = vrot.slane %v5034, %v5130
    %v5132 = vlaneseq
    %v5133 = vshrl.u32 %v5132, 7
    %v5134 = vsub.s32 %v946, %v5133
    %v5135 = vrot.slane %v5037, %v5134
    %v5136 = vsel %vm951, %v5135, %v5131
    %v5137 = vlaneseq
    %v5138 = vshrl.u32 %v5137, 7
    %v5139 = vsub.s32 %v941, %v5138
    %v5140 = vrot.slane %v5040, %v5139
    %v5141 = vlaneseq
    %v5142 = vshrl.u32 %v5141, 7
    %v5143 = vsub.s32 %v946, %v5142
    %v5144 = vrot.slane %v5043, %v5143
    %v5145 = vsel %vm951, %v5144, %v5140
    %v5146 = vlaneseq
    %v5147 = vshrl.u32 %v5146, 7
    %v5148 = vsub.s32 %v941, %v5147
    %v5149 = vrot.slane %v5046, %v5148
    %v5150 = vlaneseq
    %v5151 = vshrl.u32 %v5150, 7
    %v5152 = vsub.s32 %v946, %v5151
    %v5153 = vrot.slane %v5049, %v5152
    %v5154 = vsel %vm951, %v5153, %v5149
    %v5155 = vlaneseq
    %v5156 = vshrl.u32 %v5155, 7
    %v5157 = vsub.s32 %v941, %v5156
    %v5158 = vrot.slane %v5052, %v5157
    %v5159 = vlaneseq
    %v5160 = vshrl.u32 %v5159, 7
    %v5161 = vsub.s32 %v946, %v5160
    %v5162 = vrot.slane %v5055, %v5161
    %v5163 = vsel %vm951, %v5162, %v5158
    %v5164 = vlaneseq
    %v5165 = vshrl.u32 %v5164, 7
    %v5166 = vsub.s32 %v941, %v5165
    %v5167 = vrot.slane %v5058, %v5166
    %v5168 = vlaneseq
    %v5169 = vshrl.u32 %v5168, 7
    %v5170 = vsub.s32 %v946, %v5169
    %v5171 = vrot.slane %v5061, %v5170
    %v5172 = vsel %vm951, %v5171, %v5167
    %v5173 = vlaneseq
    %v5174 = vshrl.u32 %v5173, 7
    %v5175 = vsub.s32 %v941, %v5174
    %v5176 = vrot.slane %v5064, %v5175
    %v5177 = vlaneseq
    %v5178 = vshrl.u32 %v5177, 7
    %v5179 = vsub.s32 %v946, %v5178
    %v5180 = vrot.slane %v5067, %v5179
    %v5181 = vsel %vm951, %v5180, %v5176
    %v5182 = vlaneseq
    %v5183 = vshrl.u32 %v5182, 7
    %v5184 = vsub.s32 %v941, %v5183
    %v5185 = vrot.slane %v5070, %v5184
    %v5186 = vlaneseq
    %v5187 = vshrl.u32 %v5186, 7
    %v5188 = vsub.s32 %v946, %v5187
    %v5189 = vrot.slane %v5073, %v5188
    %v5190 = vsel %vm951, %v5189, %v5185
    %v5191 = vlaneseq
    %v5192 = vshrl.u32 %v5191, 7
    %v5193 = vsub.s32 %v941, %v5192
    %v5194 = vrot.slane %v5076, %v5193
    %v5195 = vlaneseq
    %v5196 = vshrl.u32 %v5195, 7
    %v5197 = vsub.s32 %v946, %v5196
    %v5198 = vrot.slane %v5079, %v5197
    %v5199 = vsel %vm951, %v5198, %v5194
    %v5200 = vlaneseq
    %v5201 = vshrl.u32 %v5200, 7
    %v5202 = vsub.s32 %v941, %v5201
    %v5203 = vrot.slane %v5082, %v5202
    %v5204 = vlaneseq
    %v5205 = vshrl.u32 %v5204, 7
    %v5206 = vsub.s32 %v946, %v5205
    %v5207 = vrot.slane %v5085, %v5206
    %v5208 = vsel %vm951, %v5207, %v5203
    %v5209 = vlaneseq
    %v5210 = vshrl.u32 %v5209, 7
    %v5211 = vsub.s32 %v941, %v5210
    %v5212 = vrot.slane %v5088, %v5211
    %v5213 = vlaneseq
    %v5214 = vshrl.u32 %v5213, 7
    %v5215 = vsub.s32 %v946, %v5214
    %v5216 = vrot.slane %v5091, %v5215
    %v5217 = vsel %vm951, %v5216, %v5212
    %v5218 = vlaneseq
    %v5219 = vshrl.u32 %v5218, 7
    %v5220 = vsub.s32 %v941, %v5219
    %v5221 = vrot.slane %v5094, %v5220
    %v5222 = vlaneseq
    %v5223 = vshrl.u32 %v5222, 7
    %v5224 = vsub.s32 %v946, %v5223
    %v5225 = vrot.slane %v5097, %v5224
    %v5226 = vsel %vm951, %v5225, %v5221
    %v5227 = vlaneseq
    %v5228 = vshrl.u32 %v5227, 7
    %v5229 = vsub.s32 %v941, %v5228
    %v5230 = vrot.slane %v5100, %v5229
    %v5231 = vlaneseq
    %v5232 = vshrl.u32 %v5231, 7
    %v5233 = vsub.s32 %v946, %v5232
    %v5234 = vrot.slane %v5103, %v5233
    %v5235 = vsel %vm951, %v5234, %v5230
    %v5236 = vlaneseq
    %v5237 = vshrl.u32 %v5236, 7
    %v5238 = vsub.s32 %v941, %v5237
    %v5239 = vrot.slane %v5106, %v5238
    %v5240 = vlaneseq
    %v5241 = vshrl.u32 %v5240, 7
    %v5242 = vsub.s32 %v946, %v5241
    %v5243 = vrot.slane %v5109, %v5242
    %v5244 = vsel %vm951, %v5243, %v5239
    %v5245 = vlaneseq
    %v5246 = vshrl.u32 %v5245, 7
    %v5247 = vsub.s32 %v941, %v5246
    %v5248 = vrot.slane %v5112, %v5247
    %v5249 = vlaneseq
    %v5250 = vshrl.u32 %v5249, 7
    %v5251 = vsub.s32 %v946, %v5250
    %v5252 = vrot.slane %v5115, %v5251
    %v5253 = vsel %vm951, %v5252, %v5248
    %v5254 = vlaneseq
    %v5255 = vshrl.u32 %v5254, 7
    %v5256 = vsub.s32 %v941, %v5255
    %v5257 = vrot.slane %v5118, %v5256
    %v5258 = vlaneseq
    %v5259 = vshrl.u32 %v5258, 7
    %v5260 = vsub.s32 %v946, %v5259
    %v5261 = vrot.slane %v5121, %v5260
    %v5262 = vsel %vm951, %v5261, %v5257
    %v5263 = vlaneseq
    %v5264 = vshrl.u32 %v5263, 7
    %v5265 = vsub.s32 %v941, %v5264
    %v5266 = vrot.slane %v5124, %v5265
    %v5267 = vlaneseq
    %v5268 = vshrl.u32 %v5267, 7
    %v5269 = vsub.s32 %v946, %v5268
    %v5270 = vrot.slane %v5127, %v5269
    %v5271 = vsel %vm951, %v5270, %v5266
    %v5272 = vsel %vm1088, %v5145, %v5136
    %v5273 = vsel %vm1090, %v5154, %v5272
    %v5274 = vsel %vm1092, %v5163, %v5273
    %v5275 = vsel %vm1094, %v5172, %v5274
    %v5276 = vsel %vm1096, %v5181, %v5275
    %v5277 = vsel %vm1098, %v5190, %v5276
    %v5278 = vsel %vm1100, %v5199, %v5277
    %v5279 = vsel %vm1088, %v5217, %v5208
    %v5280 = vsel %vm1090, %v5226, %v5279
    %v5281 = vsel %vm1092, %v5235, %v5280
    %v5282 = vsel %vm1094, %v5244, %v5281
    %v5283 = vsel %vm1096, %v5253, %v5282
    %v5284 = vsel %vm1098, %v5262, %v5283
    %v5285 = vsel %vm1100, %v5271, %v5284
    %v5288 = vsel %vm1111, %v5278, 0.0
    %5289 = vadd.xlane.f32.xlu0 %v5288
    %v5290 = vpop.xlane.xlu0 %5289
    %v5291 = vsel %vm1111, %v5285, 0.0
    %5292 = vadd.xlane.f32.xlu0 %v5291
    %v5293 = vpop.xlane.xlu0 %5292
    %v5294 = vrcp.pop %v5290
    %v5295 = vrcp.pop %v5293
    %v5298 = vlaneseq
    %v5299 = vshrl.u32 %v5298, 7
    %v5300 = vsub.s32 0, %v5299
    %v5301 = vrot.slane %v5294, %v5300
    %v5302 = vlaneseq
    %v5303 = vshrl.u32 %v5302, 7
    %v5304 = vsub.s32 1, %v5303
    %v5305 = vrot.slane %v5294, %v5304
    %v5306 = vlaneseq
    %v5307 = vshrl.u32 %v5306, 7
    %v5308 = vsub.s32 2, %v5307
    %v5309 = vrot.slane %v5294, %v5308
    %v5310 = vlaneseq
    %v5311 = vshrl.u32 %v5310, 7
    %v5312 = vsub.s32 3, %v5311
    %v5313 = vrot.slane %v5294, %v5312
    %v5314 = vlaneseq
    %v5315 = vshrl.u32 %v5314, 7
    %v5316 = vsub.s32 4, %v5315
    %v5317 = vrot.slane %v5294, %v5316
    %v5318 = vlaneseq
    %v5319 = vshrl.u32 %v5318, 7
    %v5320 = vsub.s32 5, %v5319
    %v5321 = vrot.slane %v5294, %v5320
    %v5322 = vlaneseq
    %v5323 = vshrl.u32 %v5322, 7
    %v5324 = vsub.s32 6, %v5323
    %v5325 = vrot.slane %v5294, %v5324
    %v5326 = vlaneseq
    %v5327 = vshrl.u32 %v5326, 7
    %v5328 = vsub.s32 7, %v5327
    %v5329 = vrot.slane %v5294, %v5328
    %v5330 = vlaneseq
    %v5331 = vshrl.u32 %v5330, 7
    %v5332 = vsub.s32 0, %v5331
    %v5333 = vrot.slane %v5295, %v5332
    %v5334 = vlaneseq
    %v5335 = vshrl.u32 %v5334, 7
    %v5336 = vsub.s32 1, %v5335
    %v5337 = vrot.slane %v5295, %v5336
    %v5338 = vlaneseq
    %v5339 = vshrl.u32 %v5338, 7
    %v5340 = vsub.s32 2, %v5339
    %v5341 = vrot.slane %v5295, %v5340
    %v5342 = vlaneseq
    %v5343 = vshrl.u32 %v5342, 7
    %v5344 = vsub.s32 3, %v5343
    %v5345 = vrot.slane %v5295, %v5344
    %v5346 = vlaneseq
    %v5347 = vshrl.u32 %v5346, 7
    %v5348 = vsub.s32 4, %v5347
    %v5349 = vrot.slane %v5295, %v5348
    %v5350 = vlaneseq
    %v5351 = vshrl.u32 %v5350, 7
    %v5352 = vsub.s32 5, %v5351
    %v5353 = vrot.slane %v5295, %v5352
    %v5354 = vlaneseq
    %v5355 = vshrl.u32 %v5354, 7
    %v5356 = vsub.s32 6, %v5355
    %v5357 = vrot.slane %v5295, %v5356
    %v5358 = vlaneseq
    %v5359 = vshrl.u32 %v5358, 7
    %v5360 = vsub.s32 7, %v5359
    %v5361 = vrot.slane %v5295, %v5360
    %v5378 = vmul.f32 %v4937, %v5301
    %v5379 = vmul.f32 %v4939, %v5301
    %v5380 = vmul.f32 %v4941, %v5305
    %v5381 = vmul.f32 %v4943, %v5305
    %v5382 = vmul.f32 %v4945, %v5309
    %v5383 = vmul.f32 %v4947, %v5309
    %v5384 = vmul.f32 %v4949, %v5313
    %v5385 = vmul.f32 %v4951, %v5313
    %v5386 = vmul.f32 %v4953, %v5317
    %v5387 = vmul.f32 %v4955, %v5317
    %v5388 = vmul.f32 %v4957, %v5321
    %v5389 = vmul.f32 %v4959, %v5321
    %v5390 = vmul.f32 %v4961, %v5325
    %v5391 = vmul.f32 %v4963, %v5325
    %v5392 = vmul.f32 %v4965, %v5329
    %v5393 = vmul.f32 %v4967, %v5329
    %v5394 = vmul.f32 %v4969, %v5333
    %v5395 = vmul.f32 %v4971, %v5333
    %v5396 = vmul.f32 %v4973, %v5337
    %v5397 = vmul.f32 %v4975, %v5337
    %v5398 = vmul.f32 %v4977, %v5341
    %v5399 = vmul.f32 %v4979, %v5341
    %v5400 = vmul.f32 %v4981, %v5345
    %v5401 = vmul.f32 %v4983, %v5345
    %v5402 = vmul.f32 %v4985, %v5349
    %v5403 = vmul.f32 %v4987, %v5349
    %v5404 = vmul.f32 %v4989, %v5353
    %v5405 = vmul.f32 %v4991, %v5353
    %v5406 = vmul.f32 %v4993, %v5357
    %v5407 = vmul.f32 %v4995, %v5357
    %v5408 = vmul.f32 %v4997, %v5361
    %v5409 = vmul.f32 %v4999, %v5361
    %s5410 = scalar_lea.vmem %s6, 2
    %v5411 = vld [vmem:[%s5410] sm:$0x1]
    %v5413 = vlaneseq
    %v5414 = vshrl.u32 %v5413, 7
    %v5415 = vsub.s32 0, %v5414
    %v5416 = vrot.slane %v5411, %v5415
    %5450 = vset.pattern.permute.xlu0 0
    %5451 = vperm.xlu0 %5450, %v5378
    %v5452 = vpop.permute.xlu0 %5451
    %5453 = vset.pattern.permute.xlu0 0
    %5454 = vperm.xlu0 %5453, %v5379
    %v5455 = vpop.permute.xlu0 %5454
    %5456 = vset.pattern.permute.xlu0 0
    %5457 = vperm.xlu0 %5456, %v5380
    %v5458 = vpop.permute.xlu0 %5457
    %5459 = vset.pattern.permute.xlu0 0
    %5460 = vperm.xlu0 %5459, %v5381
    %v5461 = vpop.permute.xlu0 %5460
    %5462 = vset.pattern.permute.xlu0 0
    %5463 = vperm.xlu0 %5462, %v5382
    %v5464 = vpop.permute.xlu0 %5463
    %5465 = vset.pattern.permute.xlu0 0
    %5466 = vperm.xlu0 %5465, %v5383
    %v5467 = vpop.permute.xlu0 %5466
    %5468 = vset.pattern.permute.xlu0 0
    %5469 = vperm.xlu0 %5468, %v5384
    %v5470 = vpop.permute.xlu0 %5469
    %5471 = vset.pattern.permute.xlu0 0
    %5472 = vperm.xlu0 %5471, %v5385
    %v5473 = vpop.permute.xlu0 %5472
    %5474 = vset.pattern.permute.xlu0 0
    %5475 = vperm.xlu0 %5474, %v5386
    %v5476 = vpop.permute.xlu0 %5475
    %5477 = vset.pattern.permute.xlu0 0
    %5478 = vperm.xlu0 %5477, %v5387
    %v5479 = vpop.permute.xlu0 %5478
    %5480 = vset.pattern.permute.xlu0 0
    %5481 = vperm.xlu0 %5480, %v5388
    %v5482 = vpop.permute.xlu0 %5481
    %5483 = vset.pattern.permute.xlu0 0
    %5484 = vperm.xlu0 %5483, %v5389
    %v5485 = vpop.permute.xlu0 %5484
    %5486 = vset.pattern.permute.xlu0 0
    %5487 = vperm.xlu0 %5486, %v5390
    %v5488 = vpop.permute.xlu0 %5487
    %5489 = vset.pattern.permute.xlu0 0
    %5490 = vperm.xlu0 %5489, %v5391
    %v5491 = vpop.permute.xlu0 %5490
    %5492 = vset.pattern.permute.xlu0 0
    %5493 = vperm.xlu0 %5492, %v5392
    %v5494 = vpop.permute.xlu0 %5493
    %5495 = vset.pattern.permute.xlu0 0
    %5496 = vperm.xlu0 %5495, %v5393
    %v5497 = vpop.permute.xlu0 %5496
    %5498 = vset.pattern.permute.xlu0 0
    %5499 = vperm.xlu0 %5498, %v5394
    %v5500 = vpop.permute.xlu0 %5499
    %5501 = vset.pattern.permute.xlu0 0
    %5502 = vperm.xlu0 %5501, %v5395
    %v5503 = vpop.permute.xlu0 %5502
    %5504 = vset.pattern.permute.xlu0 0
    %5505 = vperm.xlu0 %5504, %v5396
    %v5506 = vpop.permute.xlu0 %5505
    %5507 = vset.pattern.permute.xlu0 0
    %5508 = vperm.xlu0 %5507, %v5397
    %v5509 = vpop.permute.xlu0 %5508
    %5510 = vset.pattern.permute.xlu0 0
    %5511 = vperm.xlu0 %5510, %v5398
    %v5512 = vpop.permute.xlu0 %5511
    %5513 = vset.pattern.permute.xlu0 0
    %5514 = vperm.xlu0 %5513, %v5399
    %v5515 = vpop.permute.xlu0 %5514
    %5516 = vset.pattern.permute.xlu0 0
    %5517 = vperm.xlu0 %5516, %v5400
    %v5518 = vpop.permute.xlu0 %5517
    %5519 = vset.pattern.permute.xlu0 0
    %5520 = vperm.xlu0 %5519, %v5401
    %v5521 = vpop.permute.xlu0 %5520
    %5522 = vset.pattern.permute.xlu0 0
    %5523 = vperm.xlu0 %5522, %v5402
    %v5524 = vpop.permute.xlu0 %5523
    %5525 = vset.pattern.permute.xlu0 0
    %5526 = vperm.xlu0 %5525, %v5403
    %v5527 = vpop.permute.xlu0 %5526
    %5528 = vset.pattern.permute.xlu0 0
    %5529 = vperm.xlu0 %5528, %v5404
    %v5530 = vpop.permute.xlu0 %5529
    %5531 = vset.pattern.permute.xlu0 0
    %5532 = vperm.xlu0 %5531, %v5405
    %v5533 = vpop.permute.xlu0 %5532
    %5534 = vset.pattern.permute.xlu0 0
    %5535 = vperm.xlu0 %5534, %v5406
    %v5536 = vpop.permute.xlu0 %5535
    %5537 = vset.pattern.permute.xlu0 0
    %5538 = vperm.xlu0 %5537, %v5407
    %v5539 = vpop.permute.xlu0 %5538
    %5540 = vset.pattern.permute.xlu0 0
    %5541 = vperm.xlu0 %5540, %v5408
    %v5542 = vpop.permute.xlu0 %5541
    %5543 = vset.pattern.permute.xlu0 0
    %5544 = vperm.xlu0 %5543, %v5409
    %v5545 = vpop.permute.xlu0 %5544
    %v5546 = vlaneseq
    %v5547 = vshrl.u32 %v5546, 7
    %v5548 = vsub.s32 %v941, %v5547
    %v5549 = vrot.slane %v5452, %v5548
    %v5550 = vlaneseq
    %v5551 = vshrl.u32 %v5550, 7
    %v5552 = vsub.s32 %v946, %v5551
    %v5553 = vrot.slane %v5455, %v5552
    %v5554 = vsel %vm951, %v5553, %v5549
    %v5555 = vlaneseq
    %v5556 = vshrl.u32 %v5555, 7
    %v5557 = vsub.s32 %v941, %v5556
    %v5558 = vrot.slane %v5458, %v5557
    %v5559 = vlaneseq
    %v5560 = vshrl.u32 %v5559, 7
    %v5561 = vsub.s32 %v946, %v5560
    %v5562 = vrot.slane %v5461, %v5561
    %v5563 = vsel %vm951, %v5562, %v5558
    %v5564 = vlaneseq
    %v5565 = vshrl.u32 %v5564, 7
    %v5566 = vsub.s32 %v941, %v5565
    %v5567 = vrot.slane %v5464, %v5566
    %v5568 = vlaneseq
    %v5569 = vshrl.u32 %v5568, 7
    %v5570 = vsub.s32 %v946, %v5569
    %v5571 = vrot.slane %v5467, %v5570
    %v5572 = vsel %vm951, %v5571, %v5567
    %v5573 = vlaneseq
    %v5574 = vshrl.u32 %v5573, 7
    %v5575 = vsub.s32 %v941, %v5574
    %v5576 = vrot.slane %v5470, %v5575
    %v5577 = vlaneseq
    %v5578 = vshrl.u32 %v5577, 7
    %v5579 = vsub.s32 %v946, %v5578
    %v5580 = vrot.slane %v5473, %v5579
    %v5581 = vsel %vm951, %v5580, %v5576
    %v5582 = vlaneseq
    %v5583 = vshrl.u32 %v5582, 7
    %v5584 = vsub.s32 %v941, %v5583
    %v5585 = vrot.slane %v5476, %v5584
    %v5586 = vlaneseq
    %v5587 = vshrl.u32 %v5586, 7
    %v5588 = vsub.s32 %v946, %v5587
    %v5589 = vrot.slane %v5479, %v5588
    %v5590 = vsel %vm951, %v5589, %v5585
    %v5591 = vlaneseq
    %v5592 = vshrl.u32 %v5591, 7
    %v5593 = vsub.s32 %v941, %v5592
    %v5594 = vrot.slane %v5482, %v5593
    %v5595 = vlaneseq
    %v5596 = vshrl.u32 %v5595, 7
    %v5597 = vsub.s32 %v946, %v5596
    %v5598 = vrot.slane %v5485, %v5597
    %v5599 = vsel %vm951, %v5598, %v5594
    %v5600 = vlaneseq
    %v5601 = vshrl.u32 %v5600, 7
    %v5602 = vsub.s32 %v941, %v5601
    %v5603 = vrot.slane %v5488, %v5602
    %v5604 = vlaneseq
    %v5605 = vshrl.u32 %v5604, 7
    %v5606 = vsub.s32 %v946, %v5605
    %v5607 = vrot.slane %v5491, %v5606
    %v5608 = vsel %vm951, %v5607, %v5603
    %v5609 = vlaneseq
    %v5610 = vshrl.u32 %v5609, 7
    %v5611 = vsub.s32 %v941, %v5610
    %v5612 = vrot.slane %v5494, %v5611
    %v5613 = vlaneseq
    %v5614 = vshrl.u32 %v5613, 7
    %v5615 = vsub.s32 %v946, %v5614
    %v5616 = vrot.slane %v5497, %v5615
    %v5617 = vsel %vm951, %v5616, %v5612
    %v5618 = vlaneseq
    %v5619 = vshrl.u32 %v5618, 7
    %v5620 = vsub.s32 %v941, %v5619
    %v5621 = vrot.slane %v5500, %v5620
    %v5622 = vlaneseq
    %v5623 = vshrl.u32 %v5622, 7
    %v5624 = vsub.s32 %v946, %v5623
    %v5625 = vrot.slane %v5503, %v5624
    %v5626 = vsel %vm951, %v5625, %v5621
    %v5627 = vlaneseq
    %v5628 = vshrl.u32 %v5627, 7
    %v5629 = vsub.s32 %v941, %v5628
    %v5630 = vrot.slane %v5506, %v5629
    %v5631 = vlaneseq
    %v5632 = vshrl.u32 %v5631, 7
    %v5633 = vsub.s32 %v946, %v5632
    %v5634 = vrot.slane %v5509, %v5633
    %v5635 = vsel %vm951, %v5634, %v5630
    %v5636 = vlaneseq
    %v5637 = vshrl.u32 %v5636, 7
    %v5638 = vsub.s32 %v941, %v5637
    %v5639 = vrot.slane %v5512, %v5638
    %v5640 = vlaneseq
    %v5641 = vshrl.u32 %v5640, 7
    %v5642 = vsub.s32 %v946, %v5641
    %v5643 = vrot.slane %v5515, %v5642
    %v5644 = vsel %vm951, %v5643, %v5639
    %v5645 = vlaneseq
    %v5646 = vshrl.u32 %v5645, 7
    %v5647 = vsub.s32 %v941, %v5646
    %v5648 = vrot.slane %v5518, %v5647
    %v5649 = vlaneseq
    %v5650 = vshrl.u32 %v5649, 7
    %v5651 = vsub.s32 %v946, %v5650
    %v5652 = vrot.slane %v5521, %v5651
    %v5653 = vsel %vm951, %v5652, %v5648
    %v5654 = vlaneseq
    %v5655 = vshrl.u32 %v5654, 7
    %v5656 = vsub.s32 %v941, %v5655
    %v5657 = vrot.slane %v5524, %v5656
    %v5658 = vlaneseq
    %v5659 = vshrl.u32 %v5658, 7
    %v5660 = vsub.s32 %v946, %v5659
    %v5661 = vrot.slane %v5527, %v5660
    %v5662 = vsel %vm951, %v5661, %v5657
    %v5663 = vlaneseq
    %v5664 = vshrl.u32 %v5663, 7
    %v5665 = vsub.s32 %v941, %v5664
    %v5666 = vrot.slane %v5530, %v5665
    %v5667 = vlaneseq
    %v5668 = vshrl.u32 %v5667, 7
    %v5669 = vsub.s32 %v946, %v5668
    %v5670 = vrot.slane %v5533, %v5669
    %v5671 = vsel %vm951, %v5670, %v5666
    %v5672 = vlaneseq
    %v5673 = vshrl.u32 %v5672, 7
    %v5674 = vsub.s32 %v941, %v5673
    %v5675 = vrot.slane %v5536, %v5674
    %v5676 = vlaneseq
    %v5677 = vshrl.u32 %v5676, 7
    %v5678 = vsub.s32 %v946, %v5677
    %v5679 = vrot.slane %v5539, %v5678
    %v5680 = vsel %vm951, %v5679, %v5675
    %v5681 = vlaneseq
    %v5682 = vshrl.u32 %v5681, 7
    %v5683 = vsub.s32 %v941, %v5682
    %v5684 = vrot.slane %v5542, %v5683
    %v5685 = vlaneseq
    %v5686 = vshrl.u32 %v5685, 7
    %v5687 = vsub.s32 %v946, %v5686
    %v5688 = vrot.slane %v5545, %v5687
    %v5689 = vsel %vm951, %v5688, %v5684
    %v5690 = vsel %vm1088, %v5563, %v5554
    %v5691 = vsel %vm1090, %v5572, %v5690
    %v5692 = vsel %vm1092, %v5581, %v5691
    %v5693 = vsel %vm1094, %v5590, %v5692
    %v5694 = vsel %vm1096, %v5599, %v5693
    %v5695 = vsel %vm1098, %v5608, %v5694
    %v5696 = vsel %vm1100, %v5617, %v5695
    %v5697 = vsel %vm1088, %v5635, %v5626
    %v5698 = vsel %vm1090, %v5644, %v5697
    %v5699 = vsel %vm1092, %v5653, %v5698
    %v5700 = vsel %vm1094, %v5662, %v5699
    %v5701 = vsel %vm1096, %v5671, %v5700
    %v5702 = vsel %vm1098, %v5680, %v5701
    %v5703 = vsel %vm1100, %v5689, %v5702
    %v5704 = vsel %vm1111, %v5696, 0
    %v5706 = vsel %vm1111, %v5703, 0
    %5708 = vmatprep.subr.mxu0 0.0
    %5709 = vmatpush1.msra.mxu0 %v4106
    %5710 = vmatprep.subr.mxu0 0.0
    %5711 = vmatpush1.msra.mxu0 %v4112
    %5712 = vmatprep.subr.mxu0 0.0
    %5713 = vmatpush1.msra.mxu0 0.0
    %5714 = vmatprep.subr.mxu0 0.0
    %5715 = vmatpush1.msra.mxu0 0.0
    %5716 = vmatprep.subr.mxu0 0.0
    %5717 = vmatpush1.msra.mxu0 0.0
    %5718 = vmatprep.subr.mxu0 0.0
    %5719 = vmatpush1.msra.mxu0 0.0
    %5720 = vmatprep.subr.mxu0 0.0
    %5721 = vmatpush1.msra.mxu0 0.0
    %5722 = vmatprep.subr.mxu0 0.0
    %5723 = vmatpush1.msra.mxu0 0.0
    %5724 = vmatprep.subr.mxu0 0.0
    %5725 = vmatpush1.msra.mxu0 0.0
    %5726 = vmatprep.subr.mxu0 0.0
    %5727 = vmatpush1.msra.mxu0 0.0
    %5728 = vmatprep.subr.mxu0 0.0
    %5729 = vmatpush1.msra.mxu0 0.0
    %5730 = vmatprep.subr.mxu0 0.0
    %5731 = vmatpush1.msra.mxu0 0.0
    %5732 = vmatprep.subr.mxu0 0.0
    %5733 = vmatpush1.msra.mxu0 0.0
    %5734 = vmatprep.subr.mxu0 0.0
    %5735 = vmatpush1.msra.mxu0 0.0
    %5736 = vmatprep.subr.mxu0 0.0
    %5737 = vmatpush1.msra.mxu0 0.0
    %5738 = vmatprep.subr.mxu0 0.0
    %5739 = vmatpush1.msra.mxu0 0.0
    %5740 = vmatprep.subr.mxu0 0.0
    %5741 = vmatpush1.msra.mxu0 0.0
    %5742 = vmatprep.subr.mxu0 0.0
    %5743 = vmatpush1.msra.mxu0 0.0
    %5744 = vmatprep.subr.mxu0 0.0
    %5745 = vmatpush1.msra.mxu0 0.0
    %5746 = vmatprep.subr.mxu0 0.0
    %5747 = vmatpush1.msra.mxu0 0.0
    %5748 = vmatprep.subr.mxu0 0.0
    %5749 = vmatpush1.msra.mxu0 0.0
    %5750 = vmatprep.subr.mxu0 0.0
    %5751 = vmatpush1.msra.mxu0 0.0
    %5752 = vmatprep.subr.mxu0 0.0
    %5753 = vmatpush1.msra.mxu0 0.0
    %5754 = vmatprep.subr.mxu0 0.0
    %5755 = vmatpush1.msra.mxu0 0.0
    %5756 = vmatprep.subr.mxu0 0.0
    %5757 = vmatpush1.msra.mxu0 0.0
    %5758 = vmatprep.subr.mxu0 0.0
    %5759 = vmatpush1.msra.mxu0 0.0
    %5760 = vmatprep.subr.mxu0 0.0
    %5761 = vmatpush1.msra.mxu0 0.0
    %5762 = vmatprep.subr.mxu0 0.0
    %5763 = vmatpush1.msra.mxu0 0.0
    %5764 = vmatprep.subr.mxu0 0.0
    %5765 = vmatpush1.msra.mxu0 0.0
    %5766 = vmatprep.subr.mxu0 0.0
    %5767 = vmatpush1.msra.mxu0 0.0
    %5768 = vmatprep.subr.mxu0 0.0
    %5769 = vmatpush1.msra.mxu0 0.0
    %5770 = vmatprep.subr.mxu0 0.0
    %5771 = vmatpush1.msra.mxu0 0.0
    %5772 = vmatprep.mubr.f32.mxu0 0.0
    %5773 = vmatmul.mubr.f32.gmra.mrb[0].mxu0 %v5704
    %v5774 = vpop.f32.mrb[0].mxu0
    %v5775 = vadd.f32 %v5416, %v5774
    %v5776 = vpop.f32.mrb[0].mxu0
    %5777 = vmatprep.mubr.f32.mxu0 0.0
    %5778 = vmatmul.mubr.f32.gmra.mrb[0].mxu0 %v5706
    %v5779 = vpop.f32.mrb[0].mxu0
    %v5780 = vadd.f32 %v5416, %v5779
    %v5781 = vpop.f32.mrb[0].mxu0
    %5782 = vdwg.mxu0
    %5783 = vst [vmem:[#allocation7] sm:$0xff] %v5775
    %5784 = vst [vmem:[#allocation7 + $0x8] sm:$0xff] %v5780
    // Predicated region
    $region50: #{tpu_custom_call.1} parent=1 // pred_check
      _
    $region51: #{tpu_custom_call.1} parent=1 // pred_check_branch
      %5786 = sbr.rel (0) target = $region53
    $region52: #{tpu_custom_call.1} parent=1 // pred_region
      %s5788 = ssub.s32 256, 256
      %5789 = vsyncadd [#allocation4], %s5788
      %s5790 = sshll.u32 [#allocation7], 4
      %s5791 = int_to_ptr.vmem [resolvable:$true] %s5790
      %5796 = dma.vmem_to_hbm [thread:$0]  %s5791, 256, %s10, [#allocation4], 128, 128, 8
    $region53: #{tpu_custom_call.1} parent=1 // pred_fallthru
      _
    // Predicated region
    $region54: #{tpu_custom_call.1} parent=1 // pred_check
      _
    $region55: #{tpu_custom_call.1} parent=1 // pred_check_branch
      %5798 = sbr.rel (0) target = $region57
    $region56: #{tpu_custom_call.1} parent=1 // pred_region
      %5799 = dma.done [#allocation4], 256
    $region57: #{tpu_custom_call.1} parent=1 // pred_fallthru
      _
    %5800 = vsyncpa [#allocation3], 1
    %5801 = vsyncpa [#allocation6], 1
    %5802 = vsyncpa [#allocation4], 1

</llo_original>
